<compile_context>
chip_gen: v7x
topology: tpu7x:2x2x1
jax: 0.10.0
libtpu: 0.0.40
codegen_flags: <defaults>
</compile_context>

<pallas_src>
import functools

import numpy as np
import jax
import jax.numpy as jnp
from jax.experimental import pallas as pl
from jax.experimental.pallas import tpu as pltpu

# tag_to_ix = {'B': 0, 'I': 1, 'O': 2, '<START>': 3, '<STOP>': 4}
START_TAG_IDX = 3
STOP_TAG_IDX = 4
TAGSET_SIZE = 5


def _sigmoid(x):
    # Kept as the exact formulation for bit-parity with the reference; the exp
    # is the EUP op that dominates this anyway (pl.reciprocal(approx=True) is a
    # drop-in if a faster approximate divide is acceptable).
    return 1.0 / (1.0 + jnp.exp(-x))


def _bilstm_crf_kernel(
    sent2_ref,            # VMEM (T, 2) i32: col0 = token ids, col1 = reversed ids
    emb_ref,              # VMEM (V, E) embedding table
    wxf_ref, wxb_ref,     # VMEM (E, 8H2) gate-interleaved input proj (fwd / bwd slots)
    whh_ref,              # VMEM (2H2, 8H2) block-diag, gate-interleaved recurrent proj
    b_ref,                # VMEM (1, 8H2) folded, gate-interleaved biases
    w1_ref, w2_ref,       # VMEM (2H2, K) emission weights (fwd half / bwd half, zero padded)
    btag_ref,             # VMEM (1, K)
    trans_ref,            # VMEM (K, K) transitions[next, prev]
    score_ref,            # out VMEM (1, 1) f32
    path_ref,             # out VMEM (1, T) i32
    *, T, H2, K,
):
    f32 = jnp.float32
    H = 2 * H2

    sent2 = sent2_ref[...]
    emb = emb_ref[...]
    V = emb.shape[0]

    # ---- 1) Embedding lookup as one-hot matmuls (fwd + reversed time order). ----
    iota_v = jax.lax.broadcasted_iota(jnp.int32, (T, V), 1)
    oh_f = (iota_v == sent2[:, 0:1]).astype(f32)                  # (T, V)
    oh_b = (iota_v == sent2[:, 1:2]).astype(f32)                  # (T, V) reversed order
    x = jnp.dot(oh_f, emb, preferred_element_type=f32)            # (T, E)  x[t]
    x_rev = jnp.dot(oh_b, emb, preferred_element_type=f32)        # (T, E)  x[T-1-t]

    # ---- 2) Batched, gate-interleaved input projection for both directions. ----
    gi = (jnp.dot(x, wxf_ref[...], preferred_element_type=f32)
          + jnp.dot(x_rev, wxb_ref[...], preferred_element_type=f32)
          + b_ref[...])                                           # (T, 8H2)

    whh = whh_ref[...]

    # ---- 3) Fused bidirectional recurrence (one matmul + one cell per step). ----
    # Gate layout (each block H wide, H = 2*H2): [i | f | g | o], with every
    # block internally laid out as [fwd_half | bwd_half].
    h = jnp.zeros((1, H), f32)
    c = jnp.zeros((1, H), f32)
    h_all = jnp.zeros((T, H), f32)
    sub_t = jax.lax.broadcasted_iota(jnp.int32, (T, H), 0)
    for s in range(T):
        gates = gi[s:s + 1, :] + jnp.dot(h, whh, preferred_element_type=f32)
        i_g = _sigmoid(gates[:, 0 * H:1 * H])
        f_g = _sigmoid(gates[:, 1 * H:2 * H])
        g_g = jnp.tanh(gates[:, 2 * H:3 * H])
        o_g = _sigmoid(gates[:, 3 * H:4 * H])
        c = f_g * c + i_g * g_g
        h = o_g * jnp.tanh(c)
        # Row s = [h_fwd(time s) | h_bwd(time T-1-s)]; stays in vregs.
        h_all = jnp.where(sub_t == s, h, h_all)

    # ---- 4) Emission head: fwd half direct, bwd half time-reversed via a tiny
    #         anti-diagonal permutation matmul (no sublane flips, no transposes). ----
    rev = ((jax.lax.broadcasted_iota(jnp.int32, (T, T), 0)
            + jax.lax.broadcasted_iota(jnp.int32, (T, T), 1)) == (T - 1)).astype(f32)
    feats = (jnp.dot(h_all, w1_ref[...], preferred_element_type=f32)
             + jnp.dot(rev, jnp.dot(h_all, w2_ref[...], preferred_element_type=f32),
                       preferred_element_type=f32)
             + btag_ref[...])                                     # (T, K)

    # ---- 5) Viterbi forward pass, batched over next-tags (one (K,K) step). ----
    trans = trans_ref[...]
    lane_k = jax.lax.broadcasted_iota(jnp.int32, (1, K), 1)
    lane_kk = jax.lax.broadcasted_iota(jnp.int32, (K, K), 1)
    eye_kk = jax.lax.broadcasted_iota(jnp.int32, (K, K), 0) == lane_kk
    ones_1k = jnp.ones((1, K), f32)
    neg = jnp.float32(-10000.0)

    fv = jnp.where(lane_k == START_TAG_IDX, jnp.float32(0.0), neg)    # (1, K)
    bp_cols = []
    for t in range(T):
        ntv = trans + fv                                              # (K,K): trans[n,p]+fv[p]
        best_col = jnp.max(ntv, axis=1, keepdims=True)                # (K,1)
        bp = jnp.min(jnp.where(ntv == best_col, lane_kk, K),
                     axis=1, keepdims=True).astype(f32)               # (K,1) backpointers
        # column -> row conversion via a tiny MXU matmul (lane reductions only).
        best_row = jnp.dot(ones_1k, jnp.where(eye_kk, best_col, jnp.float32(0.0)),
                           preferred_element_type=f32)                # (1,K)
        fv = best_row + feats[t:t + 1, :]
        bp_cols.append(bp)

    terminal = fv + trans[STOP_TAG_IDX:STOP_TAG_IDX + 1, :]
    best_score = jnp.max(terminal, axis=1, keepdims=True)             # (1,1)
    best_tag = jnp.min(jnp.where(terminal == best_score, lane_k, K),
                       axis=1, keepdims=True)                         # (1,1) i32

    # ---- 6) Backtrack (iota/select + tiny matmul lookups; no dynamic lane ops). ----
    lane_t = jax.lax.broadcasted_iota(jnp.int32, (1, T), 1)
    sub_k = jax.lax.broadcasted_iota(jnp.int32, (K, 1), 0)
    path = jnp.where(lane_t == (T - 1), best_tag, 0)                  # (1,T) i32
    for t in range(T - 1, 0, -1):
        sel = jnp.where(sub_k == best_tag, bp_cols[t], jnp.float32(0.0))   # (K,1)
        bt_f = jnp.dot(ones_1k, sel, preferred_element_type=f32)          # (1,1), exact int
        best_tag = (bt_f + 0.5).astype(jnp.int32)
        path = jnp.where(lane_t == (t - 1), best_tag, path)

    score_ref[...] = best_score
    path_ref[...] = path


def prepare_bilstm_crf_params(params):
    """One-time (parameter-load-time) weight prep: transposes, gate interleave,
    bias folding, emission split. Kernel-ready arrays only."""
    f32 = jnp.float32
    H2 = params["w_hh_f"].shape[1]
    K = params["hidden2tag_w"].shape[0]

    def interleave_cols(wf, wb):
        """wf/wb: (4*H2, D) PyTorch gate-stacked (i,f,g,o) or None (zeros).
        Returns (D, 8*H2) with column layout [i_f,i_b,f_f,f_b,g_f,g_b,o_f,o_b]."""
        D = (wf if wf is not None else wb).shape[1]
        z = jnp.zeros((D, H2), f32)
        cols = []
        for g in range(4):
            cols.append(wf[g * H2:(g + 1) * H2, :].T.astype(f32) if wf is not None else z)
            cols.append(wb[g * H2:(g + 1) * H2, :].T.astype(f32) if wb is not None else z)
        return jnp.concatenate(cols, axis=1)

    wx_f = interleave_cols(params["w_ih_f"], None)                 # (E, 8H2)
    wx_b = interleave_cols(None, params["w_ih_b"])                 # (E, 8H2)
    whh = jnp.concatenate([interleave_cols(params["w_hh_f"], None),    # rows = h_fwd
                           interleave_cols(None, params["w_hh_b"])],   # rows = h_bwd
                          axis=0)                                  # (2H2, 8H2)

    bf4 = (params["b_ih_f"] + params["b_hh_f"]).astype(f32)
    bb4 = (params["b_ih_b"] + params["b_hh_b"]).astype(f32)
    b_parts = []
    for g in range(4):
        b_parts += [bf4[g * H2:(g + 1) * H2], bb4[g * H2:(g + 1) * H2]]
    b_comb = jnp.concatenate(b_parts).reshape(1, 8 * H2)

    wtag = params["hidden2tag_w"].T.astype(f32)                    # (H, K)
    w1 = jnp.concatenate([wtag[:H2, :], jnp.zeros((H2, K), f32)], axis=0)   # fwd half
    w2 = jnp.concatenate([jnp.zeros((H2, K), f32), wtag[H2:, :]], axis=0)   # bwd half
    btag = params["hidden2tag_b"].reshape(1, K).astype(f32)
    trans = params["transitions"].astype(f32)
    emb = params["word_embeds"].astype(f32)

    return dict(emb=emb, wx_f=wx_f, wx_b=wx_b, whh=whh, b=b_comb,
                w1=w1, w2=w2, btag=btag, trans=trans, H2=int(H2), K=int(K))


def bilstm_crf_forward(sentence, prepped):
    """Viterbi-decode forward pass of BiLSTM_CRF for one sentence.

    sentence: (T,) int32 token ids; prepped: output of prepare_bilstm_crf_params.
    Returns (score: f32 scalar, tag_seq: (T,) int32).
    """
    T = int(sentence.shape[0])
    H2, K = prepped["H2"], prepped["K"]

    sent = sentence.astype(jnp.int32)
    sent2 = jnp.stack([sent, sent[::-1]], axis=1)                  # (T, 2)

    kernel = functools.partial(_bilstm_crf_kernel, T=T, H2=H2, K=K)
    vmem = pltpu.MemorySpace.VMEM

    score, path = pl.pallas_call(
        kernel,
        out_shape=(
            jax.ShapeDtypeStruct((1, 1), jnp.float32),
            jax.ShapeDtypeStruct((1, T), jnp.int32),
        ),
        in_specs=[pl.BlockSpec(memory_space=vmem)] * 10,
        out_specs=(pl.BlockSpec(memory_space=vmem),
                   pl.BlockSpec(memory_space=vmem)),
        compiler_params=pltpu.CompilerParams(vmem_limit_bytes=32 * 1024 * 1024),
    )(
        sent2,
        prepped["emb"],
        prepped["wx_f"], prepped["wx_b"], prepped["whh"], prepped["b"],
        prepped["w1"], prepped["w2"], prepped["btag"],
        prepped["trans"],
    )
    return score[0, 0], path[0]


def _reference_forward(sentence, params):
    """Pure NumPy re-implementation of BiLSTM_CRF.forward (PyTorch semantics)."""
    def sigmoid(v):
        return 1.0 / (1.0 + np.exp(-v))

    sent = np.asarray(sentence)
    emb = np.asarray(params["word_embeds"], np.float32)
    T = sent.shape[0]
    H2 = params["w_hh_f"].shape[1]
    x = emb[sent]                                                  # (T, E)

    def run_dir(order, w_ih, w_hh, b_ih, b_hh):
        w_ih = np.asarray(w_ih, np.float32)
        w_hh = np.asarray(w_hh, np.float32)
        b_ih = np.asarray(b_ih, np.float32)
        b_hh = np.asarray(b_hh, np.float32)
        h = np.zeros(H2, np.float32)
        c = np.zeros(H2, np.float32)
        out = {}
        for t in order:
            g = x[t] @ w_ih.T + b_ih + h @ w_hh.T + b_hh
            i = sigmoid(g[0:H2])
            f = sigmoid(g[H2:2 * H2])
            gg = np.tanh(g[2 * H2:3 * H2])
            o = sigmoid(g[3 * H2:4 * H2])
            c = f * c + i * gg
            h = o * np.tanh(c)
            out[t] = h
        return out

    hf = run_dir(range(T), params["w_ih_f"], params["w_hh_f"],
                 params["b_ih_f"], params["b_hh_f"])
    hb = run_dir(range(T - 1, -1, -1), params["w_ih_b"], params["w_hh_b"],
                 params["b_ih_b"], params["b_hh_b"])

    tag_w = np.asarray(params["hidden2tag_w"], np.float32)
    tag_b = np.asarray(params["hidden2tag_b"], np.float32)
    feats = np.stack([np.concatenate([hf[t], hb[t]]) @ tag_w.T + tag_b
                      for t in range(T)])                          # (T, K)

    trans = np.asarray(params["transitions"], np.float32)          # [next, prev]
    K = trans.shape[0]
    fv = np.full(K, -10000.0, np.float32)
    fv[START_TAG_IDX] = 0.0
    bps = []
    for t in range(T):
        ntv = fv[None, :] + trans
        bps.append(ntv.argmax(axis=1))
        fv = ntv.max(axis=1) + feats[t]
    terminal = fv + trans[STOP_TAG_IDX]
    best = int(terminal.argmax())
    score = float(terminal[best])
    path = [best]
    for bp in reversed(bps):
        best = int(bp[best])
        path.append(best)
    start = path.pop()
    assert start == START_TAG_IDX
    path.reverse()
    return score, path


if __name__ == "__main__":
    # Small shapes consistent with the tutorial module (tagset fixed at 5).
    T = 8          # sentence length
    V = 32         # vocab size
    E = 16         # embedding_dim
    H = 32         # hidden_dim (bidirectional -> H // 2 per direction)
    H2 = H // 2
    K = TAGSET_SIZE

    key = jax.random.PRNGKey(0)
    keys = jax.random.split(key, 13)

    def rnd(k, shape, scale=0.1):
        return scale * jax.random.normal(k, shape, dtype=jnp.float32)

    params = {
        "word_embeds": rnd(keys[0], (V, E), 1.0),
        # PyTorch nn.LSTM layout: weight_ih (4*H2, E), weight_hh (4*H2, H2).
        "w_ih_f": rnd(keys[1], (4 * H2, E)),
        "w_hh_f": rnd(keys[2], (4 * H2, H2)),
        "b_ih_f": rnd(keys[3], (4 * H2,)),
        "b_hh_f": rnd(keys[4], (4 * H2,)),
        "w_ih_b": rnd(keys[5], (4 * H2, E)),
        "w_hh_b": rnd(keys[6], (4 * H2, H2)),
        "b_ih_b": rnd(keys[7], (4 * H2,)),
        "b_hh_b": rnd(keys[8], (4 * H2,)),
        # PyTorch nn.Linear layout: (out_features, in_features).
        "hidden2tag_w": rnd(keys[9], (K, H)),
        "hidden2tag_b": rnd(keys[10], (K,)),
        "transitions": jax.random.normal(keys[11], (K, K), dtype=jnp.float32),
    }
    # Same constraint init as the module: never transition to START or from STOP.
    params["transitions"] = (
        params["transitions"]
        .at[START_TAG_IDX, :].set(-10000.0)
        .at[:, STOP_TAG_IDX].set(-10000.0)
    )

    sentence = jax.random.randint(keys[12], (T,), 0, V, dtype=jnp.int32)

    prepped = prepare_bilstm_crf_params(params)   # one-time weight prep
    score, tag_seq = bilstm_crf_forward(sentence, prepped)
    score = jax.block_until_ready(score)
    tag_seq = jax.block_until_ready(tag_seq)

    ref_score, ref_path = _reference_forward(sentence, params)

    assert tag_seq.shape == (T,)
    assert np.allclose(float(score), ref_score, atol=1e-2, rtol=1e-3), (
        float(score), ref_score)
    assert [int(t) for t in np.asarray(tag_seq)] == ref_path, (
        np.asarray(tag_seq).tolist(), ref_path)

    print("KERNEL_OK")
</pallas_src>

<mosaic_0001>
module attributes {stable_mosaic.version = 11 : i64} {
  func.func @_bilstm_crf_kernel(%arg0: memref<8x2xi32, #tpu.memory_space<vmem>>, %arg1: memref<32x16xf32, #tpu.memory_space<vmem>>, %arg2: memref<16x128xf32, #tpu.memory_space<vmem>>, %arg3: memref<16x128xf32, #tpu.memory_space<vmem>>, %arg4: memref<32x128xf32, #tpu.memory_space<vmem>>, %arg5: memref<1x128xf32, #tpu.memory_space<vmem>>, %arg6: memref<32x5xf32, #tpu.memory_space<vmem>>, %arg7: memref<32x5xf32, #tpu.memory_space<vmem>>, %arg8: memref<1x5xf32, #tpu.memory_space<vmem>>, %arg9: memref<5x5xf32, #tpu.memory_space<vmem>>, %arg10: memref<1x1xf32, #tpu.memory_space<vmem>>, %arg11: memref<1x8xi32, #tpu.memory_space<vmem>>) attributes {dimension_semantics = [], scalar_prefetch = 0 : i64, scratch_operands = 0 : i64, tpu.core_type = #tpu.core_type<tc>} {
    %c0 = arith.constant 0 : index
    %c0_0 = arith.constant 0 : index
    %0 = vector.load %arg0[%c0, %c0_0] : memref<8x2xi32, #tpu.memory_space<vmem>>, vector<8x2xi32>
    %c0_1 = arith.constant 0 : index
    %c0_2 = arith.constant 0 : index
    %1 = vector.load %arg1[%c0_1, %c0_2] : memref<32x16xf32, #tpu.memory_space<vmem>>, vector<32x16xf32>
    %2 = tpu.iota {dimensions = array<i32: 1>} : vector<8x32xi32>
    %3 = vector.extract_strided_slice %0 {offsets = [0, 0], sizes = [8, 1], strides = [1, 1]} : vector<8x2xi32> to vector<8x1xi32>
    %4 = vector.broadcast %3 : vector<8x1xi32> to vector<8x32xi32>
    %5 = arith.cmpi eq, %2, %4 : vector<8x32xi32>
    %6 = arith.extui %5 : vector<8x32xi1> to vector<8x32xi32>
    %7 = arith.sitofp %6 : vector<8x32xi32> to vector<8x32xf32>
    %8 = vector.extract_strided_slice %0 {offsets = [0, 1], sizes = [8, 1], strides = [1, 1]} : vector<8x2xi32> to vector<8x1xi32>
    %9 = vector.broadcast %8 : vector<8x1xi32> to vector<8x32xi32>
    %10 = arith.cmpi eq, %2, %9 : vector<8x32xi32>
    %11 = arith.extui %10 : vector<8x32xi1> to vector<8x32xi32>
    %12 = arith.sitofp %11 : vector<8x32xi32> to vector<8x32xf32>
    %cst = arith.constant dense<0.000000e+00> : vector<8x16xf32>
    %13 = tpu.matmul %7, %1, %cst {dimension_numbers = #tpu.dot_dimension_numbers<[1], [0], [0], [1], [0, 0, 1, 1], [], []>} : vector<8x32xf32>, vector<32x16xf32>, vector<8x16xf32> -> vector<8x16xf32>
    %cst_3 = arith.constant dense<0.000000e+00> : vector<8x16xf32>
    %14 = tpu.matmul %12, %1, %cst_3 {dimension_numbers = #tpu.dot_dimension_numbers<[1], [0], [0], [1], [0, 0, 1, 1], [], []>} : vector<8x32xf32>, vector<32x16xf32>, vector<8x16xf32> -> vector<8x16xf32>
    %c0_4 = arith.constant 0 : index
    %c0_5 = arith.constant 0 : index
    %15 = vector.load %arg2[%c0_4, %c0_5] : memref<16x128xf32, #tpu.memory_space<vmem>>, vector<16x128xf32>
    %cst_6 = arith.constant dense<0.000000e+00> : vector<8x128xf32>
    %16 = tpu.matmul %13, %15, %cst_6 {dimension_numbers = #tpu.dot_dimension_numbers<[1], [0], [0], [1], [0, 0, 1, 1], [], []>} : vector<8x16xf32>, vector<16x128xf32>, vector<8x128xf32> -> vector<8x128xf32>
    %c0_7 = arith.constant 0 : index
    %c0_8 = arith.constant 0 : index
    %17 = vector.load %arg3[%c0_7, %c0_8] : memref<16x128xf32, #tpu.memory_space<vmem>>, vector<16x128xf32>
    %cst_9 = arith.constant dense<0.000000e+00> : vector<8x128xf32>
    %18 = tpu.matmul %14, %17, %cst_9 {dimension_numbers = #tpu.dot_dimension_numbers<[1], [0], [0], [1], [0, 0, 1, 1], [], []>} : vector<8x16xf32>, vector<16x128xf32>, vector<8x128xf32> -> vector<8x128xf32>
    %19 = arith.addf %16, %18 : vector<8x128xf32>
    %c0_10 = arith.constant 0 : index
    %c0_11 = arith.constant 0 : index
    %20 = vector.load %arg5[%c0_10, %c0_11] : memref<1x128xf32, #tpu.memory_space<vmem>>, vector<1x128xf32>
    %21 = vector.broadcast %20 : vector<1x128xf32> to vector<8x128xf32>
    %22 = arith.addf %19, %21 : vector<8x128xf32>
    %c0_12 = arith.constant 0 : index
    %c0_13 = arith.constant 0 : index
    %23 = vector.load %arg4[%c0_12, %c0_13] : memref<32x128xf32, #tpu.memory_space<vmem>>, vector<32x128xf32>
    %cst_14 = arith.constant 0.000000e+00 : f32
    %24 = vector.broadcast %cst_14 : f32 to vector<1x32xf32>
    %cst_15 = arith.constant 0.000000e+00 : f32
    %25 = vector.broadcast %cst_15 : f32 to vector<1x32xf32>
    %cst_16 = arith.constant 0.000000e+00 : f32
    %26 = vector.broadcast %cst_16 : f32 to vector<8x32xf32>
    %27 = tpu.iota {dimensions = array<i32: 0>} : vector<8x32xi32>
    %28 = vector.extract_strided_slice %22 {offsets = [0, 0], sizes = [1, 128], strides = [1, 1]} : vector<8x128xf32> to vector<1x128xf32>
    %cst_17 = arith.constant dense<0.000000e+00> : vector<1x128xf32>
    %29 = tpu.matmul %24, %23, %cst_17 {dimension_numbers = #tpu.dot_dimension_numbers<[1], [0], [0], [1], [0, 0, 1, 1], [], []>} : vector<1x32xf32>, vector<32x128xf32>, vector<1x128xf32> -> vector<1x128xf32>
    %30 = arith.addf %28, %29 : vector<1x128xf32>
    %31 = vector.extract_strided_slice %30 {offsets = [0, 0], sizes = [1, 32], strides = [1, 1]} : vector<1x128xf32> to vector<1x32xf32>
    %cst_18 = arith.constant 0.000000e+00 : f32
    %32 = vector.broadcast %cst_18 : f32 to vector<1x32xf32>
    %33 = arith.subf %32, %31 : vector<1x32xf32>
    %34 = math.exp %33 : vector<1x32xf32>
    %cst_19 = arith.constant 1.000000e+00 : f32
    %35 = vector.broadcast %cst_19 : f32 to vector<1x32xf32>
    %36 = arith.addf %35, %34 : vector<1x32xf32>
    %cst_20 = arith.constant 1.000000e+00 : f32
    %37 = vector.broadcast %cst_20 : f32 to vector<1x32xf32>
    %38 = arith.divf %37, %36 : vector<1x32xf32>
    %39 = vector.extract_strided_slice %30 {offsets = [0, 32], sizes = [1, 32], strides = [1, 1]} : vector<1x128xf32> to vector<1x32xf32>
    %cst_21 = arith.constant 0.000000e+00 : f32
    %40 = vector.broadcast %cst_21 : f32 to vector<1x32xf32>
    %41 = arith.subf %40, %39 : vector<1x32xf32>
    %42 = math.exp %41 : vector<1x32xf32>
    %cst_22 = arith.constant 1.000000e+00 : f32
    %43 = vector.broadcast %cst_22 : f32 to vector<1x32xf32>
    %44 = arith.addf %43, %42 : vector<1x32xf32>
    %cst_23 = arith.constant 1.000000e+00 : f32
    %45 = vector.broadcast %cst_23 : f32 to vector<1x32xf32>
    %46 = arith.divf %45, %44 : vector<1x32xf32>
    %47 = vector.extract_strided_slice %30 {offsets = [0, 64], sizes = [1, 32], strides = [1, 1]} : vector<1x128xf32> to vector<1x32xf32>
    %48 = math.tanh %47 : vector<1x32xf32>
    %49 = vector.extract_strided_slice %30 {offsets = [0, 96], sizes = [1, 32], strides = [1, 1]} : vector<1x128xf32> to vector<1x32xf32>
    %cst_24 = arith.constant 0.000000e+00 : f32
    %50 = vector.broadcast %cst_24 : f32 to vector<1x32xf32>
    %51 = arith.subf %50, %49 : vector<1x32xf32>
    %52 = math.exp %51 : vector<1x32xf32>
    %cst_25 = arith.constant 1.000000e+00 : f32
    %53 = vector.broadcast %cst_25 : f32 to vector<1x32xf32>
    %54 = arith.addf %53, %52 : vector<1x32xf32>
    %cst_26 = arith.constant 1.000000e+00 : f32
    %55 = vector.broadcast %cst_26 : f32 to vector<1x32xf32>
    %56 = arith.divf %55, %54 : vector<1x32xf32>
    %57 = arith.mulf %46, %25 : vector<1x32xf32>
    %58 = arith.mulf %38, %48 : vector<1x32xf32>
    %59 = arith.addf %57, %58 : vector<1x32xf32>
    %60 = math.tanh %59 : vector<1x32xf32>
    %61 = arith.mulf %56, %60 : vector<1x32xf32>
    %c0_i32 = arith.constant 0 : i32
    %62 = vector.broadcast %c0_i32 : i32 to vector<8x32xi32>
    %63 = arith.cmpi eq, %27, %62 : vector<8x32xi32>
    %64 = vector.shape_cast %61 : vector<1x32xf32> to vector<1x32xf32>
    %65 = vector.broadcast %64 : vector<1x32xf32> to vector<8x32xf32>
    %66 = arith.select %63, %65, %26 : vector<8x32xi1>, vector<8x32xf32>
    %67 = vector.extract_strided_slice %22 {offsets = [1, 0], sizes = [1, 128], strides = [1, 1]} : vector<8x128xf32> to vector<1x128xf32>
    %cst_27 = arith.constant dense<0.000000e+00> : vector<1x128xf32>
    %68 = tpu.matmul %61, %23, %cst_27 {dimension_numbers = #tpu.dot_dimension_numbers<[1], [0], [0], [1], [0, 0, 1, 1], [], []>} : vector<1x32xf32>, vector<32x128xf32>, vector<1x128xf32> -> vector<1x128xf32>
    %69 = arith.addf %67, %68 : vector<1x128xf32>
    %70 = vector.extract_strided_slice %69 {offsets = [0, 0], sizes = [1, 32], strides = [1, 1]} : vector<1x128xf32> to vector<1x32xf32>
    %cst_28 = arith.constant 0.000000e+00 : f32
    %71 = vector.broadcast %cst_28 : f32 to vector<1x32xf32>
    %72 = arith.subf %71, %70 : vector<1x32xf32>
    %73 = math.exp %72 : vector<1x32xf32>
    %cst_29 = arith.constant 1.000000e+00 : f32
    %74 = vector.broadcast %cst_29 : f32 to vector<1x32xf32>
    %75 = arith.addf %74, %73 : vector<1x32xf32>
    %cst_30 = arith.constant 1.000000e+00 : f32
    %76 = vector.broadcast %cst_30 : f32 to vector<1x32xf32>
    %77 = arith.divf %76, %75 : vector<1x32xf32>
    %78 = vector.extract_strided_slice %69 {offsets = [0, 32], sizes = [1, 32], strides = [1, 1]} : vector<1x128xf32> to vector<1x32xf32>
    %cst_31 = arith.constant 0.000000e+00 : f32
    %79 = vector.broadcast %cst_31 : f32 to vector<1x32xf32>
    %80 = arith.subf %79, %78 : vector<1x32xf32>
    %81 = math.exp %80 : vector<1x32xf32>
    %cst_32 = arith.constant 1.000000e+00 : f32
    %82 = vector.broadcast %cst_32 : f32 to vector<1x32xf32>
    %83 = arith.addf %82, %81 : vector<1x32xf32>
    %cst_33 = arith.constant 1.000000e+00 : f32
    %84 = vector.broadcast %cst_33 : f32 to vector<1x32xf32>
    %85 = arith.divf %84, %83 : vector<1x32xf32>
    %86 = vector.extract_strided_slice %69 {offsets = [0, 64], sizes = [1, 32], strides = [1, 1]} : vector<1x128xf32> to vector<1x32xf32>
    %87 = math.tanh %86 : vector<1x32xf32>
    %88 = vector.extract_strided_slice %69 {offsets = [0, 96], sizes = [1, 32], strides = [1, 1]} : vector<1x128xf32> to vector<1x32xf32>
    %cst_34 = arith.constant 0.000000e+00 : f32
    %89 = vector.broadcast %cst_34 : f32 to vector<1x32xf32>
    %90 = arith.subf %89, %88 : vector<1x32xf32>
    %91 = math.exp %90 : vector<1x32xf32>
    %cst_35 = arith.constant 1.000000e+00 : f32
    %92 = vector.broadcast %cst_35 : f32 to vector<1x32xf32>
    %93 = arith.addf %92, %91 : vector<1x32xf32>
    %cst_36 = arith.constant 1.000000e+00 : f32
    %94 = vector.broadcast %cst_36 : f32 to vector<1x32xf32>
    %95 = arith.divf %94, %93 : vector<1x32xf32>
    %96 = arith.mulf %85, %59 : vector<1x32xf32>
    %97 = arith.mulf %77, %87 : vector<1x32xf32>
    %98 = arith.addf %96, %97 : vector<1x32xf32>
    %99 = math.tanh %98 : vector<1x32xf32>
    %100 = arith.mulf %95, %99 : vector<1x32xf32>
    %c1_i32 = arith.constant 1 : i32
    %101 = vector.broadcast %c1_i32 : i32 to vector<8x32xi32>
    %102 = arith.cmpi eq, %27, %101 : vector<8x32xi32>
    %103 = vector.shape_cast %100 : vector<1x32xf32> to vector<1x32xf32>
    %104 = vector.broadcast %103 : vector<1x32xf32> to vector<8x32xf32>
    %105 = arith.select %102, %104, %66 : vector<8x32xi1>, vector<8x32xf32>
    %106 = vector.extract_strided_slice %22 {offsets = [2, 0], sizes = [1, 128], strides = [1, 1]} : vector<8x128xf32> to vector<1x128xf32>
    %cst_37 = arith.constant dense<0.000000e+00> : vector<1x128xf32>
    %107 = tpu.matmul %100, %23, %cst_37 {dimension_numbers = #tpu.dot_dimension_numbers<[1], [0], [0], [1], [0, 0, 1, 1], [], []>} : vector<1x32xf32>, vector<32x128xf32>, vector<1x128xf32> -> vector<1x128xf32>
    %108 = arith.addf %106, %107 : vector<1x128xf32>
    %109 = vector.extract_strided_slice %108 {offsets = [0, 0], sizes = [1, 32], strides = [1, 1]} : vector<1x128xf32> to vector<1x32xf32>
    %cst_38 = arith.constant 0.000000e+00 : f32
    %110 = vector.broadcast %cst_38 : f32 to vector<1x32xf32>
    %111 = arith.subf %110, %109 : vector<1x32xf32>
    %112 = math.exp %111 : vector<1x32xf32>
    %cst_39 = arith.constant 1.000000e+00 : f32
    %113 = vector.broadcast %cst_39 : f32 to vector<1x32xf32>
    %114 = arith.addf %113, %112 : vector<1x32xf32>
    %cst_40 = arith.constant 1.000000e+00 : f32
    %115 = vector.broadcast %cst_40 : f32 to vector<1x32xf32>
    %116 = arith.divf %115, %114 : vector<1x32xf32>
    %117 = vector.extract_strided_slice %108 {offsets = [0, 32], sizes = [1, 32], strides = [1, 1]} : vector<1x128xf32> to vector<1x32xf32>
    %cst_41 = arith.constant 0.000000e+00 : f32
    %118 = vector.broadcast %cst_41 : f32 to vector<1x32xf32>
    %119 = arith.subf %118, %117 : vector<1x32xf32>
    %120 = math.exp %119 : vector<1x32xf32>
    %cst_42 = arith.constant 1.000000e+00 : f32
    %121 = vector.broadcast %cst_42 : f32 to vector<1x32xf32>
    %122 = arith.addf %121, %120 : vector<1x32xf32>
    %cst_43 = arith.constant 1.000000e+00 : f32
    %123 = vector.broadcast %cst_43 : f32 to vector<1x32xf32>
    %124 = arith.divf %123, %122 : vector<1x32xf32>
    %125 = vector.extract_strided_slice %108 {offsets = [0, 64], sizes = [1, 32], strides = [1, 1]} : vector<1x128xf32> to vector<1x32xf32>
    %126 = math.tanh %125 : vector<1x32xf32>
    %127 = vector.extract_strided_slice %108 {offsets = [0, 96], sizes = [1, 32], strides = [1, 1]} : vector<1x128xf32> to vector<1x32xf32>
    %cst_44 = arith.constant 0.000000e+00 : f32
    %128 = vector.broadcast %cst_44 : f32 to vector<1x32xf32>
    %129 = arith.subf %128, %127 : vector<1x32xf32>
    %130 = math.exp %129 : vector<1x32xf32>
    %cst_45 = arith.constant 1.000000e+00 : f32
    %131 = vector.broadcast %cst_45 : f32 to vector<1x32xf32>
    %132 = arith.addf %131, %130 : vector<1x32xf32>
    %cst_46 = arith.constant 1.000000e+00 : f32
    %133 = vector.broadcast %cst_46 : f32 to vector<1x32xf32>
    %134 = arith.divf %133, %132 : vector<1x32xf32>
    %135 = arith.mulf %124, %98 : vector<1x32xf32>
    %136 = arith.mulf %116, %126 : vector<1x32xf32>
    %137 = arith.addf %135, %136 : vector<1x32xf32>
    %138 = math.tanh %137 : vector<1x32xf32>
    %139 = arith.mulf %134, %138 : vector<1x32xf32>
    %c2_i32 = arith.constant 2 : i32
    %140 = vector.broadcast %c2_i32 : i32 to vector<8x32xi32>
    %141 = arith.cmpi eq, %27, %140 : vector<8x32xi32>
    %142 = vector.shape_cast %139 : vector<1x32xf32> to vector<1x32xf32>
    %143 = vector.broadcast %142 : vector<1x32xf32> to vector<8x32xf32>
    %144 = arith.select %141, %143, %105 : vector<8x32xi1>, vector<8x32xf32>
    %145 = vector.extract_strided_slice %22 {offsets = [3, 0], sizes = [1, 128], strides = [1, 1]} : vector<8x128xf32> to vector<1x128xf32>
    %cst_47 = arith.constant dense<0.000000e+00> : vector<1x128xf32>
    %146 = tpu.matmul %139, %23, %cst_47 {dimension_numbers = #tpu.dot_dimension_numbers<[1], [0], [0], [1], [0, 0, 1, 1], [], []>} : vector<1x32xf32>, vector<32x128xf32>, vector<1x128xf32> -> vector<1x128xf32>
    %147 = arith.addf %145, %146 : vector<1x128xf32>
    %148 = vector.extract_strided_slice %147 {offsets = [0, 0], sizes = [1, 32], strides = [1, 1]} : vector<1x128xf32> to vector<1x32xf32>
    %cst_48 = arith.constant 0.000000e+00 : f32
    %149 = vector.broadcast %cst_48 : f32 to vector<1x32xf32>
    %150 = arith.subf %149, %148 : vector<1x32xf32>
    %151 = math.exp %150 : vector<1x32xf32>
    %cst_49 = arith.constant 1.000000e+00 : f32
    %152 = vector.broadcast %cst_49 : f32 to vector<1x32xf32>
    %153 = arith.addf %152, %151 : vector<1x32xf32>
    %cst_50 = arith.constant 1.000000e+00 : f32
    %154 = vector.broadcast %cst_50 : f32 to vector<1x32xf32>
    %155 = arith.divf %154, %153 : vector<1x32xf32>
    %156 = vector.extract_strided_slice %147 {offsets = [0, 32], sizes = [1, 32], strides = [1, 1]} : vector<1x128xf32> to vector<1x32xf32>
    %cst_51 = arith.constant 0.000000e+00 : f32
    %157 = vector.broadcast %cst_51 : f32 to vector<1x32xf32>
    %158 = arith.subf %157, %156 : vector<1x32xf32>
    %159 = math.exp %158 : vector<1x32xf32>
    %cst_52 = arith.constant 1.000000e+00 : f32
    %160 = vector.broadcast %cst_52 : f32 to vector<1x32xf32>
    %161 = arith.addf %160, %159 : vector<1x32xf32>
    %cst_53 = arith.constant 1.000000e+00 : f32
    %162 = vector.broadcast %cst_53 : f32 to vector<1x32xf32>
    %163 = arith.divf %162, %161 : vector<1x32xf32>
    %164 = vector.extract_strided_slice %147 {offsets = [0, 64], sizes = [1, 32], strides = [1, 1]} : vector<1x128xf32> to vector<1x32xf32>
    %165 = math.tanh %164 : vector<1x32xf32>
    %166 = vector.extract_strided_slice %147 {offsets = [0, 96], sizes = [1, 32], strides = [1, 1]} : vector<1x128xf32> to vector<1x32xf32>
    %cst_54 = arith.constant 0.000000e+00 : f32
    %167 = vector.broadcast %cst_54 : f32 to vector<1x32xf32>
    %168 = arith.subf %167, %166 : vector<1x32xf32>
    %169 = math.exp %168 : vector<1x32xf32>
    %cst_55 = arith.constant 1.000000e+00 : f32
    %170 = vector.broadcast %cst_55 : f32 to vector<1x32xf32>
    %171 = arith.addf %170, %169 : vector<1x32xf32>
    %cst_56 = arith.constant 1.000000e+00 : f32
    %172 = vector.broadcast %cst_56 : f32 to vector<1x32xf32>
    %173 = arith.divf %172, %171 : vector<1x32xf32>
    %174 = arith.mulf %163, %137 : vector<1x32xf32>
    %175 = arith.mulf %155, %165 : vector<1x32xf32>
    %176 = arith.addf %174, %175 : vector<1x32xf32>
    %177 = math.tanh %176 : vector<1x32xf32>
    %178 = arith.mulf %173, %177 : vector<1x32xf32>
    %c3_i32 = arith.constant 3 : i32
    %179 = vector.broadcast %c3_i32 : i32 to vector<8x32xi32>
    %180 = arith.cmpi eq, %27, %179 : vector<8x32xi32>
    %181 = vector.shape_cast %178 : vector<1x32xf32> to vector<1x32xf32>
    %182 = vector.broadcast %181 : vector<1x32xf32> to vector<8x32xf32>
    %183 = arith.select %180, %182, %144 : vector<8x32xi1>, vector<8x32xf32>
    %184 = vector.extract_strided_slice %22 {offsets = [4, 0], sizes = [1, 128], strides = [1, 1]} : vector<8x128xf32> to vector<1x128xf32>
    %cst_57 = arith.constant dense<0.000000e+00> : vector<1x128xf32>
    %185 = tpu.matmul %178, %23, %cst_57 {dimension_numbers = #tpu.dot_dimension_numbers<[1], [0], [0], [1], [0, 0, 1, 1], [], []>} : vector<1x32xf32>, vector<32x128xf32>, vector<1x128xf32> -> vector<1x128xf32>
    %186 = arith.addf %184, %185 : vector<1x128xf32>
    %187 = vector.extract_strided_slice %186 {offsets = [0, 0], sizes = [1, 32], strides = [1, 1]} : vector<1x128xf32> to vector<1x32xf32>
    %cst_58 = arith.constant 0.000000e+00 : f32
    %188 = vector.broadcast %cst_58 : f32 to vector<1x32xf32>
    %189 = arith.subf %188, %187 : vector<1x32xf32>
    %190 = math.exp %189 : vector<1x32xf32>
    %cst_59 = arith.constant 1.000000e+00 : f32
    %191 = vector.broadcast %cst_59 : f32 to vector<1x32xf32>
    %192 = arith.addf %191, %190 : vector<1x32xf32>
    %cst_60 = arith.constant 1.000000e+00 : f32
    %193 = vector.broadcast %cst_60 : f32 to vector<1x32xf32>
    %194 = arith.divf %193, %192 : vector<1x32xf32>
    %195 = vector.extract_strided_slice %186 {offsets = [0, 32], sizes = [1, 32], strides = [1, 1]} : vector<1x128xf32> to vector<1x32xf32>
    %cst_61 = arith.constant 0.000000e+00 : f32
    %196 = vector.broadcast %cst_61 : f32 to vector<1x32xf32>
    %197 = arith.subf %196, %195 : vector<1x32xf32>
    %198 = math.exp %197 : vector<1x32xf32>
    %cst_62 = arith.constant 1.000000e+00 : f32
    %199 = vector.broadcast %cst_62 : f32 to vector<1x32xf32>
    %200 = arith.addf %199, %198 : vector<1x32xf32>
    %cst_63 = arith.constant 1.000000e+00 : f32
    %201 = vector.broadcast %cst_63 : f32 to vector<1x32xf32>
    %202 = arith.divf %201, %200 : vector<1x32xf32>
    %203 = vector.extract_strided_slice %186 {offsets = [0, 64], sizes = [1, 32], strides = [1, 1]} : vector<1x128xf32> to vector<1x32xf32>
    %204 = math.tanh %203 : vector<1x32xf32>
    %205 = vector.extract_strided_slice %186 {offsets = [0, 96], sizes = [1, 32], strides = [1, 1]} : vector<1x128xf32> to vector<1x32xf32>
    %cst_64 = arith.constant 0.000000e+00 : f32
    %206 = vector.broadcast %cst_64 : f32 to vector<1x32xf32>
    %207 = arith.subf %206, %205 : vector<1x32xf32>
    %208 = math.exp %207 : vector<1x32xf32>
    %cst_65 = arith.constant 1.000000e+00 : f32
    %209 = vector.broadcast %cst_65 : f32 to vector<1x32xf32>
    %210 = arith.addf %209, %208 : vector<1x32xf32>
    %cst_66 = arith.constant 1.000000e+00 : f32
    %211 = vector.broadcast %cst_66 : f32 to vector<1x32xf32>
    %212 = arith.divf %211, %210 : vector<1x32xf32>
    %213 = arith.mulf %202, %176 : vector<1x32xf32>
    %214 = arith.mulf %194, %204 : vector<1x32xf32>
    %215 = arith.addf %213, %214 : vector<1x32xf32>
    %216 = math.tanh %215 : vector<1x32xf32>
    %217 = arith.mulf %212, %216 : vector<1x32xf32>
    %c4_i32 = arith.constant 4 : i32
    %218 = vector.broadcast %c4_i32 : i32 to vector<8x32xi32>
    %219 = arith.cmpi eq, %27, %218 : vector<8x32xi32>
    %220 = vector.shape_cast %217 : vector<1x32xf32> to vector<1x32xf32>
    %221 = vector.broadcast %220 : vector<1x32xf32> to vector<8x32xf32>
    %222 = arith.select %219, %221, %183 : vector<8x32xi1>, vector<8x32xf32>
    %223 = vector.extract_strided_slice %22 {offsets = [5, 0], sizes = [1, 128], strides = [1, 1]} : vector<8x128xf32> to vector<1x128xf32>
    %cst_67 = arith.constant dense<0.000000e+00> : vector<1x128xf32>
    %224 = tpu.matmul %217, %23, %cst_67 {dimension_numbers = #tpu.dot_dimension_numbers<[1], [0], [0], [1], [0, 0, 1, 1], [], []>} : vector<1x32xf32>, vector<32x128xf32>, vector<1x128xf32> -> vector<1x128xf32>
    %225 = arith.addf %223, %224 : vector<1x128xf32>
    %226 = vector.extract_strided_slice %225 {offsets = [0, 0], sizes = [1, 32], strides = [1, 1]} : vector<1x128xf32> to vector<1x32xf32>
    %cst_68 = arith.constant 0.000000e+00 : f32
    %227 = vector.broadcast %cst_68 : f32 to vector<1x32xf32>
    %228 = arith.subf %227, %226 : vector<1x32xf32>
    %229 = math.exp %228 : vector<1x32xf32>
    %cst_69 = arith.constant 1.000000e+00 : f32
    %230 = vector.broadcast %cst_69 : f32 to vector<1x32xf32>
    %231 = arith.addf %230, %229 : vector<1x32xf32>
    %cst_70 = arith.constant 1.000000e+00 : f32
    %232 = vector.broadcast %cst_70 : f32 to vector<1x32xf32>
    %233 = arith.divf %232, %231 : vector<1x32xf32>
    %234 = vector.extract_strided_slice %225 {offsets = [0, 32], sizes = [1, 32], strides = [1, 1]} : vector<1x128xf32> to vector<1x32xf32>
    %cst_71 = arith.constant 0.000000e+00 : f32
    %235 = vector.broadcast %cst_71 : f32 to vector<1x32xf32>
    %236 = arith.subf %235, %234 : vector<1x32xf32>
    %237 = math.exp %236 : vector<1x32xf32>
    %cst_72 = arith.constant 1.000000e+00 : f32
    %238 = vector.broadcast %cst_72 : f32 to vector<1x32xf32>
    %239 = arith.addf %238, %237 : vector<1x32xf32>
    %cst_73 = arith.constant 1.000000e+00 : f32
    %240 = vector.broadcast %cst_73 : f32 to vector<1x32xf32>
    %241 = arith.divf %240, %239 : vector<1x32xf32>
    %242 = vector.extract_strided_slice %225 {offsets = [0, 64], sizes = [1, 32], strides = [1, 1]} : vector<1x128xf32> to vector<1x32xf32>
    %243 = math.tanh %242 : vector<1x32xf32>
    %244 = vector.extract_strided_slice %225 {offsets = [0, 96], sizes = [1, 32], strides = [1, 1]} : vector<1x128xf32> to vector<1x32xf32>
    %cst_74 = arith.constant 0.000000e+00 : f32
    %245 = vector.broadcast %cst_74 : f32 to vector<1x32xf32>
    %246 = arith.subf %245, %244 : vector<1x32xf32>
    %247 = math.exp %246 : vector<1x32xf32>
    %cst_75 = arith.constant 1.000000e+00 : f32
    %248 = vector.broadcast %cst_75 : f32 to vector<1x32xf32>
    %249 = arith.addf %248, %247 : vector<1x32xf32>
    %cst_76 = arith.constant 1.000000e+00 : f32
    %250 = vector.broadcast %cst_76 : f32 to vector<1x32xf32>
    %251 = arith.divf %250, %249 : vector<1x32xf32>
    %252 = arith.mulf %241, %215 : vector<1x32xf32>
    %253 = arith.mulf %233, %243 : vector<1x32xf32>
    %254 = arith.addf %252, %253 : vector<1x32xf32>
    %255 = math.tanh %254 : vector<1x32xf32>
    %256 = arith.mulf %251, %255 : vector<1x32xf32>
    %c5_i32 = arith.constant 5 : i32
    %257 = vector.broadcast %c5_i32 : i32 to vector<8x32xi32>
    %258 = arith.cmpi eq, %27, %257 : vector<8x32xi32>
    %259 = vector.shape_cast %256 : vector<1x32xf32> to vector<1x32xf32>
    %260 = vector.broadcast %259 : vector<1x32xf32> to vector<8x32xf32>
    %261 = arith.select %258, %260, %222 : vector<8x32xi1>, vector<8x32xf32>
    %262 = vector.extract_strided_slice %22 {offsets = [6, 0], sizes = [1, 128], strides = [1, 1]} : vector<8x128xf32> to vector<1x128xf32>
    %cst_77 = arith.constant dense<0.000000e+00> : vector<1x128xf32>
    %263 = tpu.matmul %256, %23, %cst_77 {dimension_numbers = #tpu.dot_dimension_numbers<[1], [0], [0], [1], [0, 0, 1, 1], [], []>} : vector<1x32xf32>, vector<32x128xf32>, vector<1x128xf32> -> vector<1x128xf32>
    %264 = arith.addf %262, %263 : vector<1x128xf32>
    %265 = vector.extract_strided_slice %264 {offsets = [0, 0], sizes = [1, 32], strides = [1, 1]} : vector<1x128xf32> to vector<1x32xf32>
    %cst_78 = arith.constant 0.000000e+00 : f32
    %266 = vector.broadcast %cst_78 : f32 to vector<1x32xf32>
    %267 = arith.subf %266, %265 : vector<1x32xf32>
    %268 = math.exp %267 : vector<1x32xf32>
    %cst_79 = arith.constant 1.000000e+00 : f32
    %269 = vector.broadcast %cst_79 : f32 to vector<1x32xf32>
    %270 = arith.addf %269, %268 : vector<1x32xf32>
    %cst_80 = arith.constant 1.000000e+00 : f32
    %271 = vector.broadcast %cst_80 : f32 to vector<1x32xf32>
    %272 = arith.divf %271, %270 : vector<1x32xf32>
    %273 = vector.extract_strided_slice %264 {offsets = [0, 32], sizes = [1, 32], strides = [1, 1]} : vector<1x128xf32> to vector<1x32xf32>
    %cst_81 = arith.constant 0.000000e+00 : f32
    %274 = vector.broadcast %cst_81 : f32 to vector<1x32xf32>
    %275 = arith.subf %274, %273 : vector<1x32xf32>
    %276 = math.exp %275 : vector<1x32xf32>
    %cst_82 = arith.constant 1.000000e+00 : f32
    %277 = vector.broadcast %cst_82 : f32 to vector<1x32xf32>
    %278 = arith.addf %277, %276 : vector<1x32xf32>
    %cst_83 = arith.constant 1.000000e+00 : f32
    %279 = vector.broadcast %cst_83 : f32 to vector<1x32xf32>
    %280 = arith.divf %279, %278 : vector<1x32xf32>
    %281 = vector.extract_strided_slice %264 {offsets = [0, 64], sizes = [1, 32], strides = [1, 1]} : vector<1x128xf32> to vector<1x32xf32>
    %282 = math.tanh %281 : vector<1x32xf32>
    %283 = vector.extract_strided_slice %264 {offsets = [0, 96], sizes = [1, 32], strides = [1, 1]} : vector<1x128xf32> to vector<1x32xf32>
    %cst_84 = arith.constant 0.000000e+00 : f32
    %284 = vector.broadcast %cst_84 : f32 to vector<1x32xf32>
    %285 = arith.subf %284, %283 : vector<1x32xf32>
    %286 = math.exp %285 : vector<1x32xf32>
    %cst_85 = arith.constant 1.000000e+00 : f32
    %287 = vector.broadcast %cst_85 : f32 to vector<1x32xf32>
    %288 = arith.addf %287, %286 : vector<1x32xf32>
    %cst_86 = arith.constant 1.000000e+00 : f32
    %289 = vector.broadcast %cst_86 : f32 to vector<1x32xf32>
    %290 = arith.divf %289, %288 : vector<1x32xf32>
    %291 = arith.mulf %280, %254 : vector<1x32xf32>
    %292 = arith.mulf %272, %282 : vector<1x32xf32>
    %293 = arith.addf %291, %292 : vector<1x32xf32>
    %294 = math.tanh %293 : vector<1x32xf32>
    %295 = arith.mulf %290, %294 : vector<1x32xf32>
    %c6_i32 = arith.constant 6 : i32
    %296 = vector.broadcast %c6_i32 : i32 to vector<8x32xi32>
    %297 = arith.cmpi eq, %27, %296 : vector<8x32xi32>
    %298 = vector.shape_cast %295 : vector<1x32xf32> to vector<1x32xf32>
    %299 = vector.broadcast %298 : vector<1x32xf32> to vector<8x32xf32>
    %300 = arith.select %297, %299, %261 : vector<8x32xi1>, vector<8x32xf32>
    %301 = vector.extract_strided_slice %22 {offsets = [7, 0], sizes = [1, 128], strides = [1, 1]} : vector<8x128xf32> to vector<1x128xf32>
    %cst_87 = arith.constant dense<0.000000e+00> : vector<1x128xf32>
    %302 = tpu.matmul %295, %23, %cst_87 {dimension_numbers = #tpu.dot_dimension_numbers<[1], [0], [0], [1], [0, 0, 1, 1], [], []>} : vector<1x32xf32>, vector<32x128xf32>, vector<1x128xf32> -> vector<1x128xf32>
    %303 = arith.addf %301, %302 : vector<1x128xf32>
    %304 = vector.extract_strided_slice %303 {offsets = [0, 0], sizes = [1, 32], strides = [1, 1]} : vector<1x128xf32> to vector<1x32xf32>
    %cst_88 = arith.constant 0.000000e+00 : f32
    %305 = vector.broadcast %cst_88 : f32 to vector<1x32xf32>
    %306 = arith.subf %305, %304 : vector<1x32xf32>
    %307 = math.exp %306 : vector<1x32xf32>
    %cst_89 = arith.constant 1.000000e+00 : f32
    %308 = vector.broadcast %cst_89 : f32 to vector<1x32xf32>
    %309 = arith.addf %308, %307 : vector<1x32xf32>
    %cst_90 = arith.constant 1.000000e+00 : f32
    %310 = vector.broadcast %cst_90 : f32 to vector<1x32xf32>
    %311 = arith.divf %310, %309 : vector<1x32xf32>
    %312 = vector.extract_strided_slice %303 {offsets = [0, 32], sizes = [1, 32], strides = [1, 1]} : vector<1x128xf32> to vector<1x32xf32>
    %cst_91 = arith.constant 0.000000e+00 : f32
    %313 = vector.broadcast %cst_91 : f32 to vector<1x32xf32>
    %314 = arith.subf %313, %312 : vector<1x32xf32>
    %315 = math.exp %314 : vector<1x32xf32>
    %cst_92 = arith.constant 1.000000e+00 : f32
    %316 = vector.broadcast %cst_92 : f32 to vector<1x32xf32>
    %317 = arith.addf %316, %315 : vector<1x32xf32>
    %cst_93 = arith.constant 1.000000e+00 : f32
    %318 = vector.broadcast %cst_93 : f32 to vector<1x32xf32>
    %319 = arith.divf %318, %317 : vector<1x32xf32>
    %320 = vector.extract_strided_slice %303 {offsets = [0, 64], sizes = [1, 32], strides = [1, 1]} : vector<1x128xf32> to vector<1x32xf32>
    %321 = math.tanh %320 : vector<1x32xf32>
    %322 = vector.extract_strided_slice %303 {offsets = [0, 96], sizes = [1, 32], strides = [1, 1]} : vector<1x128xf32> to vector<1x32xf32>
    %cst_94 = arith.constant 0.000000e+00 : f32
    %323 = vector.broadcast %cst_94 : f32 to vector<1x32xf32>
    %324 = arith.subf %323, %322 : vector<1x32xf32>
    %325 = math.exp %324 : vector<1x32xf32>
    %cst_95 = arith.constant 1.000000e+00 : f32
    %326 = vector.broadcast %cst_95 : f32 to vector<1x32xf32>
    %327 = arith.addf %326, %325 : vector<1x32xf32>
    %cst_96 = arith.constant 1.000000e+00 : f32
    %328 = vector.broadcast %cst_96 : f32 to vector<1x32xf32>
    %329 = arith.divf %328, %327 : vector<1x32xf32>
    %330 = arith.mulf %319, %293 : vector<1x32xf32>
    %331 = arith.mulf %311, %321 : vector<1x32xf32>
    %332 = arith.addf %330, %331 : vector<1x32xf32>
    %333 = math.tanh %332 : vector<1x32xf32>
    %334 = arith.mulf %329, %333 : vector<1x32xf32>
    %c7_i32 = arith.constant 7 : i32
    %335 = vector.broadcast %c7_i32 : i32 to vector<8x32xi32>
    %336 = arith.cmpi eq, %27, %335 : vector<8x32xi32>
    %337 = vector.shape_cast %334 : vector<1x32xf32> to vector<1x32xf32>
    %338 = vector.broadcast %337 : vector<1x32xf32> to vector<8x32xf32>
    %339 = arith.select %336, %338, %300 : vector<8x32xi1>, vector<8x32xf32>
    %340 = tpu.iota {dimensions = array<i32: 0>} : vector<8x8xi32>
    %341 = tpu.iota {dimensions = array<i32: 1>} : vector<8x8xi32>
    %342 = arith.addi %340, %341 : vector<8x8xi32>
    %c7_i32_97 = arith.constant 7 : i32
    %343 = vector.broadcast %c7_i32_97 : i32 to vector<8x8xi32>
    %344 = arith.cmpi eq, %342, %343 : vector<8x8xi32>
    %345 = arith.extui %344 : vector<8x8xi1> to vector<8x8xi32>
    %346 = arith.sitofp %345 : vector<8x8xi32> to vector<8x8xf32>
    %c0_98 = arith.constant 0 : index
    %c0_99 = arith.constant 0 : index
    %347 = vector.load %arg6[%c0_98, %c0_99] : memref<32x5xf32, #tpu.memory_space<vmem>>, vector<32x5xf32>
    %cst_100 = arith.constant dense<0.000000e+00> : vector<8x5xf32>
    %348 = tpu.matmul %339, %347, %cst_100 {dimension_numbers = #tpu.dot_dimension_numbers<[1], [0], [0], [1], [0, 0, 1, 1], [], []>} : vector<8x32xf32>, vector<32x5xf32>, vector<8x5xf32> -> vector<8x5xf32>
    %c0_101 = arith.constant 0 : index
    %c0_102 = arith.constant 0 : index
    %349 = vector.load %arg7[%c0_101, %c0_102] : memref<32x5xf32, #tpu.memory_space<vmem>>, vector<32x5xf32>
    %cst_103 = arith.constant dense<0.000000e+00> : vector<8x5xf32>
    %350 = tpu.matmul %339, %349, %cst_103 {dimension_numbers = #tpu.dot_dimension_numbers<[1], [0], [0], [1], [0, 0, 1, 1], [], []>} : vector<8x32xf32>, vector<32x5xf32>, vector<8x5xf32> -> vector<8x5xf32>
    %cst_104 = arith.constant dense<0.000000e+00> : vector<8x5xf32>
    %351 = tpu.matmul %346, %350, %cst_104 {dimension_numbers = #tpu.dot_dimension_numbers<[1], [0], [0], [1], [0, 0, 1, 1], [], []>} : vector<8x8xf32>, vector<8x5xf32>, vector<8x5xf32> -> vector<8x5xf32>
    %352 = arith.addf %348, %351 : vector<8x5xf32>
    %c0_105 = arith.constant 0 : index
    %c0_106 = arith.constant 0 : index
    %353 = vector.load %arg8[%c0_105, %c0_106] : memref<1x5xf32, #tpu.memory_space<vmem>>, vector<1x5xf32>
    %354 = vector.broadcast %353 : vector<1x5xf32> to vector<8x5xf32>
    %355 = arith.addf %352, %354 : vector<8x5xf32>
    %c0_107 = arith.constant 0 : index
    %c0_108 = arith.constant 0 : index
    %356 = vector.load %arg9[%c0_107, %c0_108] : memref<5x5xf32, #tpu.memory_space<vmem>>, vector<5x5xf32>
    %357 = tpu.iota {dimensions = array<i32: 1>} : vector<1x5xi32>
    %358 = tpu.iota {dimensions = array<i32: 1>} : vector<5x5xi32>
    %359 = tpu.iota {dimensions = array<i32: 0>} : vector<5x5xi32>
    %360 = arith.cmpi eq, %359, %358 : vector<5x5xi32>
    %cst_109 = arith.constant 1.000000e+00 : f32
    %361 = vector.broadcast %cst_109 : f32 to vector<1x5xf32>
    %c3_i32_110 = arith.constant 3 : i32
    %362 = vector.broadcast %c3_i32_110 : i32 to vector<1x5xi32>
    %363 = arith.cmpi eq, %357, %362 : vector<1x5xi32>
    %cst_111 = arith.constant 0.000000e+00 : f32
    %cst_112 = arith.constant -1.000000e+04 : f32
    %364 = vector.broadcast %cst_111 : f32 to vector<1x5xf32>
    %365 = vector.broadcast %cst_112 : f32 to vector<1x5xf32>
    %366 = arith.select %363, %364, %365 : vector<1x5xi1>, vector<1x5xf32>
    %367 = vector.broadcast %366 : vector<1x5xf32> to vector<5x5xf32>
    %368 = arith.addf %356, %367 : vector<5x5xf32>
    %cst_113 = arith.constant dense<0xFF800000> : vector<5xf32>
    %369 = vector.multi_reduction <maximumf>, %368, %cst_113 [1] : vector<5x5xf32> to vector<5xf32>
    %370 = vector.shape_cast %369 : vector<5xf32> to vector<5x1xf32>
    %cst_114 = arith.constant 0.000000e+00 : f32
    %371 = vector.shape_cast %370 : vector<5x1xf32> to vector<5x1xf32>
    %372 = vector.broadcast %371 : vector<5x1xf32> to vector<5x5xf32>
    %373 = vector.broadcast %cst_114 : f32 to vector<5x5xf32>
    %374 = arith.select %360, %372, %373 : vector<5x5xi1>, vector<5x5xf32>
    %cst_115 = arith.constant dense<0.000000e+00> : vector<1x5xf32>
    %375 = tpu.matmul %361, %374, %cst_115 {dimension_numbers = #tpu.dot_dimension_numbers<[1], [0], [0], [1], [0, 0, 1, 1], [], []>} : vector<1x5xf32>, vector<5x5xf32>, vector<1x5xf32> -> vector<1x5xf32>
    %376 = vector.extract_strided_slice %355 {offsets = [0, 0], sizes = [1, 5], strides = [1, 1]} : vector<8x5xf32> to vector<1x5xf32>
    %377 = arith.addf %375, %376 : vector<1x5xf32>
    %378 = vector.broadcast %377 : vector<1x5xf32> to vector<5x5xf32>
    %379 = arith.addf %356, %378 : vector<5x5xf32>
    %cst_116 = arith.constant dense<0xFF800000> : vector<5xf32>
    %380 = vector.multi_reduction <maximumf>, %379, %cst_116 [1] : vector<5x5xf32> to vector<5xf32>
    %381 = vector.shape_cast %380 : vector<5xf32> to vector<5x1xf32>
    %382 = vector.broadcast %381 : vector<5x1xf32> to vector<5x5xf32>
    %383 = arith.cmpf oeq, %379, %382 : vector<5x5xf32>
    %c5_i32_117 = arith.constant 5 : i32
    %384 = vector.broadcast %c5_i32_117 : i32 to vector<5x5xi32>
    %385 = arith.select %383, %358, %384 : vector<5x5xi1>, vector<5x5xi32>
    %cst_118 = arith.constant dense<2147483647> : vector<5xi32>
    %386 = vector.multi_reduction <minsi>, %385, %cst_118 [1] : vector<5x5xi32> to vector<5xi32>
    %387 = vector.shape_cast %386 : vector<5xi32> to vector<5x1xi32>
    %388 = arith.sitofp %387 : vector<5x1xi32> to vector<5x1xf32>
    %cst_119 = arith.constant 0.000000e+00 : f32
    %389 = vector.shape_cast %381 : vector<5x1xf32> to vector<5x1xf32>
    %390 = vector.broadcast %389 : vector<5x1xf32> to vector<5x5xf32>
    %391 = vector.broadcast %cst_119 : f32 to vector<5x5xf32>
    %392 = arith.select %360, %390, %391 : vector<5x5xi1>, vector<5x5xf32>
    %cst_120 = arith.constant dense<0.000000e+00> : vector<1x5xf32>
    %393 = tpu.matmul %361, %392, %cst_120 {dimension_numbers = #tpu.dot_dimension_numbers<[1], [0], [0], [1], [0, 0, 1, 1], [], []>} : vector<1x5xf32>, vector<5x5xf32>, vector<1x5xf32> -> vector<1x5xf32>
    %394 = vector.extract_strided_slice %355 {offsets = [1, 0], sizes = [1, 5], strides = [1, 1]} : vector<8x5xf32> to vector<1x5xf32>
    %395 = arith.addf %393, %394 : vector<1x5xf32>
    %396 = vector.broadcast %395 : vector<1x5xf32> to vector<5x5xf32>
    %397 = arith.addf %356, %396 : vector<5x5xf32>
    %cst_121 = arith.constant dense<0xFF800000> : vector<5xf32>
    %398 = vector.multi_reduction <maximumf>, %397, %cst_121 [1] : vector<5x5xf32> to vector<5xf32>
    %399 = vector.shape_cast %398 : vector<5xf32> to vector<5x1xf32>
    %400 = vector.broadcast %399 : vector<5x1xf32> to vector<5x5xf32>
    %401 = arith.cmpf oeq, %397, %400 : vector<5x5xf32>
    %c5_i32_122 = arith.constant 5 : i32
    %402 = vector.broadcast %c5_i32_122 : i32 to vector<5x5xi32>
    %403 = arith.select %401, %358, %402 : vector<5x5xi1>, vector<5x5xi32>
    %cst_123 = arith.constant dense<2147483647> : vector<5xi32>
    %404 = vector.multi_reduction <minsi>, %403, %cst_123 [1] : vector<5x5xi32> to vector<5xi32>
    %405 = vector.shape_cast %404 : vector<5xi32> to vector<5x1xi32>
    %406 = arith.sitofp %405 : vector<5x1xi32> to vector<5x1xf32>
    %cst_124 = arith.constant 0.000000e+00 : f32
    %407 = vector.shape_cast %399 : vector<5x1xf32> to vector<5x1xf32>
    %408 = vector.broadcast %407 : vector<5x1xf32> to vector<5x5xf32>
    %409 = vector.broadcast %cst_124 : f32 to vector<5x5xf32>
    %410 = arith.select %360, %408, %409 : vector<5x5xi1>, vector<5x5xf32>
    %cst_125 = arith.constant dense<0.000000e+00> : vector<1x5xf32>
    %411 = tpu.matmul %361, %410, %cst_125 {dimension_numbers = #tpu.dot_dimension_numbers<[1], [0], [0], [1], [0, 0, 1, 1], [], []>} : vector<1x5xf32>, vector<5x5xf32>, vector<1x5xf32> -> vector<1x5xf32>
    %412 = vector.extract_strided_slice %355 {offsets = [2, 0], sizes = [1, 5], strides = [1, 1]} : vector<8x5xf32> to vector<1x5xf32>
    %413 = arith.addf %411, %412 : vector<1x5xf32>
    %414 = vector.broadcast %413 : vector<1x5xf32> to vector<5x5xf32>
    %415 = arith.addf %356, %414 : vector<5x5xf32>
    %cst_126 = arith.constant dense<0xFF800000> : vector<5xf32>
    %416 = vector.multi_reduction <maximumf>, %415, %cst_126 [1] : vector<5x5xf32> to vector<5xf32>
    %417 = vector.shape_cast %416 : vector<5xf32> to vector<5x1xf32>
    %418 = vector.broadcast %417 : vector<5x1xf32> to vector<5x5xf32>
    %419 = arith.cmpf oeq, %415, %418 : vector<5x5xf32>
    %c5_i32_127 = arith.constant 5 : i32
    %420 = vector.broadcast %c5_i32_127 : i32 to vector<5x5xi32>
    %421 = arith.select %419, %358, %420 : vector<5x5xi1>, vector<5x5xi32>
    %cst_128 = arith.constant dense<2147483647> : vector<5xi32>
    %422 = vector.multi_reduction <minsi>, %421, %cst_128 [1] : vector<5x5xi32> to vector<5xi32>
    %423 = vector.shape_cast %422 : vector<5xi32> to vector<5x1xi32>
    %424 = arith.sitofp %423 : vector<5x1xi32> to vector<5x1xf32>
    %cst_129 = arith.constant 0.000000e+00 : f32
    %425 = vector.shape_cast %417 : vector<5x1xf32> to vector<5x1xf32>
    %426 = vector.broadcast %425 : vector<5x1xf32> to vector<5x5xf32>
    %427 = vector.broadcast %cst_129 : f32 to vector<5x5xf32>
    %428 = arith.select %360, %426, %427 : vector<5x5xi1>, vector<5x5xf32>
    %cst_130 = arith.constant dense<0.000000e+00> : vector<1x5xf32>
    %429 = tpu.matmul %361, %428, %cst_130 {dimension_numbers = #tpu.dot_dimension_numbers<[1], [0], [0], [1], [0, 0, 1, 1], [], []>} : vector<1x5xf32>, vector<5x5xf32>, vector<1x5xf32> -> vector<1x5xf32>
    %430 = vector.extract_strided_slice %355 {offsets = [3, 0], sizes = [1, 5], strides = [1, 1]} : vector<8x5xf32> to vector<1x5xf32>
    %431 = arith.addf %429, %430 : vector<1x5xf32>
    %432 = vector.broadcast %431 : vector<1x5xf32> to vector<5x5xf32>
    %433 = arith.addf %356, %432 : vector<5x5xf32>
    %cst_131 = arith.constant dense<0xFF800000> : vector<5xf32>
    %434 = vector.multi_reduction <maximumf>, %433, %cst_131 [1] : vector<5x5xf32> to vector<5xf32>
    %435 = vector.shape_cast %434 : vector<5xf32> to vector<5x1xf32>
    %436 = vector.broadcast %435 : vector<5x1xf32> to vector<5x5xf32>
    %437 = arith.cmpf oeq, %433, %436 : vector<5x5xf32>
    %c5_i32_132 = arith.constant 5 : i32
    %438 = vector.broadcast %c5_i32_132 : i32 to vector<5x5xi32>
    %439 = arith.select %437, %358, %438 : vector<5x5xi1>, vector<5x5xi32>
    %cst_133 = arith.constant dense<2147483647> : vector<5xi32>
    %440 = vector.multi_reduction <minsi>, %439, %cst_133 [1] : vector<5x5xi32> to vector<5xi32>
    %441 = vector.shape_cast %440 : vector<5xi32> to vector<5x1xi32>
    %442 = arith.sitofp %441 : vector<5x1xi32> to vector<5x1xf32>
    %cst_134 = arith.constant 0.000000e+00 : f32
    %443 = vector.shape_cast %435 : vector<5x1xf32> to vector<5x1xf32>
    %444 = vector.broadcast %443 : vector<5x1xf32> to vector<5x5xf32>
    %445 = vector.broadcast %cst_134 : f32 to vector<5x5xf32>
    %446 = arith.select %360, %444, %445 : vector<5x5xi1>, vector<5x5xf32>
    %cst_135 = arith.constant dense<0.000000e+00> : vector<1x5xf32>
    %447 = tpu.matmul %361, %446, %cst_135 {dimension_numbers = #tpu.dot_dimension_numbers<[1], [0], [0], [1], [0, 0, 1, 1], [], []>} : vector<1x5xf32>, vector<5x5xf32>, vector<1x5xf32> -> vector<1x5xf32>
    %448 = vector.extract_strided_slice %355 {offsets = [4, 0], sizes = [1, 5], strides = [1, 1]} : vector<8x5xf32> to vector<1x5xf32>
    %449 = arith.addf %447, %448 : vector<1x5xf32>
    %450 = vector.broadcast %449 : vector<1x5xf32> to vector<5x5xf32>
    %451 = arith.addf %356, %450 : vector<5x5xf32>
    %cst_136 = arith.constant dense<0xFF800000> : vector<5xf32>
    %452 = vector.multi_reduction <maximumf>, %451, %cst_136 [1] : vector<5x5xf32> to vector<5xf32>
    %453 = vector.shape_cast %452 : vector<5xf32> to vector<5x1xf32>
    %454 = vector.broadcast %453 : vector<5x1xf32> to vector<5x5xf32>
    %455 = arith.cmpf oeq, %451, %454 : vector<5x5xf32>
    %c5_i32_137 = arith.constant 5 : i32
    %456 = vector.broadcast %c5_i32_137 : i32 to vector<5x5xi32>
    %457 = arith.select %455, %358, %456 : vector<5x5xi1>, vector<5x5xi32>
    %cst_138 = arith.constant dense<2147483647> : vector<5xi32>
    %458 = vector.multi_reduction <minsi>, %457, %cst_138 [1] : vector<5x5xi32> to vector<5xi32>
    %459 = vector.shape_cast %458 : vector<5xi32> to vector<5x1xi32>
    %460 = arith.sitofp %459 : vector<5x1xi32> to vector<5x1xf32>
    %cst_139 = arith.constant 0.000000e+00 : f32
    %461 = vector.shape_cast %453 : vector<5x1xf32> to vector<5x1xf32>
    %462 = vector.broadcast %461 : vector<5x1xf32> to vector<5x5xf32>
    %463 = vector.broadcast %cst_139 : f32 to vector<5x5xf32>
    %464 = arith.select %360, %462, %463 : vector<5x5xi1>, vector<5x5xf32>
    %cst_140 = arith.constant dense<0.000000e+00> : vector<1x5xf32>
    %465 = tpu.matmul %361, %464, %cst_140 {dimension_numbers = #tpu.dot_dimension_numbers<[1], [0], [0], [1], [0, 0, 1, 1], [], []>} : vector<1x5xf32>, vector<5x5xf32>, vector<1x5xf32> -> vector<1x5xf32>
    %466 = vector.extract_strided_slice %355 {offsets = [5, 0], sizes = [1, 5], strides = [1, 1]} : vector<8x5xf32> to vector<1x5xf32>
    %467 = arith.addf %465, %466 : vector<1x5xf32>
    %468 = vector.broadcast %467 : vector<1x5xf32> to vector<5x5xf32>
    %469 = arith.addf %356, %468 : vector<5x5xf32>
    %cst_141 = arith.constant dense<0xFF800000> : vector<5xf32>
    %470 = vector.multi_reduction <maximumf>, %469, %cst_141 [1] : vector<5x5xf32> to vector<5xf32>
    %471 = vector.shape_cast %470 : vector<5xf32> to vector<5x1xf32>
    %472 = vector.broadcast %471 : vector<5x1xf32> to vector<5x5xf32>
    %473 = arith.cmpf oeq, %469, %472 : vector<5x5xf32>
    %c5_i32_142 = arith.constant 5 : i32
    %474 = vector.broadcast %c5_i32_142 : i32 to vector<5x5xi32>
    %475 = arith.select %473, %358, %474 : vector<5x5xi1>, vector<5x5xi32>
    %cst_143 = arith.constant dense<2147483647> : vector<5xi32>
    %476 = vector.multi_reduction <minsi>, %475, %cst_143 [1] : vector<5x5xi32> to vector<5xi32>
    %477 = vector.shape_cast %476 : vector<5xi32> to vector<5x1xi32>
    %478 = arith.sitofp %477 : vector<5x1xi32> to vector<5x1xf32>
    %cst_144 = arith.constant 0.000000e+00 : f32
    %479 = vector.shape_cast %471 : vector<5x1xf32> to vector<5x1xf32>
    %480 = vector.broadcast %479 : vector<5x1xf32> to vector<5x5xf32>
    %481 = vector.broadcast %cst_144 : f32 to vector<5x5xf32>
    %482 = arith.select %360, %480, %481 : vector<5x5xi1>, vector<5x5xf32>
    %cst_145 = arith.constant dense<0.000000e+00> : vector<1x5xf32>
    %483 = tpu.matmul %361, %482, %cst_145 {dimension_numbers = #tpu.dot_dimension_numbers<[1], [0], [0], [1], [0, 0, 1, 1], [], []>} : vector<1x5xf32>, vector<5x5xf32>, vector<1x5xf32> -> vector<1x5xf32>
    %484 = vector.extract_strided_slice %355 {offsets = [6, 0], sizes = [1, 5], strides = [1, 1]} : vector<8x5xf32> to vector<1x5xf32>
    %485 = arith.addf %483, %484 : vector<1x5xf32>
    %486 = vector.broadcast %485 : vector<1x5xf32> to vector<5x5xf32>
    %487 = arith.addf %356, %486 : vector<5x5xf32>
    %cst_146 = arith.constant dense<0xFF800000> : vector<5xf32>
    %488 = vector.multi_reduction <maximumf>, %487, %cst_146 [1] : vector<5x5xf32> to vector<5xf32>
    %489 = vector.shape_cast %488 : vector<5xf32> to vector<5x1xf32>
    %490 = vector.broadcast %489 : vector<5x1xf32> to vector<5x5xf32>
    %491 = arith.cmpf oeq, %487, %490 : vector<5x5xf32>
    %c5_i32_147 = arith.constant 5 : i32
    %492 = vector.broadcast %c5_i32_147 : i32 to vector<5x5xi32>
    %493 = arith.select %491, %358, %492 : vector<5x5xi1>, vector<5x5xi32>
    %cst_148 = arith.constant dense<2147483647> : vector<5xi32>
    %494 = vector.multi_reduction <minsi>, %493, %cst_148 [1] : vector<5x5xi32> to vector<5xi32>
    %495 = vector.shape_cast %494 : vector<5xi32> to vector<5x1xi32>
    %496 = arith.sitofp %495 : vector<5x1xi32> to vector<5x1xf32>
    %cst_149 = arith.constant 0.000000e+00 : f32
    %497 = vector.shape_cast %489 : vector<5x1xf32> to vector<5x1xf32>
    %498 = vector.broadcast %497 : vector<5x1xf32> to vector<5x5xf32>
    %499 = vector.broadcast %cst_149 : f32 to vector<5x5xf32>
    %500 = arith.select %360, %498, %499 : vector<5x5xi1>, vector<5x5xf32>
    %cst_150 = arith.constant dense<0.000000e+00> : vector<1x5xf32>
    %501 = tpu.matmul %361, %500, %cst_150 {dimension_numbers = #tpu.dot_dimension_numbers<[1], [0], [0], [1], [0, 0, 1, 1], [], []>} : vector<1x5xf32>, vector<5x5xf32>, vector<1x5xf32> -> vector<1x5xf32>
    %502 = vector.extract_strided_slice %355 {offsets = [7, 0], sizes = [1, 5], strides = [1, 1]} : vector<8x5xf32> to vector<1x5xf32>
    %503 = arith.addf %501, %502 : vector<1x5xf32>
    %504 = vector.extract_strided_slice %356 {offsets = [4, 0], sizes = [1, 5], strides = [1, 1]} : vector<5x5xf32> to vector<1x5xf32>
    %505 = arith.addf %503, %504 : vector<1x5xf32>
    %cst_151 = arith.constant dense<0xFF800000> : vector<1xf32>
    %506 = vector.multi_reduction <maximumf>, %505, %cst_151 [1] : vector<1x5xf32> to vector<1xf32>
    %507 = vector.shape_cast %506 : vector<1xf32> to vector<1x1xf32>
    %508 = vector.broadcast %507 : vector<1x1xf32> to vector<1x5xf32>
    %509 = arith.cmpf oeq, %505, %508 : vector<1x5xf32>
    %c5_i32_152 = arith.constant 5 : i32
    %510 = vector.broadcast %c5_i32_152 : i32 to vector<1x5xi32>
    %511 = arith.select %509, %357, %510 : vector<1x5xi1>, vector<1x5xi32>
    %cst_153 = arith.constant dense<2147483647> : vector<1xi32>
    %512 = vector.multi_reduction <minsi>, %511, %cst_153 [1] : vector<1x5xi32> to vector<1xi32>
    %513 = vector.shape_cast %512 : vector<1xi32> to vector<1x1xi32>
    %514 = tpu.iota {dimensions = array<i32: 1>} : vector<1x8xi32>
    %515 = tpu.iota {dimensions = array<i32: 0>} : vector<5x1xi32>
    %c7_i32_154 = arith.constant 7 : i32
    %516 = vector.broadcast %c7_i32_154 : i32 to vector<1x8xi32>
    %517 = arith.cmpi eq, %514, %516 : vector<1x8xi32>
    %c0_i32_155 = arith.constant 0 : i32
    %518 = vector.shape_cast %513 : vector<1x1xi32> to vector<1x1xi32>
    %519 = vector.broadcast %518 : vector<1x1xi32> to vector<1x8xi32>
    %520 = vector.broadcast %c0_i32_155 : i32 to vector<1x8xi32>
    %521 = arith.select %517, %519, %520 : vector<1x8xi1>, vector<1x8xi32>
    %522 = vector.broadcast %513 : vector<1x1xi32> to vector<5x1xi32>
    %523 = arith.cmpi eq, %515, %522 : vector<5x1xi32>
    %cst_156 = arith.constant 0.000000e+00 : f32
    %524 = vector.broadcast %cst_156 : f32 to vector<5x1xf32>
    %525 = arith.select %523, %496, %524 : vector<5x1xi1>, vector<5x1xf32>
    %cst_157 = arith.constant dense<0.000000e+00> : vector<1x1xf32>
    %526 = tpu.matmul %361, %525, %cst_157 {dimension_numbers = #tpu.dot_dimension_numbers<[1], [0], [0], [1], [0, 0, 1, 1], [], []>} : vector<1x5xf32>, vector<5x1xf32>, vector<1x1xf32> -> vector<1x1xf32>
    %cst_158 = arith.constant 5.000000e-01 : f32
    %527 = vector.broadcast %cst_158 : f32 to vector<1x1xf32>
    %528 = arith.addf %526, %527 : vector<1x1xf32>
    %529 = arith.fptosi %528 : vector<1x1xf32> to vector<1x1xi32>
    %c6_i32_159 = arith.constant 6 : i32
    %530 = vector.broadcast %c6_i32_159 : i32 to vector<1x8xi32>
    %531 = arith.cmpi eq, %514, %530 : vector<1x8xi32>
    %532 = vector.shape_cast %529 : vector<1x1xi32> to vector<1x1xi32>
    %533 = vector.broadcast %532 : vector<1x1xi32> to vector<1x8xi32>
    %534 = arith.select %531, %533, %521 : vector<1x8xi1>, vector<1x8xi32>
    %535 = vector.broadcast %529 : vector<1x1xi32> to vector<5x1xi32>
    %536 = arith.cmpi eq, %515, %535 : vector<5x1xi32>
    %cst_160 = arith.constant 0.000000e+00 : f32
    %537 = vector.broadcast %cst_160 : f32 to vector<5x1xf32>
    %538 = arith.select %536, %478, %537 : vector<5x1xi1>, vector<5x1xf32>
    %cst_161 = arith.constant dense<0.000000e+00> : vector<1x1xf32>
    %539 = tpu.matmul %361, %538, %cst_161 {dimension_numbers = #tpu.dot_dimension_numbers<[1], [0], [0], [1], [0, 0, 1, 1], [], []>} : vector<1x5xf32>, vector<5x1xf32>, vector<1x1xf32> -> vector<1x1xf32>
    %cst_162 = arith.constant 5.000000e-01 : f32
    %540 = vector.broadcast %cst_162 : f32 to vector<1x1xf32>
    %541 = arith.addf %539, %540 : vector<1x1xf32>
    %542 = arith.fptosi %541 : vector<1x1xf32> to vector<1x1xi32>
    %c5_i32_163 = arith.constant 5 : i32
    %543 = vector.broadcast %c5_i32_163 : i32 to vector<1x8xi32>
    %544 = arith.cmpi eq, %514, %543 : vector<1x8xi32>
    %545 = vector.shape_cast %542 : vector<1x1xi32> to vector<1x1xi32>
    %546 = vector.broadcast %545 : vector<1x1xi32> to vector<1x8xi32>
    %547 = arith.select %544, %546, %534 : vector<1x8xi1>, vector<1x8xi32>
    %548 = vector.broadcast %542 : vector<1x1xi32> to vector<5x1xi32>
    %549 = arith.cmpi eq, %515, %548 : vector<5x1xi32>
    %cst_164 = arith.constant 0.000000e+00 : f32
    %550 = vector.broadcast %cst_164 : f32 to vector<5x1xf32>
    %551 = arith.select %549, %460, %550 : vector<5x1xi1>, vector<5x1xf32>
    %cst_165 = arith.constant dense<0.000000e+00> : vector<1x1xf32>
    %552 = tpu.matmul %361, %551, %cst_165 {dimension_numbers = #tpu.dot_dimension_numbers<[1], [0], [0], [1], [0, 0, 1, 1], [], []>} : vector<1x5xf32>, vector<5x1xf32>, vector<1x1xf32> -> vector<1x1xf32>
    %cst_166 = arith.constant 5.000000e-01 : f32
    %553 = vector.broadcast %cst_166 : f32 to vector<1x1xf32>
    %554 = arith.addf %552, %553 : vector<1x1xf32>
    %555 = arith.fptosi %554 : vector<1x1xf32> to vector<1x1xi32>
    %c4_i32_167 = arith.constant 4 : i32
    %556 = vector.broadcast %c4_i32_167 : i32 to vector<1x8xi32>
    %557 = arith.cmpi eq, %514, %556 : vector<1x8xi32>
    %558 = vector.shape_cast %555 : vector<1x1xi32> to vector<1x1xi32>
    %559 = vector.broadcast %558 : vector<1x1xi32> to vector<1x8xi32>
    %560 = arith.select %557, %559, %547 : vector<1x8xi1>, vector<1x8xi32>
    %561 = vector.broadcast %555 : vector<1x1xi32> to vector<5x1xi32>
    %562 = arith.cmpi eq, %515, %561 : vector<5x1xi32>
    %cst_168 = arith.constant 0.000000e+00 : f32
    %563 = vector.broadcast %cst_168 : f32 to vector<5x1xf32>
    %564 = arith.select %562, %442, %563 : vector<5x1xi1>, vector<5x1xf32>
    %cst_169 = arith.constant dense<0.000000e+00> : vector<1x1xf32>
    %565 = tpu.matmul %361, %564, %cst_169 {dimension_numbers = #tpu.dot_dimension_numbers<[1], [0], [0], [1], [0, 0, 1, 1], [], []>} : vector<1x5xf32>, vector<5x1xf32>, vector<1x1xf32> -> vector<1x1xf32>
    %cst_170 = arith.constant 5.000000e-01 : f32
    %566 = vector.broadcast %cst_170 : f32 to vector<1x1xf32>
    %567 = arith.addf %565, %566 : vector<1x1xf32>
    %568 = arith.fptosi %567 : vector<1x1xf32> to vector<1x1xi32>
    %c3_i32_171 = arith.constant 3 : i32
    %569 = vector.broadcast %c3_i32_171 : i32 to vector<1x8xi32>
    %570 = arith.cmpi eq, %514, %569 : vector<1x8xi32>
    %571 = vector.shape_cast %568 : vector<1x1xi32> to vector<1x1xi32>
    %572 = vector.broadcast %571 : vector<1x1xi32> to vector<1x8xi32>
    %573 = arith.select %570, %572, %560 : vector<1x8xi1>, vector<1x8xi32>
    %574 = vector.broadcast %568 : vector<1x1xi32> to vector<5x1xi32>
    %575 = arith.cmpi eq, %515, %574 : vector<5x1xi32>
    %cst_172 = arith.constant 0.000000e+00 : f32
    %576 = vector.broadcast %cst_172 : f32 to vector<5x1xf32>
    %577 = arith.select %575, %424, %576 : vector<5x1xi1>, vector<5x1xf32>
    %cst_173 = arith.constant dense<0.000000e+00> : vector<1x1xf32>
    %578 = tpu.matmul %361, %577, %cst_173 {dimension_numbers = #tpu.dot_dimension_numbers<[1], [0], [0], [1], [0, 0, 1, 1], [], []>} : vector<1x5xf32>, vector<5x1xf32>, vector<1x1xf32> -> vector<1x1xf32>
    %cst_174 = arith.constant 5.000000e-01 : f32
    %579 = vector.broadcast %cst_174 : f32 to vector<1x1xf32>
    %580 = arith.addf %578, %579 : vector<1x1xf32>
    %581 = arith.fptosi %580 : vector<1x1xf32> to vector<1x1xi32>
    %c2_i32_175 = arith.constant 2 : i32
    %582 = vector.broadcast %c2_i32_175 : i32 to vector<1x8xi32>
    %583 = arith.cmpi eq, %514, %582 : vector<1x8xi32>
    %584 = vector.shape_cast %581 : vector<1x1xi32> to vector<1x1xi32>
    %585 = vector.broadcast %584 : vector<1x1xi32> to vector<1x8xi32>
    %586 = arith.select %583, %585, %573 : vector<1x8xi1>, vector<1x8xi32>
    %587 = vector.broadcast %581 : vector<1x1xi32> to vector<5x1xi32>
    %588 = arith.cmpi eq, %515, %587 : vector<5x1xi32>
    %cst_176 = arith.constant 0.000000e+00 : f32
    %589 = vector.broadcast %cst_176 : f32 to vector<5x1xf32>
    %590 = arith.select %588, %406, %589 : vector<5x1xi1>, vector<5x1xf32>
    %cst_177 = arith.constant dense<0.000000e+00> : vector<1x1xf32>
    %591 = tpu.matmul %361, %590, %cst_177 {dimension_numbers = #tpu.dot_dimension_numbers<[1], [0], [0], [1], [0, 0, 1, 1], [], []>} : vector<1x5xf32>, vector<5x1xf32>, vector<1x1xf32> -> vector<1x1xf32>
    %cst_178 = arith.constant 5.000000e-01 : f32
    %592 = vector.broadcast %cst_178 : f32 to vector<1x1xf32>
    %593 = arith.addf %591, %592 : vector<1x1xf32>
    %594 = arith.fptosi %593 : vector<1x1xf32> to vector<1x1xi32>
    %c1_i32_179 = arith.constant 1 : i32
    %595 = vector.broadcast %c1_i32_179 : i32 to vector<1x8xi32>
    %596 = arith.cmpi eq, %514, %595 : vector<1x8xi32>
    %597 = vector.shape_cast %594 : vector<1x1xi32> to vector<1x1xi32>
    %598 = vector.broadcast %597 : vector<1x1xi32> to vector<1x8xi32>
    %599 = arith.select %596, %598, %586 : vector<1x8xi1>, vector<1x8xi32>
    %600 = vector.broadcast %594 : vector<1x1xi32> to vector<5x1xi32>
    %601 = arith.cmpi eq, %515, %600 : vector<5x1xi32>
    %cst_180 = arith.constant 0.000000e+00 : f32
    %602 = vector.broadcast %cst_180 : f32 to vector<5x1xf32>
    %603 = arith.select %601, %388, %602 : vector<5x1xi1>, vector<5x1xf32>
    %cst_181 = arith.constant dense<0.000000e+00> : vector<1x1xf32>
    %604 = tpu.matmul %361, %603, %cst_181 {dimension_numbers = #tpu.dot_dimension_numbers<[1], [0], [0], [1], [0, 0, 1, 1], [], []>} : vector<1x5xf32>, vector<5x1xf32>, vector<1x1xf32> -> vector<1x1xf32>
    %cst_182 = arith.constant 5.000000e-01 : f32
    %605 = vector.broadcast %cst_182 : f32 to vector<1x1xf32>
    %606 = arith.addf %604, %605 : vector<1x1xf32>
    %607 = arith.fptosi %606 : vector<1x1xf32> to vector<1x1xi32>
    %c0_i32_183 = arith.constant 0 : i32
    %608 = vector.broadcast %c0_i32_183 : i32 to vector<1x8xi32>
    %609 = arith.cmpi eq, %514, %608 : vector<1x8xi32>
    %610 = vector.shape_cast %607 : vector<1x1xi32> to vector<1x1xi32>
    %611 = vector.broadcast %610 : vector<1x1xi32> to vector<1x8xi32>
    %612 = arith.select %609, %611, %599 : vector<1x8xi1>, vector<1x8xi32>
    %c0_184 = arith.constant 0 : index
    %c0_185 = arith.constant 0 : index
    %613 = vector.load %arg10[%c0_184, %c0_185] : memref<1x1xf32, #tpu.memory_space<vmem>>, vector<1x1xf32>
    tpu.vector_store %arg10[%c0_184, %c0_185], %507 {strides = array<i32>} : memref<1x1xf32, #tpu.memory_space<vmem>>, vector<1x1xf32>,
    %c0_186 = arith.constant 0 : index
    %c0_187 = arith.constant 0 : index
    %614 = vector.load %arg11[%c0_186, %c0_187] : memref<1x8xi32, #tpu.memory_space<vmem>>, vector<1x8xi32>
    tpu.vector_store %arg11[%c0_186, %c0_187], %612 {strides = array<i32>} : memref<1x8xi32, #tpu.memory_space<vmem>>, vector<1x8xi32>,
    return
  }
}

</mosaic_0001>

<llo_original>
// kernel: tpu_custom_call.1
$region0: #{tpu_custom_call.1}
  #allocation0 [shape = 'u32[]', space=smem, size = 0x4, offset = 0x4, fixed_abs, tag = 'smem constant byte address 0x4 - core index']
  #allocation1 [shape = 'u32[144,128]{1,0:T(1,128)}', space=vmem, size = 0x12000, scoped, tag = 'internal scratch']
  %s0 = inlined_call_operand.vmem [shape: s32[8,2], index: 0, kind: input, shape index: {}]
  %s1 = inlined_call_operand.vmem [shape: f32[32,16], index: 1, kind: input, shape index: {}]
  %s2 = inlined_call_operand.vmem [shape: f32[16,128], index: 2, kind: input, shape index: {}]
  %s3 = inlined_call_operand.vmem [shape: f32[16,128], index: 3, kind: input, shape index: {}]
  %s4 = inlined_call_operand.vmem [shape: f32[32,128], index: 4, kind: input, shape index: {}]
  %s5 = inlined_call_operand.vmem [shape: f32[1,128], index: 5, kind: input, shape index: {}]
  %s6 = inlined_call_operand.vmem [shape: f32[32,5], index: 6, kind: input, shape index: {}]
  %s7 = inlined_call_operand.vmem [shape: f32[32,5], index: 7, kind: input, shape index: {}]
  %s8 = inlined_call_operand.vmem [shape: f32[1,5], index: 8, kind: input, shape index: {}]
  %s9 = inlined_call_operand.vmem [shape: f32[5,5], index: 9, kind: input, shape index: {}]
  %s10 = inlined_call_operand.hbm [shape: f32[1,1], index: 10, kind: output, shape index: {0}]
  %s11 = inlined_call_operand.hbm [shape: s32[1,8], index: 11, kind: output, shape index: {1}]
  %12 = xla_tuple %s10, %s11
  %s13 = sld [smem:[#allocation0]]
  $region58: #{tpu_custom_call.1} parent=0
    _
  %s15 = ssub.s32 1, %s13
  %s16 = scalar_select 0, %s15, %s13
  $region1: #{tpu_custom_call.1} parent=0
    #allocation2 [shape = 'u8[512]{0}', space=vmem, size = 0x400, scoped, tag = 'output window, operand 0, single buffered']
    #allocation3 [shape = 's32[1]{0}', space=sflag, size = 0x4, scoped, tag = 'scoped memory for tpu_custom_call.1']
    #allocation4 [shape = 'u8[512]{0}', space=vmem, size = 0x400, scoped, tag = 'output window, operand 1, single buffered']
    #allocation5 [shape = 's32[1]{0}', space=sflag, size = 0x4, scoped, tag = 'scoped memory for tpu_custom_call.1']
    %17 = vsyncpa [#allocation3], 0
    %18 = vsyncpa [#allocation5], 0
    // Predicated region
    $region2: #{tpu_custom_call.1} parent=1 // pred_check
      _
    $region3: #{tpu_custom_call.1} parent=1 // pred_check_branch
      %20 = sbr.rel (0) target = $region5
    $region4: #{tpu_custom_call.1} parent=1 // pred_region
      _
    $region5: #{tpu_custom_call.1} parent=1 // pred_fallthru
      _
    // Predicated region
    $region6: #{tpu_custom_call.1} parent=1 // pred_check
      _
    $region7: #{tpu_custom_call.1} parent=1 // pred_check_branch
      %22 = sbr.rel (0) target = $region9
    $region8: #{tpu_custom_call.1} parent=1 // pred_region
      _
    $region9: #{tpu_custom_call.1} parent=1 // pred_fallthru
      _
    // Predicated region
    $region10: #{tpu_custom_call.1} parent=1 // pred_check
      _
    $region11: #{tpu_custom_call.1} parent=1 // pred_check_branch
      %24 = sbr.rel (0) target = $region13
    $region12: #{tpu_custom_call.1} parent=1 // pred_region
      _
    $region13: #{tpu_custom_call.1} parent=1 // pred_fallthru
      _
    // Predicated region
    $region14: #{tpu_custom_call.1} parent=1 // pred_check
      _
    $region15: #{tpu_custom_call.1} parent=1 // pred_check_branch
      %26 = sbr.rel (0) target = $region17
    $region16: #{tpu_custom_call.1} parent=1 // pred_region
      _
    $region17: #{tpu_custom_call.1} parent=1 // pred_fallthru
      _
    // Predicated region
    $region18: #{tpu_custom_call.1} parent=1 // pred_check
      _
    $region19: #{tpu_custom_call.1} parent=1 // pred_check_branch
      %28 = sbr.rel (0) target = $region21
    $region20: #{tpu_custom_call.1} parent=1 // pred_region
      _
    $region21: #{tpu_custom_call.1} parent=1 // pred_fallthru
      _
    // Predicated region
    $region22: #{tpu_custom_call.1} parent=1 // pred_check
      _
    $region23: #{tpu_custom_call.1} parent=1 // pred_check_branch
      %30 = sbr.rel (0) target = $region25
    $region24: #{tpu_custom_call.1} parent=1 // pred_region
      _
    $region25: #{tpu_custom_call.1} parent=1 // pred_fallthru
      _
    // Predicated region
    $region26: #{tpu_custom_call.1} parent=1 // pred_check
      _
    $region27: #{tpu_custom_call.1} parent=1 // pred_check_branch
      %32 = sbr.rel (0) target = $region29
    $region28: #{tpu_custom_call.1} parent=1 // pred_region
      _
    $region29: #{tpu_custom_call.1} parent=1 // pred_fallthru
      _
    // Predicated region
    $region30: #{tpu_custom_call.1} parent=1 // pred_check
      _
    $region31: #{tpu_custom_call.1} parent=1 // pred_check_branch
      %34 = sbr.rel (0) target = $region33
    $region32: #{tpu_custom_call.1} parent=1 // pred_region
      _
    $region33: #{tpu_custom_call.1} parent=1 // pred_fallthru
      _
    // Predicated region
    $region34: #{tpu_custom_call.1} parent=1 // pred_check
      _
    $region35: #{tpu_custom_call.1} parent=1 // pred_check_branch
      %36 = sbr.rel (0) target = $region37
    $region36: #{tpu_custom_call.1} parent=1 // pred_region
      _
    $region37: #{tpu_custom_call.1} parent=1 // pred_fallthru
      _
    // Predicated region
    $region38: #{tpu_custom_call.1} parent=1 // pred_check
      _
    $region39: #{tpu_custom_call.1} parent=1 // pred_check_branch
      %38 = sbr.rel (0) target = $region41
    $region40: #{tpu_custom_call.1} parent=1 // pred_region
      _
    $region41: #{tpu_custom_call.1} parent=1 // pred_fallthru
      _
    %v39 = vld [vmem:[%s0] sm:$0xff]
    %v40 = vld [vmem:[%s1] sm:$0xff]
    %v41 = vld [vmem:[%s1 + $0x8] sm:$0xff]
    %v42 = vld [vmem:[%s1 + $0x10] sm:$0xff]
    %v43 = vld [vmem:[%s1 + $0x18] sm:$0xff]
    %v44 = vlaneseq
    %v45 = vand.u32 %v44, 127
    %46 = vset.pattern.permute.xlu0 0
    %47 = vperm.xlu0 %46, %v39
    %v48 = vpop.permute.xlu0 %47
    %vm49 = vcmp.eq.s32.totalorder %v45, %v48
    %v50 = vsel %vm49, 1, 0
    %v51 = vcvt.s32.f32 %v50
    %52 = vset.pattern.permute.xlu0 1
    %53 = vperm.xlu0 %52, %v39
    %v54 = vpop.permute.xlu0 %53
    %vm55 = vcmp.eq.s32.totalorder %v45, %v54
    %v56 = vsel %vm55, 1, 0
    %v57 = vcvt.s32.f32 %v56
    %vm58 = vcmask 261120
    %v60 = vsel %vm58, %v51, 0
    %62 = vmatprep.subr.mxu0 0.0
    %63 = vmatpush1.msra.mxu0 %v40
    %64 = vmatprep.subr.mxu0 0.0
    %65 = vmatpush1.msra.mxu0 %v41
    %66 = vmatprep.subr.mxu0 0.0
    %67 = vmatpush1.msra.mxu0 %v42
    %68 = vmatprep.subr.mxu0 0.0
    %69 = vmatpush1.msra.mxu0 %v43
    %70 = vmatprep.subr.mxu0 0.0
    %71 = vmatpush1.msra.mxu0 0.0
    %72 = vmatprep.subr.mxu0 0.0
    %73 = vmatpush1.msra.mxu0 0.0
    %74 = vmatprep.subr.mxu0 0.0
    %75 = vmatpush1.msra.mxu0 0.0
    %76 = vmatprep.subr.mxu0 0.0
    %77 = vmatpush1.msra.mxu0 0.0
    %78 = vmatprep.subr.mxu0 0.0
    %79 = vmatpush1.msra.mxu0 0.0
    %80 = vmatprep.subr.mxu0 0.0
    %81 = vmatpush1.msra.mxu0 0.0
    %82 = vmatprep.subr.mxu0 0.0
    %83 = vmatpush1.msra.mxu0 0.0
    %84 = vmatprep.subr.mxu0 0.0
    %85 = vmatpush1.msra.mxu0 0.0
    %86 = vmatprep.subr.mxu0 0.0
    %87 = vmatpush1.msra.mxu0 0.0
    %88 = vmatprep.subr.mxu0 0.0
    %89 = vmatpush1.msra.mxu0 0.0
    %90 = vmatprep.subr.mxu0 0.0
    %91 = vmatpush1.msra.mxu0 0.0
    %92 = vmatprep.subr.mxu0 0.0
    %93 = vmatpush1.msra.mxu0 0.0
    %94 = vmatprep.subr.mxu0 0.0
    %95 = vmatpush1.msra.mxu0 0.0
    %96 = vmatprep.subr.mxu0 0.0
    %97 = vmatpush1.msra.mxu0 0.0
    %98 = vmatprep.subr.mxu0 0.0
    %99 = vmatpush1.msra.mxu0 0.0
    %100 = vmatprep.subr.mxu0 0.0
    %101 = vmatpush1.msra.mxu0 0.0
    %102 = vmatprep.subr.mxu0 0.0
    %103 = vmatpush1.msra.mxu0 0.0
    %104 = vmatprep.subr.mxu0 0.0
    %105 = vmatpush1.msra.mxu0 0.0
    %106 = vmatprep.subr.mxu0 0.0
    %107 = vmatpush1.msra.mxu0 0.0
    %108 = vmatprep.subr.mxu0 0.0
    %109 = vmatpush1.msra.mxu0 0.0
    %110 = vmatprep.subr.mxu0 0.0
    %111 = vmatpush1.msra.mxu0 0.0
    %112 = vmatprep.subr.mxu0 0.0
    %113 = vmatpush1.msra.mxu0 0.0
    %114 = vmatprep.subr.mxu0 0.0
    %115 = vmatpush1.msra.mxu0 0.0
    %116 = vmatprep.subr.mxu0 0.0
    %117 = vmatpush1.msra.mxu0 0.0
    %118 = vmatprep.subr.mxu0 0.0
    %119 = vmatpush1.msra.mxu0 0.0
    %120 = vmatprep.subr.mxu0 0.0
    %121 = vmatpush1.msra.mxu0 0.0
    %122 = vmatprep.subr.mxu0 0.0
    %123 = vmatpush1.msra.mxu0 0.0
    %124 = vmatprep.subr.mxu0 0.0
    %125 = vmatpush1.msra.mxu0 0.0
    %126 = vmatprep.mubr.f32.mxu0 0.0
    %127 = vmatmul.mubr.f32.gmra.mrb[0].mxu0 %v60
    %v128 = vpop.f32.mrb[0].mxu0
    %v129 = vadd.f32 0.0, %v128
    %v130 = vpop.f32.mrb[0].mxu0
    %131 = vdwg.mxu0
    %v133 = vsel %vm58, %v57, 0
    %135 = vmatprep.subr.mxu0 0.0
    %136 = vmatpush1.msra.mxu0 %v40
    %137 = vmatprep.subr.mxu0 0.0
    %138 = vmatpush1.msra.mxu0 %v41
    %139 = vmatprep.subr.mxu0 0.0
    %140 = vmatpush1.msra.mxu0 %v42
    %141 = vmatprep.subr.mxu0 0.0
    %142 = vmatpush1.msra.mxu0 %v43
    %143 = vmatprep.subr.mxu0 0.0
    %144 = vmatpush1.msra.mxu0 0.0
    %145 = vmatprep.subr.mxu0 0.0
    %146 = vmatpush1.msra.mxu0 0.0
    %147 = vmatprep.subr.mxu0 0.0
    %148 = vmatpush1.msra.mxu0 0.0
    %149 = vmatprep.subr.mxu0 0.0
    %150 = vmatpush1.msra.mxu0 0.0
    %151 = vmatprep.subr.mxu0 0.0
    %152 = vmatpush1.msra.mxu0 0.0
    %153 = vmatprep.subr.mxu0 0.0
    %154 = vmatpush1.msra.mxu0 0.0
    %155 = vmatprep.subr.mxu0 0.0
    %156 = vmatpush1.msra.mxu0 0.0
    %157 = vmatprep.subr.mxu0 0.0
    %158 = vmatpush1.msra.mxu0 0.0
    %159 = vmatprep.subr.mxu0 0.0
    %160 = vmatpush1.msra.mxu0 0.0
    %161 = vmatprep.subr.mxu0 0.0
    %162 = vmatpush1.msra.mxu0 0.0
    %163 = vmatprep.subr.mxu0 0.0
    %164 = vmatpush1.msra.mxu0 0.0
    %165 = vmatprep.subr.mxu0 0.0
    %166 = vmatpush1.msra.mxu0 0.0
    %167 = vmatprep.subr.mxu0 0.0
    %168 = vmatpush1.msra.mxu0 0.0
    %169 = vmatprep.subr.mxu0 0.0
    %170 = vmatpush1.msra.mxu0 0.0
    %171 = vmatprep.subr.mxu0 0.0
    %172 = vmatpush1.msra.mxu0 0.0
    %173 = vmatprep.subr.mxu0 0.0
    %174 = vmatpush1.msra.mxu0 0.0
    %175 = vmatprep.subr.mxu0 0.0
    %176 = vmatpush1.msra.mxu0 0.0
    %177 = vmatprep.subr.mxu0 0.0
    %178 = vmatpush1.msra.mxu0 0.0
    %179 = vmatprep.subr.mxu0 0.0
    %180 = vmatpush1.msra.mxu0 0.0
    %181 = vmatprep.subr.mxu0 0.0
    %182 = vmatpush1.msra.mxu0 0.0
    %183 = vmatprep.subr.mxu0 0.0
    %184 = vmatpush1.msra.mxu0 0.0
    %185 = vmatprep.subr.mxu0 0.0
    %186 = vmatpush1.msra.mxu0 0.0
    %187 = vmatprep.subr.mxu0 0.0
    %188 = vmatpush1.msra.mxu0 0.0
    %189 = vmatprep.subr.mxu0 0.0
    %190 = vmatpush1.msra.mxu0 0.0
    %191 = vmatprep.subr.mxu0 0.0
    %192 = vmatpush1.msra.mxu0 0.0
    %193 = vmatprep.subr.mxu0 0.0
    %194 = vmatpush1.msra.mxu0 0.0
    %195 = vmatprep.subr.mxu0 0.0
    %196 = vmatpush1.msra.mxu0 0.0
    %197 = vmatprep.subr.mxu0 0.0
    %198 = vmatpush1.msra.mxu0 0.0
    %199 = vmatprep.mubr.f32.mxu0 0.0
    %200 = vmatmul.mubr.f32.gmra.mrb[0].mxu0 %v133
    %v201 = vpop.f32.mrb[0].mxu0
    %v202 = vadd.f32 0.0, %v201
    %v203 = vpop.f32.mrb[0].mxu0
    %204 = vdwg.mxu0
    %v205 = vld [vmem:[%s2] sm:$0xff]
    %v206 = vld [vmem:[%s2 + $0x8] sm:$0xff]
    %v207 = vld [vmem:[%s3] sm:$0xff]
    %v208 = vld [vmem:[%s3 + $0x8] sm:$0xff]
    %vm209 = vcmask 130048
    %v211 = vsel %vm209, %v202, 0
    %213 = vmatprep.subr.mxu0 0.0
    %214 = vmatpush1.msra.mxu0 %v207
    %215 = vmatprep.subr.mxu0 0.0
    %216 = vmatpush1.msra.mxu0 %v208
    %217 = vmatprep.subr.mxu0 0.0
    %218 = vmatpush1.msra.mxu0 0.0
    %219 = vmatprep.subr.mxu0 0.0
    %220 = vmatpush1.msra.mxu0 0.0
    %221 = vmatprep.subr.mxu0 0.0
    %222 = vmatpush1.msra.mxu0 0.0
    %223 = vmatprep.subr.mxu0 0.0
    %224 = vmatpush1.msra.mxu0 0.0
    %225 = vmatprep.subr.mxu0 0.0
    %226 = vmatpush1.msra.mxu0 0.0
    %227 = vmatprep.subr.mxu0 0.0
    %228 = vmatpush1.msra.mxu0 0.0
    %229 = vmatprep.subr.mxu0 0.0
    %230 = vmatpush1.msra.mxu0 0.0
    %231 = vmatprep.subr.mxu0 0.0
    %232 = vmatpush1.msra.mxu0 0.0
    %233 = vmatprep.subr.mxu0 0.0
    %234 = vmatpush1.msra.mxu0 0.0
    %235 = vmatprep.subr.mxu0 0.0
    %236 = vmatpush1.msra.mxu0 0.0
    %237 = vmatprep.subr.mxu0 0.0
    %238 = vmatpush1.msra.mxu0 0.0
    %239 = vmatprep.subr.mxu0 0.0
    %240 = vmatpush1.msra.mxu0 0.0
    %241 = vmatprep.subr.mxu0 0.0
    %242 = vmatpush1.msra.mxu0 0.0
    %243 = vmatprep.subr.mxu0 0.0
    %244 = vmatpush1.msra.mxu0 0.0
    %245 = vmatprep.subr.mxu0 0.0
    %246 = vmatpush1.msra.mxu0 0.0
    %247 = vmatprep.subr.mxu0 0.0
    %248 = vmatpush1.msra.mxu0 0.0
    %249 = vmatprep.subr.mxu0 0.0
    %250 = vmatpush1.msra.mxu0 0.0
    %251 = vmatprep.subr.mxu0 0.0
    %252 = vmatpush1.msra.mxu0 0.0
    %253 = vmatprep.subr.mxu0 0.0
    %254 = vmatpush1.msra.mxu0 0.0
    %255 = vmatprep.subr.mxu0 0.0
    %256 = vmatpush1.msra.mxu0 0.0
    %257 = vmatprep.subr.mxu0 0.0
    %258 = vmatpush1.msra.mxu0 0.0
    %259 = vmatprep.subr.mxu0 0.0
    %260 = vmatpush1.msra.mxu0 0.0
    %261 = vmatprep.subr.mxu0 0.0
    %262 = vmatpush1.msra.mxu0 0.0
    %263 = vmatprep.subr.mxu0 0.0
    %264 = vmatpush1.msra.mxu0 0.0
    %265 = vmatprep.subr.mxu0 0.0
    %266 = vmatpush1.msra.mxu0 0.0
    %267 = vmatprep.subr.mxu0 0.0
    %268 = vmatpush1.msra.mxu0 0.0
    %269 = vmatprep.subr.mxu0 0.0
    %270 = vmatpush1.msra.mxu0 0.0
    %271 = vmatprep.subr.mxu0 0.0
    %272 = vmatpush1.msra.mxu0 0.0
    %273 = vmatprep.subr.mxu0 0.0
    %274 = vmatpush1.msra.mxu0 0.0
    %275 = vmatprep.subr.mxu0 0.0
    %276 = vmatpush1.msra.mxu0 0.0
    %277 = vmatprep.mubr.f32.mxu0 0.0
    %278 = vmatmul.mubr.f32.gmra.mrb[0].mxu0 %v211
    %v279 = vpop.f32.mrb[0].mxu0
    %v280 = vadd.f32 0.0, %v279
    %v281 = vpop.f32.mrb[0].mxu0
    %282 = vdwg.mxu0
    %v284 = vsel %vm209, %v129, 0
    %286 = vmatprep.subr.mxu0 0.0
    %287 = vmatpush1.msra.mxu0 %v205
    %288 = vmatprep.subr.mxu0 0.0
    %289 = vmatpush1.msra.mxu0 %v206
    %290 = vmatprep.subr.mxu0 0.0
    %291 = vmatpush1.msra.mxu0 0.0
    %292 = vmatprep.subr.mxu0 0.0
    %293 = vmatpush1.msra.mxu0 0.0
    %294 = vmatprep.subr.mxu0 0.0
    %295 = vmatpush1.msra.mxu0 0.0
    %296 = vmatprep.subr.mxu0 0.0
    %297 = vmatpush1.msra.mxu0 0.0
    %298 = vmatprep.subr.mxu0 0.0
    %299 = vmatpush1.msra.mxu0 0.0
    %300 = vmatprep.subr.mxu0 0.0
    %301 = vmatpush1.msra.mxu0 0.0
    %302 = vmatprep.subr.mxu0 0.0
    %303 = vmatpush1.msra.mxu0 0.0
    %304 = vmatprep.subr.mxu0 0.0
    %305 = vmatpush1.msra.mxu0 0.0
    %306 = vmatprep.subr.mxu0 0.0
    %307 = vmatpush1.msra.mxu0 0.0
    %308 = vmatprep.subr.mxu0 0.0
    %309 = vmatpush1.msra.mxu0 0.0
    %310 = vmatprep.subr.mxu0 0.0
    %311 = vmatpush1.msra.mxu0 0.0
    %312 = vmatprep.subr.mxu0 0.0
    %313 = vmatpush1.msra.mxu0 0.0
    %314 = vmatprep.subr.mxu0 0.0
    %315 = vmatpush1.msra.mxu0 0.0
    %316 = vmatprep.subr.mxu0 0.0
    %317 = vmatpush1.msra.mxu0 0.0
    %318 = vmatprep.subr.mxu0 0.0
    %319 = vmatpush1.msra.mxu0 0.0
    %320 = vmatprep.subr.mxu0 0.0
    %321 = vmatpush1.msra.mxu0 0.0
    %322 = vmatprep.subr.mxu0 0.0
    %323 = vmatpush1.msra.mxu0 0.0
    %324 = vmatprep.subr.mxu0 0.0
    %325 = vmatpush1.msra.mxu0 0.0
    %326 = vmatprep.subr.mxu0 0.0
    %327 = vmatpush1.msra.mxu0 0.0
    %328 = vmatprep.subr.mxu0 0.0
    %329 = vmatpush1.msra.mxu0 0.0
    %330 = vmatprep.subr.mxu0 0.0
    %331 = vmatpush1.msra.mxu0 0.0
    %332 = vmatprep.subr.mxu0 0.0
    %333 = vmatpush1.msra.mxu0 0.0
    %334 = vmatprep.subr.mxu0 0.0
    %335 = vmatpush1.msra.mxu0 0.0
    %336 = vmatprep.subr.mxu0 0.0
    %337 = vmatpush1.msra.mxu0 0.0
    %338 = vmatprep.subr.mxu0 0.0
    %339 = vmatpush1.msra.mxu0 0.0
    %340 = vmatprep.subr.mxu0 0.0
    %341 = vmatpush1.msra.mxu0 0.0
    %342 = vmatprep.subr.mxu0 0.0
    %343 = vmatpush1.msra.mxu0 0.0
    %344 = vmatprep.subr.mxu0 0.0
    %345 = vmatpush1.msra.mxu0 0.0
    %346 = vmatprep.subr.mxu0 0.0
    %347 = vmatpush1.msra.mxu0 0.0
    %348 = vmatprep.subr.mxu0 0.0
    %349 = vmatpush1.msra.mxu0 0.0
    %350 = vmatprep.mubr.f32.mxu0 0.0
    %351 = vmatmul.mubr.f32.gmra.mrb[0].mxu0 %v284
    %v352 = vpop.f32.mrb[0].mxu0
    %v353 = vadd.f32 %v280, %v352
    %v354 = vpop.f32.mrb[0].mxu0
    %355 = vdwg.mxu0
    %v356 = vld [vmem:[%s5] sm:$0x1]
    %v358 = vlaneseq
    %v359 = vshrl.u32 %v358, 7
    %v360 = vsub.s32 0, %v359
    %v361 = vrot.slane %v356, %v360
    %v363 = vadd.f32 %v353, %v361
    %v364 = vld [vmem:[%s4] sm:$0xff]
    %v365 = vld [vmem:[%s4 + $0x8] sm:$0xff]
    %v366 = vld [vmem:[%s4 + $0x10] sm:$0xff]
    %v367 = vld [vmem:[%s4 + $0x18] sm:$0xff]
    %v368 = vlaneseq
    %v369 = vshrl.u32 %v368, 7
    %v371 = vsel %vm58, 0.0, 0
    %373 = vmatprep.subr.mxu0 0.0
    %374 = vmatpush1.msra.mxu0 %v364
    %375 = vmatprep.subr.mxu0 0.0
    %376 = vmatpush1.msra.mxu0 %v365
    %377 = vmatprep.subr.mxu0 0.0
    %378 = vmatpush1.msra.mxu0 %v366
    %379 = vmatprep.subr.mxu0 0.0
    %380 = vmatpush1.msra.mxu0 %v367
    %381 = vmatprep.subr.mxu0 0.0
    %382 = vmatpush1.msra.mxu0 0.0
    %383 = vmatprep.subr.mxu0 0.0
    %384 = vmatpush1.msra.mxu0 0.0
    %385 = vmatprep.subr.mxu0 0.0
    %386 = vmatpush1.msra.mxu0 0.0
    %387 = vmatprep.subr.mxu0 0.0
    %388 = vmatpush1.msra.mxu0 0.0
    %389 = vmatprep.subr.mxu0 0.0
    %390 = vmatpush1.msra.mxu0 0.0
    %391 = vmatprep.subr.mxu0 0.0
    %392 = vmatpush1.msra.mxu0 0.0
    %393 = vmatprep.subr.mxu0 0.0
    %394 = vmatpush1.msra.mxu0 0.0
    %395 = vmatprep.subr.mxu0 0.0
    %396 = vmatpush1.msra.mxu0 0.0
    %397 = vmatprep.subr.mxu0 0.0
    %398 = vmatpush1.msra.mxu0 0.0
    %399 = vmatprep.subr.mxu0 0.0
    %400 = vmatpush1.msra.mxu0 0.0
    %401 = vmatprep.subr.mxu0 0.0
    %402 = vmatpush1.msra.mxu0 0.0
    %403 = vmatprep.subr.mxu0 0.0
    %404 = vmatpush1.msra.mxu0 0.0
    %405 = vmatprep.subr.mxu0 0.0
    %406 = vmatpush1.msra.mxu0 0.0
    %407 = vmatprep.subr.mxu0 0.0
    %408 = vmatpush1.msra.mxu0 0.0
    %409 = vmatprep.subr.mxu0 0.0
    %410 = vmatpush1.msra.mxu0 0.0
    %411 = vmatprep.subr.mxu0 0.0
    %412 = vmatpush1.msra.mxu0 0.0
    %413 = vmatprep.subr.mxu0 0.0
    %414 = vmatpush1.msra.mxu0 0.0
    %415 = vmatprep.subr.mxu0 0.0
    %416 = vmatpush1.msra.mxu0 0.0
    %417 = vmatprep.subr.mxu0 0.0
    %418 = vmatpush1.msra.mxu0 0.0
    %419 = vmatprep.subr.mxu0 0.0
    %420 = vmatpush1.msra.mxu0 0.0
    %421 = vmatprep.subr.mxu0 0.0
    %422 = vmatpush1.msra.mxu0 0.0
    %423 = vmatprep.subr.mxu0 0.0
    %424 = vmatpush1.msra.mxu0 0.0
    %425 = vmatprep.subr.mxu0 0.0
    %426 = vmatpush1.msra.mxu0 0.0
    %427 = vmatprep.subr.mxu0 0.0
    %428 = vmatpush1.msra.mxu0 0.0
    %429 = vmatprep.subr.mxu0 0.0
    %430 = vmatpush1.msra.mxu0 0.0
    %431 = vmatprep.subr.mxu0 0.0
    %432 = vmatpush1.msra.mxu0 0.0
    %433 = vmatprep.subr.mxu0 0.0
    %434 = vmatpush1.msra.mxu0 0.0
    %435 = vmatprep.subr.mxu0 0.0
    %436 = vmatpush1.msra.mxu0 0.0
    %437 = vmatprep.mubr.f32.mxu0 0.0
    %438 = vmatmul.mubr.f32.gmra.mrb[0].mxu0 %v371
    %v439 = vpop.f32.mrb[0].mxu0
    %v440 = vadd.f32 0.0, %v439
    %v441 = vpop.f32.mrb[0].mxu0
    %442 = vdwg.mxu0
    %v443 = vadd.f32 %v363, %v440
    %v444 = vsub.f32 0.0, %v443
    %v445 = vmul.f32 %v444, 1.442695
    %v446 = vpow.pop %v445
    %v447 = vadd.f32 %v446, 1.0
    %v448 = vrcp.pop %v447
    %v449 = vmul.f32 1.0, %v448
    %v450 = vtanh.pop %v443
    %v451 = vmul.f32 %v449, 0.0
    %453 = vrot.lane.b32.xlu0 %v450, 64
    %v454 = vpop.permute.xlu0 %453
    %v456 = vmul.f32 %v449, %v454
    %458 = vrot.lane.b32.xlu0 %v456, 32
    %v459 = vpop.permute.xlu0 %458
    %v461 = vadd.f32 %v451, %v459
    %v462 = vtanh.pop %v461
    %464 = vrot.lane.b32.xlu0 %v462, 64
    %v465 = vpop.permute.xlu0 %464
    %v467 = vmul.f32 %v449, %v465
    %vm468 = vcmp.eq.s32.totalorder %v369, 0
    %v469 = vlaneseq
    %v470 = vshrl.u32 %v469, 7
    %v471 = vsub.s32 0, %v470
    %v472 = vrot.slane %v467, %v471
    %v473 = vsel %vm468, %v472, 0.0
    %475 = vrot.lane.b32.xlu0 %v467, 32
    %v476 = vpop.permute.xlu0 %475
    %v477 = vsel %vm58, %v476, 0
    %479 = vmatprep.subr.mxu0 0.0
    %480 = vmatpush1.msra.mxu0 %v364
    %481 = vmatprep.subr.mxu0 0.0
    %482 = vmatpush1.msra.mxu0 %v365
    %483 = vmatprep.subr.mxu0 0.0
    %484 = vmatpush1.msra.mxu0 %v366
    %485 = vmatprep.subr.mxu0 0.0
    %486 = vmatpush1.msra.mxu0 %v367
    %487 = vmatprep.subr.mxu0 0.0
    %488 = vmatpush1.msra.mxu0 0.0
    %489 = vmatprep.subr.mxu0 0.0
    %490 = vmatpush1.msra.mxu0 0.0
    %491 = vmatprep.subr.mxu0 0.0
    %492 = vmatpush1.msra.mxu0 0.0
    %493 = vmatprep.subr.mxu0 0.0
    %494 = vmatpush1.msra.mxu0 0.0
    %495 = vmatprep.subr.mxu0 0.0
    %496 = vmatpush1.msra.mxu0 0.0
    %497 = vmatprep.subr.mxu0 0.0
    %498 = vmatpush1.msra.mxu0 0.0
    %499 = vmatprep.subr.mxu0 0.0
    %500 = vmatpush1.msra.mxu0 0.0
    %501 = vmatprep.subr.mxu0 0.0
    %502 = vmatpush1.msra.mxu0 0.0
    %503 = vmatprep.subr.mxu0 0.0
    %504 = vmatpush1.msra.mxu0 0.0
    %505 = vmatprep.subr.mxu0 0.0
    %506 = vmatpush1.msra.mxu0 0.0
    %507 = vmatprep.subr.mxu0 0.0
    %508 = vmatpush1.msra.mxu0 0.0
    %509 = vmatprep.subr.mxu0 0.0
    %510 = vmatpush1.msra.mxu0 0.0
    %511 = vmatprep.subr.mxu0 0.0
    %512 = vmatpush1.msra.mxu0 0.0
    %513 = vmatprep.subr.mxu0 0.0
    %514 = vmatpush1.msra.mxu0 0.0
    %515 = vmatprep.subr.mxu0 0.0
    %516 = vmatpush1.msra.mxu0 0.0
    %517 = vmatprep.subr.mxu0 0.0
    %518 = vmatpush1.msra.mxu0 0.0
    %519 = vmatprep.subr.mxu0 0.0
    %520 = vmatpush1.msra.mxu0 0.0
    %521 = vmatprep.subr.mxu0 0.0
    %522 = vmatpush1.msra.mxu0 0.0
    %523 = vmatprep.subr.mxu0 0.0
    %524 = vmatpush1.msra.mxu0 0.0
    %525 = vmatprep.subr.mxu0 0.0
    %526 = vmatpush1.msra.mxu0 0.0
    %527 = vmatprep.subr.mxu0 0.0
    %528 = vmatpush1.msra.mxu0 0.0
    %529 = vmatprep.subr.mxu0 0.0
    %530 = vmatpush1.msra.mxu0 0.0
    %531 = vmatprep.subr.mxu0 0.0
    %532 = vmatpush1.msra.mxu0 0.0
    %533 = vmatprep.subr.mxu0 0.0
    %534 = vmatpush1.msra.mxu0 0.0
    %535 = vmatprep.subr.mxu0 0.0
    %536 = vmatpush1.msra.mxu0 0.0
    %537 = vmatprep.subr.mxu0 0.0
    %538 = vmatpush1.msra.mxu0 0.0
    %539 = vmatprep.subr.mxu0 0.0
    %540 = vmatpush1.msra.mxu0 0.0
    %541 = vmatprep.subr.mxu0 0.0
    %542 = vmatpush1.msra.mxu0 0.0
    %543 = vmatprep.mubr.f32.mxu0 0.0
    %544 = vmatmul.mubr.f32.gmra.mrb[0].mxu0 %v477
    %v545 = vpop.f32.mrb[0].mxu0
    %v546 = vadd.f32 0.0, %v545
    %v547 = vpop.f32.mrb[0].mxu0
    %548 = vdwg.mxu0
    %v550 = vrot.slane %v546, 7
    %v552 = vadd.f32 %v363, %v550
    %v553 = vsub.f32 0.0, %v552
    %v554 = vmul.f32 %v553, 1.442695
    %v555 = vpow.pop %v554
    %v556 = vadd.f32 %v555, 1.0
    %v557 = vrcp.pop %v556
    %v558 = vmul.f32 1.0, %v557
    %v559 = vtanh.pop %v552
    %v561 = vrot.slane %v461, 7
    %v563 = vmul.f32 %v558, %v561
    %565 = vrot.lane.b32.xlu0 %v559, 64
    %v566 = vpop.permute.xlu0 %565
    %v568 = vmul.f32 %v558, %v566
    %570 = vrot.lane.b32.xlu0 %v568, 32
    %v571 = vpop.permute.xlu0 %570
    %v573 = vadd.f32 %v563, %v571
    %v574 = vtanh.pop %v573
    %576 = vrot.lane.b32.xlu0 %v574, 64
    %v577 = vpop.permute.xlu0 %576
    %v579 = vmul.f32 %v558, %v577
    %vm580 = vcmp.eq.s32.totalorder %v369, 1
    %v581 = vlaneseq
    %v582 = vshrl.u32 %v581, 7
    %v583 = vsub.s32 1, %v582
    %v584 = vrot.slane %v579, %v583
    %v585 = vsel %vm580, %v584, %v473
    %v587 = vrot.slane %v579, 1
    %588 = vrot.lane.b32.xlu0 %v587, 32
    %v589 = vpop.permute.xlu0 %588
    %v590 = vsel %vm58, %v589, 0
    %592 = vmatprep.subr.mxu0 0.0
    %593 = vmatpush1.msra.mxu0 %v364
    %594 = vmatprep.subr.mxu0 0.0
    %595 = vmatpush1.msra.mxu0 %v365
    %596 = vmatprep.subr.mxu0 0.0
    %597 = vmatpush1.msra.mxu0 %v366
    %598 = vmatprep.subr.mxu0 0.0
    %599 = vmatpush1.msra.mxu0 %v367
    %600 = vmatprep.subr.mxu0 0.0
    %601 = vmatpush1.msra.mxu0 0.0
    %602 = vmatprep.subr.mxu0 0.0
    %603 = vmatpush1.msra.mxu0 0.0
    %604 = vmatprep.subr.mxu0 0.0
    %605 = vmatpush1.msra.mxu0 0.0
    %606 = vmatprep.subr.mxu0 0.0
    %607 = vmatpush1.msra.mxu0 0.0
    %608 = vmatprep.subr.mxu0 0.0
    %609 = vmatpush1.msra.mxu0 0.0
    %610 = vmatprep.subr.mxu0 0.0
    %611 = vmatpush1.msra.mxu0 0.0
    %612 = vmatprep.subr.mxu0 0.0
    %613 = vmatpush1.msra.mxu0 0.0
    %614 = vmatprep.subr.mxu0 0.0
    %615 = vmatpush1.msra.mxu0 0.0
    %616 = vmatprep.subr.mxu0 0.0
    %617 = vmatpush1.msra.mxu0 0.0
    %618 = vmatprep.subr.mxu0 0.0
    %619 = vmatpush1.msra.mxu0 0.0
    %620 = vmatprep.subr.mxu0 0.0
    %621 = vmatpush1.msra.mxu0 0.0
    %622 = vmatprep.subr.mxu0 0.0
    %623 = vmatpush1.msra.mxu0 0.0
    %624 = vmatprep.subr.mxu0 0.0
    %625 = vmatpush1.msra.mxu0 0.0
    %626 = vmatprep.subr.mxu0 0.0
    %627 = vmatpush1.msra.mxu0 0.0
    %628 = vmatprep.subr.mxu0 0.0
    %629 = vmatpush1.msra.mxu0 0.0
    %630 = vmatprep.subr.mxu0 0.0
    %631 = vmatpush1.msra.mxu0 0.0
    %632 = vmatprep.subr.mxu0 0.0
    %633 = vmatpush1.msra.mxu0 0.0
    %634 = vmatprep.subr.mxu0 0.0
    %635 = vmatpush1.msra.mxu0 0.0
    %636 = vmatprep.subr.mxu0 0.0
    %637 = vmatpush1.msra.mxu0 0.0
    %638 = vmatprep.subr.mxu0 0.0
    %639 = vmatpush1.msra.mxu0 0.0
    %640 = vmatprep.subr.mxu0 0.0
    %641 = vmatpush1.msra.mxu0 0.0
    %642 = vmatprep.subr.mxu0 0.0
    %643 = vmatpush1.msra.mxu0 0.0
    %644 = vmatprep.subr.mxu0 0.0
    %645 = vmatpush1.msra.mxu0 0.0
    %646 = vmatprep.subr.mxu0 0.0
    %647 = vmatpush1.msra.mxu0 0.0
    %648 = vmatprep.subr.mxu0 0.0
    %649 = vmatpush1.msra.mxu0 0.0
    %650 = vmatprep.subr.mxu0 0.0
    %651 = vmatpush1.msra.mxu0 0.0
    %652 = vmatprep.subr.mxu0 0.0
    %653 = vmatpush1.msra.mxu0 0.0
    %654 = vmatprep.subr.mxu0 0.0
    %655 = vmatpush1.msra.mxu0 0.0
    %656 = vmatprep.mubr.f32.mxu0 0.0
    %657 = vmatmul.mubr.f32.gmra.mrb[0].mxu0 %v590
    %v658 = vpop.f32.mrb[0].mxu0
    %v659 = vadd.f32 0.0, %v658
    %v660 = vpop.f32.mrb[0].mxu0
    %661 = vdwg.mxu0
    %v663 = vrot.slane %v659, 6
    %v665 = vadd.f32 %v363, %v663
    %v666 = vsub.f32 0.0, %v665
    %v667 = vmul.f32 %v666, 1.442695
    %v668 = vpow.pop %v667
    %v669 = vadd.f32 %v668, 1.0
    %v670 = vrcp.pop %v669
    %v671 = vmul.f32 1.0, %v670
    %v672 = vtanh.pop %v665
    %v674 = vrot.slane %v573, 7
    %v676 = vmul.f32 %v671, %v674
    %678 = vrot.lane.b32.xlu0 %v672, 64
    %v679 = vpop.permute.xlu0 %678
    %v681 = vmul.f32 %v671, %v679
    %683 = vrot.lane.b32.xlu0 %v681, 32
    %v684 = vpop.permute.xlu0 %683
    %v686 = vadd.f32 %v676, %v684
    %v687 = vtanh.pop %v686
    %689 = vrot.lane.b32.xlu0 %v687, 64
    %v690 = vpop.permute.xlu0 %689
    %v692 = vmul.f32 %v671, %v690
    %vm693 = vcmp.eq.s32.totalorder %v369, 2
    %v694 = vlaneseq
    %v695 = vshrl.u32 %v694, 7
    %v696 = vsub.s32 2, %v695
    %v697 = vrot.slane %v692, %v696
    %v698 = vsel %vm693, %v697, %v585
    %v700 = vrot.slane %v692, 2
    %701 = vrot.lane.b32.xlu0 %v700, 32
    %v702 = vpop.permute.xlu0 %701
    %v703 = vsel %vm58, %v702, 0
    %705 = vmatprep.subr.mxu0 0.0
    %706 = vmatpush1.msra.mxu0 %v364
    %707 = vmatprep.subr.mxu0 0.0
    %708 = vmatpush1.msra.mxu0 %v365
    %709 = vmatprep.subr.mxu0 0.0
    %710 = vmatpush1.msra.mxu0 %v366
    %711 = vmatprep.subr.mxu0 0.0
    %712 = vmatpush1.msra.mxu0 %v367
    %713 = vmatprep.subr.mxu0 0.0
    %714 = vmatpush1.msra.mxu0 0.0
    %715 = vmatprep.subr.mxu0 0.0
    %716 = vmatpush1.msra.mxu0 0.0
    %717 = vmatprep.subr.mxu0 0.0
    %718 = vmatpush1.msra.mxu0 0.0
    %719 = vmatprep.subr.mxu0 0.0
    %720 = vmatpush1.msra.mxu0 0.0
    %721 = vmatprep.subr.mxu0 0.0
    %722 = vmatpush1.msra.mxu0 0.0
    %723 = vmatprep.subr.mxu0 0.0
    %724 = vmatpush1.msra.mxu0 0.0
    %725 = vmatprep.subr.mxu0 0.0
    %726 = vmatpush1.msra.mxu0 0.0
    %727 = vmatprep.subr.mxu0 0.0
    %728 = vmatpush1.msra.mxu0 0.0
    %729 = vmatprep.subr.mxu0 0.0
    %730 = vmatpush1.msra.mxu0 0.0
    %731 = vmatprep.subr.mxu0 0.0
    %732 = vmatpush1.msra.mxu0 0.0
    %733 = vmatprep.subr.mxu0 0.0
    %734 = vmatpush1.msra.mxu0 0.0
    %735 = vmatprep.subr.mxu0 0.0
    %736 = vmatpush1.msra.mxu0 0.0
    %737 = vmatprep.subr.mxu0 0.0
    %738 = vmatpush1.msra.mxu0 0.0
    %739 = vmatprep.subr.mxu0 0.0
    %740 = vmatpush1.msra.mxu0 0.0
    %741 = vmatprep.subr.mxu0 0.0
    %742 = vmatpush1.msra.mxu0 0.0
    %743 = vmatprep.subr.mxu0 0.0
    %744 = vmatpush1.msra.mxu0 0.0
    %745 = vmatprep.subr.mxu0 0.0
    %746 = vmatpush1.msra.mxu0 0.0
    %747 = vmatprep.subr.mxu0 0.0
    %748 = vmatpush1.msra.mxu0 0.0
    %749 = vmatprep.subr.mxu0 0.0
    %750 = vmatpush1.msra.mxu0 0.0
    %751 = vmatprep.subr.mxu0 0.0
    %752 = vmatpush1.msra.mxu0 0.0
    %753 = vmatprep.subr.mxu0 0.0
    %754 = vmatpush1.msra.mxu0 0.0
    %755 = vmatprep.subr.mxu0 0.0
    %756 = vmatpush1.msra.mxu0 0.0
    %757 = vmatprep.subr.mxu0 0.0
    %758 = vmatpush1.msra.mxu0 0.0
    %759 = vmatprep.subr.mxu0 0.0
    %760 = vmatpush1.msra.mxu0 0.0
    %761 = vmatprep.subr.mxu0 0.0
    %762 = vmatpush1.msra.mxu0 0.0
    %763 = vmatprep.subr.mxu0 0.0
    %764 = vmatpush1.msra.mxu0 0.0
    %765 = vmatprep.subr.mxu0 0.0
    %766 = vmatpush1.msra.mxu0 0.0
    %767 = vmatprep.subr.mxu0 0.0
    %768 = vmatpush1.msra.mxu0 0.0
    %769 = vmatprep.mubr.f32.mxu0 0.0
    %770 = vmatmul.mubr.f32.gmra.mrb[0].mxu0 %v703
    %v771 = vpop.f32.mrb[0].mxu0
    %v772 = vadd.f32 0.0, %v771
    %v773 = vpop.f32.mrb[0].mxu0
    %774 = vdwg.mxu0
    %v776 = vrot.slane %v772, 5
    %v778 = vadd.f32 %v363, %v776
    %v779 = vsub.f32 0.0, %v778
    %v780 = vmul.f32 %v779, 1.442695
    %v781 = vpow.pop %v780
    %v782 = vadd.f32 %v781, 1.0
    %v783 = vrcp.pop %v782
    %v784 = vmul.f32 1.0, %v783
    %v785 = vtanh.pop %v778
    %v787 = vrot.slane %v686, 7
    %v789 = vmul.f32 %v784, %v787
    %791 = vrot.lane.b32.xlu0 %v785, 64
    %v792 = vpop.permute.xlu0 %791
    %v794 = vmul.f32 %v784, %v792
    %796 = vrot.lane.b32.xlu0 %v794, 32
    %v797 = vpop.permute.xlu0 %796
    %v799 = vadd.f32 %v789, %v797
    %v800 = vtanh.pop %v799
    %802 = vrot.lane.b32.xlu0 %v800, 64
    %v803 = vpop.permute.xlu0 %802
    %v805 = vmul.f32 %v784, %v803
    %vm806 = vcmp.eq.s32.totalorder %v369, 3
    %v807 = vlaneseq
    %v808 = vshrl.u32 %v807, 7
    %v809 = vsub.s32 3, %v808
    %v810 = vrot.slane %v805, %v809
    %v811 = vsel %vm806, %v810, %v698
    %v813 = vrot.slane %v805, 3
    %814 = vrot.lane.b32.xlu0 %v813, 32
    %v815 = vpop.permute.xlu0 %814
    %v816 = vsel %vm58, %v815, 0
    %818 = vmatprep.subr.mxu0 0.0
    %819 = vmatpush1.msra.mxu0 %v364
    %820 = vmatprep.subr.mxu0 0.0
    %821 = vmatpush1.msra.mxu0 %v365
    %822 = vmatprep.subr.mxu0 0.0
    %823 = vmatpush1.msra.mxu0 %v366
    %824 = vmatprep.subr.mxu0 0.0
    %825 = vmatpush1.msra.mxu0 %v367
    %826 = vmatprep.subr.mxu0 0.0
    %827 = vmatpush1.msra.mxu0 0.0
    %828 = vmatprep.subr.mxu0 0.0
    %829 = vmatpush1.msra.mxu0 0.0
    %830 = vmatprep.subr.mxu0 0.0
    %831 = vmatpush1.msra.mxu0 0.0
    %832 = vmatprep.subr.mxu0 0.0
    %833 = vmatpush1.msra.mxu0 0.0
    %834 = vmatprep.subr.mxu0 0.0
    %835 = vmatpush1.msra.mxu0 0.0
    %836 = vmatprep.subr.mxu0 0.0
    %837 = vmatpush1.msra.mxu0 0.0
    %838 = vmatprep.subr.mxu0 0.0
    %839 = vmatpush1.msra.mxu0 0.0
    %840 = vmatprep.subr.mxu0 0.0
    %841 = vmatpush1.msra.mxu0 0.0
    %842 = vmatprep.subr.mxu0 0.0
    %843 = vmatpush1.msra.mxu0 0.0
    %844 = vmatprep.subr.mxu0 0.0
    %845 = vmatpush1.msra.mxu0 0.0
    %846 = vmatprep.subr.mxu0 0.0
    %847 = vmatpush1.msra.mxu0 0.0
    %848 = vmatprep.subr.mxu0 0.0
    %849 = vmatpush1.msra.mxu0 0.0
    %850 = vmatprep.subr.mxu0 0.0
    %851 = vmatpush1.msra.mxu0 0.0
    %852 = vmatprep.subr.mxu0 0.0
    %853 = vmatpush1.msra.mxu0 0.0
    %854 = vmatprep.subr.mxu0 0.0
    %855 = vmatpush1.msra.mxu0 0.0
    %856 = vmatprep.subr.mxu0 0.0
    %857 = vmatpush1.msra.mxu0 0.0
    %858 = vmatprep.subr.mxu0 0.0
    %859 = vmatpush1.msra.mxu0 0.0
    %860 = vmatprep.subr.mxu0 0.0
    %861 = vmatpush1.msra.mxu0 0.0
    %862 = vmatprep.subr.mxu0 0.0
    %863 = vmatpush1.msra.mxu0 0.0
    %864 = vmatprep.subr.mxu0 0.0
    %865 = vmatpush1.msra.mxu0 0.0
    %866 = vmatprep.subr.mxu0 0.0
    %867 = vmatpush1.msra.mxu0 0.0
    %868 = vmatprep.subr.mxu0 0.0
    %869 = vmatpush1.msra.mxu0 0.0
    %870 = vmatprep.subr.mxu0 0.0
    %871 = vmatpush1.msra.mxu0 0.0
    %872 = vmatprep.subr.mxu0 0.0
    %873 = vmatpush1.msra.mxu0 0.0
    %874 = vmatprep.subr.mxu0 0.0
    %875 = vmatpush1.msra.mxu0 0.0
    %876 = vmatprep.subr.mxu0 0.0
    %877 = vmatpush1.msra.mxu0 0.0
    %878 = vmatprep.subr.mxu0 0.0
    %879 = vmatpush1.msra.mxu0 0.0
    %880 = vmatprep.subr.mxu0 0.0
    %881 = vmatpush1.msra.mxu0 0.0
    %882 = vmatprep.mubr.f32.mxu0 0.0
    %883 = vmatmul.mubr.f32.gmra.mrb[0].mxu0 %v816
    %v884 = vpop.f32.mrb[0].mxu0
    %v885 = vadd.f32 0.0, %v884
    %v886 = vpop.f32.mrb[0].mxu0
    %887 = vdwg.mxu0
    %v889 = vrot.slane %v885, 4
    %v891 = vadd.f32 %v363, %v889
    %v892 = vsub.f32 0.0, %v891
    %v893 = vmul.f32 %v892, 1.442695
    %v894 = vpow.pop %v893
    %v895 = vadd.f32 %v894, 1.0
    %v896 = vrcp.pop %v895
    %v897 = vmul.f32 1.0, %v896
    %v898 = vtanh.pop %v891
    %v900 = vrot.slane %v799, 7
    %v902 = vmul.f32 %v897, %v900
    %904 = vrot.lane.b32.xlu0 %v898, 64
    %v905 = vpop.permute.xlu0 %904
    %v907 = vmul.f32 %v897, %v905
    %909 = vrot.lane.b32.xlu0 %v907, 32
    %v910 = vpop.permute.xlu0 %909
    %v912 = vadd.f32 %v902, %v910
    %v913 = vtanh.pop %v912
    %915 = vrot.lane.b32.xlu0 %v913, 64
    %v916 = vpop.permute.xlu0 %915
    %v918 = vmul.f32 %v897, %v916
    %vm919 = vcmp.eq.s32.totalorder %v369, 4
    %v920 = vlaneseq
    %v921 = vshrl.u32 %v920, 7
    %v922 = vsub.s32 4, %v921
    %v923 = vrot.slane %v918, %v922
    %v924 = vsel %vm919, %v923, %v811
    %v926 = vrot.slane %v918, 4
    %927 = vrot.lane.b32.xlu0 %v926, 32
    %v928 = vpop.permute.xlu0 %927
    %v929 = vsel %vm58, %v928, 0
    %931 = vmatprep.subr.mxu0 0.0
    %932 = vmatpush1.msra.mxu0 %v364
    %933 = vmatprep.subr.mxu0 0.0
    %934 = vmatpush1.msra.mxu0 %v365
    %935 = vmatprep.subr.mxu0 0.0
    %936 = vmatpush1.msra.mxu0 %v366
    %937 = vmatprep.subr.mxu0 0.0
    %938 = vmatpush1.msra.mxu0 %v367
    %939 = vmatprep.subr.mxu0 0.0
    %940 = vmatpush1.msra.mxu0 0.0
    %941 = vmatprep.subr.mxu0 0.0
    %942 = vmatpush1.msra.mxu0 0.0
    %943 = vmatprep.subr.mxu0 0.0
    %944 = vmatpush1.msra.mxu0 0.0
    %945 = vmatprep.subr.mxu0 0.0
    %946 = vmatpush1.msra.mxu0 0.0
    %947 = vmatprep.subr.mxu0 0.0
    %948 = vmatpush1.msra.mxu0 0.0
    %949 = vmatprep.subr.mxu0 0.0
    %950 = vmatpush1.msra.mxu0 0.0
    %951 = vmatprep.subr.mxu0 0.0
    %952 = vmatpush1.msra.mxu0 0.0
    %953 = vmatprep.subr.mxu0 0.0
    %954 = vmatpush1.msra.mxu0 0.0
    %955 = vmatprep.subr.mxu0 0.0
    %956 = vmatpush1.msra.mxu0 0.0
    %957 = vmatprep.subr.mxu0 0.0
    %958 = vmatpush1.msra.mxu0 0.0
    %959 = vmatprep.subr.mxu0 0.0
    %960 = vmatpush1.msra.mxu0 0.0
    %961 = vmatprep.subr.mxu0 0.0
    %962 = vmatpush1.msra.mxu0 0.0
    %963 = vmatprep.subr.mxu0 0.0
    %964 = vmatpush1.msra.mxu0 0.0
    %965 = vmatprep.subr.mxu0 0.0
    %966 = vmatpush1.msra.mxu0 0.0
    %967 = vmatprep.subr.mxu0 0.0
    %968 = vmatpush1.msra.mxu0 0.0
    %969 = vmatprep.subr.mxu0 0.0
    %970 = vmatpush1.msra.mxu0 0.0
    %971 = vmatprep.subr.mxu0 0.0
    %972 = vmatpush1.msra.mxu0 0.0
    %973 = vmatprep.subr.mxu0 0.0
    %974 = vmatpush1.msra.mxu0 0.0
    %975 = vmatprep.subr.mxu0 0.0
    %976 = vmatpush1.msra.mxu0 0.0
    %977 = vmatprep.subr.mxu0 0.0
    %978 = vmatpush1.msra.mxu0 0.0
    %979 = vmatprep.subr.mxu0 0.0
    %980 = vmatpush1.msra.mxu0 0.0
    %981 = vmatprep.subr.mxu0 0.0
    %982 = vmatpush1.msra.mxu0 0.0
    %983 = vmatprep.subr.mxu0 0.0
    %984 = vmatpush1.msra.mxu0 0.0
    %985 = vmatprep.subr.mxu0 0.0
    %986 = vmatpush1.msra.mxu0 0.0
    %987 = vmatprep.subr.mxu0 0.0
    %988 = vmatpush1.msra.mxu0 0.0
    %989 = vmatprep.subr.mxu0 0.0
    %990 = vmatpush1.msra.mxu0 0.0
    %991 = vmatprep.subr.mxu0 0.0
    %992 = vmatpush1.msra.mxu0 0.0
    %993 = vmatprep.subr.mxu0 0.0
    %994 = vmatpush1.msra.mxu0 0.0
    %995 = vmatprep.mubr.f32.mxu0 0.0
    %996 = vmatmul.mubr.f32.gmra.mrb[0].mxu0 %v929
    %v997 = vpop.f32.mrb[0].mxu0
    %v998 = vadd.f32 0.0, %v997
    %v999 = vpop.f32.mrb[0].mxu0
    %1000 = vdwg.mxu0
    %v1002 = vrot.slane %v998, 3
    %v1004 = vadd.f32 %v363, %v1002
    %v1005 = vsub.f32 0.0, %v1004
    %v1006 = vmul.f32 %v1005, 1.442695
    %v1007 = vpow.pop %v1006
    %v1008 = vadd.f32 %v1007, 1.0
    %v1009 = vrcp.pop %v1008
    %v1010 = vmul.f32 1.0, %v1009
    %v1011 = vtanh.pop %v1004
    %v1013 = vrot.slane %v912, 7
    %v1015 = vmul.f32 %v1010, %v1013
    %1017 = vrot.lane.b32.xlu0 %v1011, 64
    %v1018 = vpop.permute.xlu0 %1017
    %v1020 = vmul.f32 %v1010, %v1018
    %1022 = vrot.lane.b32.xlu0 %v1020, 32
    %v1023 = vpop.permute.xlu0 %1022
    %v1025 = vadd.f32 %v1015, %v1023
    %v1026 = vtanh.pop %v1025
    %1028 = vrot.lane.b32.xlu0 %v1026, 64
    %v1029 = vpop.permute.xlu0 %1028
    %v1031 = vmul.f32 %v1010, %v1029
    %vm1032 = vcmp.eq.s32.totalorder %v369, 5
    %v1033 = vlaneseq
    %v1034 = vshrl.u32 %v1033, 7
    %v1035 = vsub.s32 5, %v1034
    %v1036 = vrot.slane %v1031, %v1035
    %v1037 = vsel %vm1032, %v1036, %v924
    %v1039 = vrot.slane %v1031, 5
    %1040 = vrot.lane.b32.xlu0 %v1039, 32
    %v1041 = vpop.permute.xlu0 %1040
    %v1042 = vsel %vm58, %v1041, 0
    %1044 = vmatprep.subr.mxu0 0.0
    %1045 = vmatpush1.msra.mxu0 %v364
    %1046 = vmatprep.subr.mxu0 0.0
    %1047 = vmatpush1.msra.mxu0 %v365
    %1048 = vmatprep.subr.mxu0 0.0
    %1049 = vmatpush1.msra.mxu0 %v366
    %1050 = vmatprep.subr.mxu0 0.0
    %1051 = vmatpush1.msra.mxu0 %v367
    %1052 = vmatprep.subr.mxu0 0.0
    %1053 = vmatpush1.msra.mxu0 0.0
    %1054 = vmatprep.subr.mxu0 0.0
    %1055 = vmatpush1.msra.mxu0 0.0
    %1056 = vmatprep.subr.mxu0 0.0
    %1057 = vmatpush1.msra.mxu0 0.0
    %1058 = vmatprep.subr.mxu0 0.0
    %1059 = vmatpush1.msra.mxu0 0.0
    %1060 = vmatprep.subr.mxu0 0.0
    %1061 = vmatpush1.msra.mxu0 0.0
    %1062 = vmatprep.subr.mxu0 0.0
    %1063 = vmatpush1.msra.mxu0 0.0
    %1064 = vmatprep.subr.mxu0 0.0
    %1065 = vmatpush1.msra.mxu0 0.0
    %1066 = vmatprep.subr.mxu0 0.0
    %1067 = vmatpush1.msra.mxu0 0.0
    %1068 = vmatprep.subr.mxu0 0.0
    %1069 = vmatpush1.msra.mxu0 0.0
    %1070 = vmatprep.subr.mxu0 0.0
    %1071 = vmatpush1.msra.mxu0 0.0
    %1072 = vmatprep.subr.mxu0 0.0
    %1073 = vmatpush1.msra.mxu0 0.0
    %1074 = vmatprep.subr.mxu0 0.0
    %1075 = vmatpush1.msra.mxu0 0.0
    %1076 = vmatprep.subr.mxu0 0.0
    %1077 = vmatpush1.msra.mxu0 0.0
    %1078 = vmatprep.subr.mxu0 0.0
    %1079 = vmatpush1.msra.mxu0 0.0
    %1080 = vmatprep.subr.mxu0 0.0
    %1081 = vmatpush1.msra.mxu0 0.0
    %1082 = vmatprep.subr.mxu0 0.0
    %1083 = vmatpush1.msra.mxu0 0.0
    %1084 = vmatprep.subr.mxu0 0.0
    %1085 = vmatpush1.msra.mxu0 0.0
    %1086 = vmatprep.subr.mxu0 0.0
    %1087 = vmatpush1.msra.mxu0 0.0
    %1088 = vmatprep.subr.mxu0 0.0
    %1089 = vmatpush1.msra.mxu0 0.0
    %1090 = vmatprep.subr.mxu0 0.0
    %1091 = vmatpush1.msra.mxu0 0.0
    %1092 = vmatprep.subr.mxu0 0.0
    %1093 = vmatpush1.msra.mxu0 0.0
    %1094 = vmatprep.subr.mxu0 0.0
    %1095 = vmatpush1.msra.mxu0 0.0
    %1096 = vmatprep.subr.mxu0 0.0
    %1097 = vmatpush1.msra.mxu0 0.0
    %1098 = vmatprep.subr.mxu0 0.0
    %1099 = vmatpush1.msra.mxu0 0.0
    %1100 = vmatprep.subr.mxu0 0.0
    %1101 = vmatpush1.msra.mxu0 0.0
    %1102 = vmatprep.subr.mxu0 0.0
    %1103 = vmatpush1.msra.mxu0 0.0
    %1104 = vmatprep.subr.mxu0 0.0
    %1105 = vmatpush1.msra.mxu0 0.0
    %1106 = vmatprep.subr.mxu0 0.0
    %1107 = vmatpush1.msra.mxu0 0.0
    %1108 = vmatprep.mubr.f32.mxu0 0.0
    %1109 = vmatmul.mubr.f32.gmra.mrb[0].mxu0 %v1042
    %v1110 = vpop.f32.mrb[0].mxu0
    %v1111 = vadd.f32 0.0, %v1110
    %v1112 = vpop.f32.mrb[0].mxu0
    %1113 = vdwg.mxu0
    %v1115 = vrot.slane %v1111, 2
    %v1117 = vadd.f32 %v363, %v1115
    %v1118 = vsub.f32 0.0, %v1117
    %v1119 = vmul.f32 %v1118, 1.442695
    %v1120 = vpow.pop %v1119
    %v1121 = vadd.f32 %v1120, 1.0
    %v1122 = vrcp.pop %v1121
    %v1123 = vmul.f32 1.0, %v1122
    %v1124 = vtanh.pop %v1117
    %v1126 = vrot.slane %v1025, 7
    %v1128 = vmul.f32 %v1123, %v1126
    %1130 = vrot.lane.b32.xlu0 %v1124, 64
    %v1131 = vpop.permute.xlu0 %1130
    %v1133 = vmul.f32 %v1123, %v1131
    %1135 = vrot.lane.b32.xlu0 %v1133, 32
    %v1136 = vpop.permute.xlu0 %1135
    %v1138 = vadd.f32 %v1128, %v1136
    %v1139 = vtanh.pop %v1138
    %1141 = vrot.lane.b32.xlu0 %v1139, 64
    %v1142 = vpop.permute.xlu0 %1141
    %v1144 = vmul.f32 %v1123, %v1142
    %vm1145 = vcmp.eq.s32.totalorder %v369, 6
    %v1146 = vlaneseq
    %v1147 = vshrl.u32 %v1146, 7
    %v1148 = vsub.s32 6, %v1147
    %v1149 = vrot.slane %v1144, %v1148
    %v1150 = vsel %vm1145, %v1149, %v1037
    %v1152 = vrot.slane %v1144, 6
    %1153 = vrot.lane.b32.xlu0 %v1152, 32
    %v1154 = vpop.permute.xlu0 %1153
    %v1155 = vsel %vm58, %v1154, 0
    %1157 = vmatprep.subr.mxu0 0.0
    %1158 = vmatpush1.msra.mxu0 %v364
    %1159 = vmatprep.subr.mxu0 0.0
    %1160 = vmatpush1.msra.mxu0 %v365
    %1161 = vmatprep.subr.mxu0 0.0
    %1162 = vmatpush1.msra.mxu0 %v366
    %1163 = vmatprep.subr.mxu0 0.0
    %1164 = vmatpush1.msra.mxu0 %v367
    %1165 = vmatprep.subr.mxu0 0.0
    %1166 = vmatpush1.msra.mxu0 0.0
    %1167 = vmatprep.subr.mxu0 0.0
    %1168 = vmatpush1.msra.mxu0 0.0
    %1169 = vmatprep.subr.mxu0 0.0
    %1170 = vmatpush1.msra.mxu0 0.0
    %1171 = vmatprep.subr.mxu0 0.0
    %1172 = vmatpush1.msra.mxu0 0.0
    %1173 = vmatprep.subr.mxu0 0.0
    %1174 = vmatpush1.msra.mxu0 0.0
    %1175 = vmatprep.subr.mxu0 0.0
    %1176 = vmatpush1.msra.mxu0 0.0
    %1177 = vmatprep.subr.mxu0 0.0
    %1178 = vmatpush1.msra.mxu0 0.0
    %1179 = vmatprep.subr.mxu0 0.0
    %1180 = vmatpush1.msra.mxu0 0.0
    %1181 = vmatprep.subr.mxu0 0.0
    %1182 = vmatpush1.msra.mxu0 0.0
    %1183 = vmatprep.subr.mxu0 0.0
    %1184 = vmatpush1.msra.mxu0 0.0
    %1185 = vmatprep.subr.mxu0 0.0
    %1186 = vmatpush1.msra.mxu0 0.0
    %1187 = vmatprep.subr.mxu0 0.0
    %1188 = vmatpush1.msra.mxu0 0.0
    %1189 = vmatprep.subr.mxu0 0.0
    %1190 = vmatpush1.msra.mxu0 0.0
    %1191 = vmatprep.subr.mxu0 0.0
    %1192 = vmatpush1.msra.mxu0 0.0
    %1193 = vmatprep.subr.mxu0 0.0
    %1194 = vmatpush1.msra.mxu0 0.0
    %1195 = vmatprep.subr.mxu0 0.0
    %1196 = vmatpush1.msra.mxu0 0.0
    %1197 = vmatprep.subr.mxu0 0.0
    %1198 = vmatpush1.msra.mxu0 0.0
    %1199 = vmatprep.subr.mxu0 0.0
    %1200 = vmatpush1.msra.mxu0 0.0
    %1201 = vmatprep.subr.mxu0 0.0
    %1202 = vmatpush1.msra.mxu0 0.0
    %1203 = vmatprep.subr.mxu0 0.0
    %1204 = vmatpush1.msra.mxu0 0.0
    %1205 = vmatprep.subr.mxu0 0.0
    %1206 = vmatpush1.msra.mxu0 0.0
    %1207 = vmatprep.subr.mxu0 0.0
    %1208 = vmatpush1.msra.mxu0 0.0
    %1209 = vmatprep.subr.mxu0 0.0
    %1210 = vmatpush1.msra.mxu0 0.0
    %1211 = vmatprep.subr.mxu0 0.0
    %1212 = vmatpush1.msra.mxu0 0.0
    %1213 = vmatprep.subr.mxu0 0.0
    %1214 = vmatpush1.msra.mxu0 0.0
    %1215 = vmatprep.subr.mxu0 0.0
    %1216 = vmatpush1.msra.mxu0 0.0
    %1217 = vmatprep.subr.mxu0 0.0
    %1218 = vmatpush1.msra.mxu0 0.0
    %1219 = vmatprep.subr.mxu0 0.0
    %1220 = vmatpush1.msra.mxu0 0.0
    %1221 = vmatprep.mubr.f32.mxu0 0.0
    %1222 = vmatmul.mubr.f32.gmra.mrb[0].mxu0 %v1155
    %v1223 = vpop.f32.mrb[0].mxu0
    %v1224 = vadd.f32 0.0, %v1223
    %v1225 = vpop.f32.mrb[0].mxu0
    %1226 = vdwg.mxu0
    %v1228 = vrot.slane %v1224, 1
    %v1230 = vadd.f32 %v363, %v1228
    %v1231 = vsub.f32 0.0, %v1230
    %v1232 = vmul.f32 %v1231, 1.442695
    %v1233 = vpow.pop %v1232
    %v1234 = vadd.f32 %v1233, 1.0
    %v1235 = vrcp.pop %v1234
    %v1236 = vmul.f32 1.0, %v1235
    %v1237 = vtanh.pop %v1230
    %v1239 = vrot.slane %v1138, 7
    %v1241 = vmul.f32 %v1236, %v1239
    %1243 = vrot.lane.b32.xlu0 %v1237, 64
    %v1244 = vpop.permute.xlu0 %1243
    %v1246 = vmul.f32 %v1236, %v1244
    %1248 = vrot.lane.b32.xlu0 %v1246, 32
    %v1249 = vpop.permute.xlu0 %1248
    %v1251 = vadd.f32 %v1241, %v1249
    %v1252 = vtanh.pop %v1251
    %1254 = vrot.lane.b32.xlu0 %v1252, 64
    %v1255 = vpop.permute.xlu0 %1254
    %v1257 = vmul.f32 %v1236, %v1255
    %vm1258 = vcmp.eq.s32.totalorder %v369, 7
    %v1259 = vlaneseq
    %v1260 = vshrl.u32 %v1259, 7
    %v1261 = vsub.s32 7, %v1260
    %v1262 = vrot.slane %v1257, %v1261
    %v1263 = vsel %vm1258, %v1262, %v1150
    %v1264 = vadd.s32 %v369, %v45
    %vm1265 = vcmp.eq.s32.totalorder %v1264, 7
    %v1266 = vsel %vm1265, 1, 0
    %v1267 = vcvt.s32.f32 %v1266
    %v1268 = vld [vmem:[%s6] sm:$0xff]
    %v1269 = vld [vmem:[%s6 + $0x8] sm:$0xff]
    %v1270 = vld [vmem:[%s6 + $0x10] sm:$0xff]
    %v1271 = vld [vmem:[%s6 + $0x18] sm:$0xff]
    %v1272 = vld [vmem:[%s7] sm:$0xff]
    %v1273 = vld [vmem:[%s7 + $0x8] sm:$0xff]
    %v1274 = vld [vmem:[%s7 + $0x10] sm:$0xff]
    %v1275 = vld [vmem:[%s7 + $0x18] sm:$0xff]
    %1277 = vrot.lane.b32.xlu0 %v1263, 32
    %v1278 = vpop.permute.xlu0 %1277
    %v1279 = vsel %vm58, %v1278, 0
    %1281 = vmatprep.subr.mxu0 0.0
    %1282 = vmatpush1.msra.mxu0 %v1272
    %1283 = vmatprep.subr.mxu0 0.0
    %1284 = vmatpush1.msra.mxu0 %v1273
    %1285 = vmatprep.subr.mxu0 0.0
    %1286 = vmatpush1.msra.mxu0 %v1274
    %1287 = vmatprep.subr.mxu0 0.0
    %1288 = vmatpush1.msra.mxu0 %v1275
    %1289 = vmatprep.subr.mxu0 0.0
    %1290 = vmatpush1.msra.mxu0 0.0
    %1291 = vmatprep.subr.mxu0 0.0
    %1292 = vmatpush1.msra.mxu0 0.0
    %1293 = vmatprep.subr.mxu0 0.0
    %1294 = vmatpush1.msra.mxu0 0.0
    %1295 = vmatprep.subr.mxu0 0.0
    %1296 = vmatpush1.msra.mxu0 0.0
    %1297 = vmatprep.subr.mxu0 0.0
    %1298 = vmatpush1.msra.mxu0 0.0
    %1299 = vmatprep.subr.mxu0 0.0
    %1300 = vmatpush1.msra.mxu0 0.0
    %1301 = vmatprep.subr.mxu0 0.0
    %1302 = vmatpush1.msra.mxu0 0.0
    %1303 = vmatprep.subr.mxu0 0.0
    %1304 = vmatpush1.msra.mxu0 0.0
    %1305 = vmatprep.subr.mxu0 0.0
    %1306 = vmatpush1.msra.mxu0 0.0
    %1307 = vmatprep.subr.mxu0 0.0
    %1308 = vmatpush1.msra.mxu0 0.0
    %1309 = vmatprep.subr.mxu0 0.0
    %1310 = vmatpush1.msra.mxu0 0.0
    %1311 = vmatprep.subr.mxu0 0.0
    %1312 = vmatpush1.msra.mxu0 0.0
    %1313 = vmatprep.subr.mxu0 0.0
    %1314 = vmatpush1.msra.mxu0 0.0
    %1315 = vmatprep.subr.mxu0 0.0
    %1316 = vmatpush1.msra.mxu0 0.0
    %1317 = vmatprep.subr.mxu0 0.0
    %1318 = vmatpush1.msra.mxu0 0.0
    %1319 = vmatprep.subr.mxu0 0.0
    %1320 = vmatpush1.msra.mxu0 0.0
    %1321 = vmatprep.subr.mxu0 0.0
    %1322 = vmatpush1.msra.mxu0 0.0
    %1323 = vmatprep.subr.mxu0 0.0
    %1324 = vmatpush1.msra.mxu0 0.0
    %1325 = vmatprep.subr.mxu0 0.0
    %1326 = vmatpush1.msra.mxu0 0.0
    %1327 = vmatprep.subr.mxu0 0.0
    %1328 = vmatpush1.msra.mxu0 0.0
    %1329 = vmatprep.subr.mxu0 0.0
    %1330 = vmatpush1.msra.mxu0 0.0
    %1331 = vmatprep.subr.mxu0 0.0
    %1332 = vmatpush1.msra.mxu0 0.0
    %1333 = vmatprep.subr.mxu0 0.0
    %1334 = vmatpush1.msra.mxu0 0.0
    %1335 = vmatprep.subr.mxu0 0.0
    %1336 = vmatpush1.msra.mxu0 0.0
    %1337 = vmatprep.subr.mxu0 0.0
    %1338 = vmatpush1.msra.mxu0 0.0
    %1339 = vmatprep.subr.mxu0 0.0
    %1340 = vmatpush1.msra.mxu0 0.0
    %1341 = vmatprep.subr.mxu0 0.0
    %1342 = vmatpush1.msra.mxu0 0.0
    %1343 = vmatprep.subr.mxu0 0.0
    %1344 = vmatpush1.msra.mxu0 0.0
    %1345 = vmatprep.mubr.f32.mxu0 0.0
    %1346 = vmatmul.mubr.f32.gmra.mrb[0].mxu0 %v1279
    %v1347 = vpop.f32.mrb[0].mxu0
    %v1348 = vadd.f32 0.0, %v1347
    %v1349 = vpop.f32.mrb[0].mxu0
    %1350 = vdwg.mxu0
    %vm1351 = vcmask 64512
    %v1353 = vsel %vm1351, %v1267, 0
    %1355 = vmatprep.subr.mxu0 0.0
    %1356 = vmatpush1.msra.mxu0 %v1348
    %1357 = vmatprep.subr.mxu0 0.0
    %1358 = vmatpush1.msra.mxu0 0.0
    %1359 = vmatprep.subr.mxu0 0.0
    %1360 = vmatpush1.msra.mxu0 0.0
    %1361 = vmatprep.subr.mxu0 0.0
    %1362 = vmatpush1.msra.mxu0 0.0
    %1363 = vmatprep.subr.mxu0 0.0
    %1364 = vmatpush1.msra.mxu0 0.0
    %1365 = vmatprep.subr.mxu0 0.0
    %1366 = vmatpush1.msra.mxu0 0.0
    %1367 = vmatprep.subr.mxu0 0.0
    %1368 = vmatpush1.msra.mxu0 0.0
    %1369 = vmatprep.subr.mxu0 0.0
    %1370 = vmatpush1.msra.mxu0 0.0
    %1371 = vmatprep.subr.mxu0 0.0
    %1372 = vmatpush1.msra.mxu0 0.0
    %1373 = vmatprep.subr.mxu0 0.0
    %1374 = vmatpush1.msra.mxu0 0.0
    %1375 = vmatprep.subr.mxu0 0.0
    %1376 = vmatpush1.msra.mxu0 0.0
    %1377 = vmatprep.subr.mxu0 0.0
    %1378 = vmatpush1.msra.mxu0 0.0
    %1379 = vmatprep.subr.mxu0 0.0
    %1380 = vmatpush1.msra.mxu0 0.0
    %1381 = vmatprep.subr.mxu0 0.0
    %1382 = vmatpush1.msra.mxu0 0.0
    %1383 = vmatprep.subr.mxu0 0.0
    %1384 = vmatpush1.msra.mxu0 0.0
    %1385 = vmatprep.subr.mxu0 0.0
    %1386 = vmatpush1.msra.mxu0 0.0
    %1387 = vmatprep.subr.mxu0 0.0
    %1388 = vmatpush1.msra.mxu0 0.0
    %1389 = vmatprep.subr.mxu0 0.0
    %1390 = vmatpush1.msra.mxu0 0.0
    %1391 = vmatprep.subr.mxu0 0.0
    %1392 = vmatpush1.msra.mxu0 0.0
    %1393 = vmatprep.subr.mxu0 0.0
    %1394 = vmatpush1.msra.mxu0 0.0
    %1395 = vmatprep.subr.mxu0 0.0
    %1396 = vmatpush1.msra.mxu0 0.0
    %1397 = vmatprep.subr.mxu0 0.0
    %1398 = vmatpush1.msra.mxu0 0.0
    %1399 = vmatprep.subr.mxu0 0.0
    %1400 = vmatpush1.msra.mxu0 0.0
    %1401 = vmatprep.subr.mxu0 0.0
    %1402 = vmatpush1.msra.mxu0 0.0
    %1403 = vmatprep.subr.mxu0 0.0
    %1404 = vmatpush1.msra.mxu0 0.0
    %1405 = vmatprep.subr.mxu0 0.0
    %1406 = vmatpush1.msra.mxu0 0.0
    %1407 = vmatprep.subr.mxu0 0.0
    %1408 = vmatpush1.msra.mxu0 0.0
    %1409 = vmatprep.subr.mxu0 0.0
    %1410 = vmatpush1.msra.mxu0 0.0
    %1411 = vmatprep.subr.mxu0 0.0
    %1412 = vmatpush1.msra.mxu0 0.0
    %1413 = vmatprep.subr.mxu0 0.0
    %1414 = vmatpush1.msra.mxu0 0.0
    %1415 = vmatprep.subr.mxu0 0.0
    %1416 = vmatpush1.msra.mxu0 0.0
    %1417 = vmatprep.subr.mxu0 0.0
    %1418 = vmatpush1.msra.mxu0 0.0
    %1419 = vmatprep.mubr.f32.mxu0 0.0
    %1420 = vmatmul.mubr.f32.gmra.mrb[0].mxu0 %v1353
    %v1421 = vpop.f32.mrb[0].mxu0
    %v1422 = vadd.f32 0.0, %v1421
    %v1423 = vpop.f32.mrb[0].mxu0
    %1424 = vdwg.mxu0
    %1425 = vmatprep.subr.mxu0 0.0
    %1426 = vmatpush1.msra.mxu0 %v1268
    %1427 = vmatprep.subr.mxu0 0.0
    %1428 = vmatpush1.msra.mxu0 %v1269
    %1429 = vmatprep.subr.mxu0 0.0
    %1430 = vmatpush1.msra.mxu0 %v1270
    %1431 = vmatprep.subr.mxu0 0.0
    %1432 = vmatpush1.msra.mxu0 %v1271
    %1433 = vmatprep.subr.mxu0 0.0
    %1434 = vmatpush1.msra.mxu0 0.0
    %1435 = vmatprep.subr.mxu0 0.0
    %1436 = vmatpush1.msra.mxu0 0.0
    %1437 = vmatprep.subr.mxu0 0.0
    %1438 = vmatpush1.msra.mxu0 0.0
    %1439 = vmatprep.subr.mxu0 0.0
    %1440 = vmatpush1.msra.mxu0 0.0
    %1441 = vmatprep.subr.mxu0 0.0
    %1442 = vmatpush1.msra.mxu0 0.0
    %1443 = vmatprep.subr.mxu0 0.0
    %1444 = vmatpush1.msra.mxu0 0.0
    %1445 = vmatprep.subr.mxu0 0.0
    %1446 = vmatpush1.msra.mxu0 0.0
    %1447 = vmatprep.subr.mxu0 0.0
    %1448 = vmatpush1.msra.mxu0 0.0
    %1449 = vmatprep.subr.mxu0 0.0
    %1450 = vmatpush1.msra.mxu0 0.0
    %1451 = vmatprep.subr.mxu0 0.0
    %1452 = vmatpush1.msra.mxu0 0.0
    %1453 = vmatprep.subr.mxu0 0.0
    %1454 = vmatpush1.msra.mxu0 0.0
    %1455 = vmatprep.subr.mxu0 0.0
    %1456 = vmatpush1.msra.mxu0 0.0
    %1457 = vmatprep.subr.mxu0 0.0
    %1458 = vmatpush1.msra.mxu0 0.0
    %1459 = vmatprep.subr.mxu0 0.0
    %1460 = vmatpush1.msra.mxu0 0.0
    %1461 = vmatprep.subr.mxu0 0.0
    %1462 = vmatpush1.msra.mxu0 0.0
    %1463 = vmatprep.subr.mxu0 0.0
    %1464 = vmatpush1.msra.mxu0 0.0
    %1465 = vmatprep.subr.mxu0 0.0
    %1466 = vmatpush1.msra.mxu0 0.0
    %1467 = vmatprep.subr.mxu0 0.0
    %1468 = vmatpush1.msra.mxu0 0.0
    %1469 = vmatprep.subr.mxu0 0.0
    %1470 = vmatpush1.msra.mxu0 0.0
    %1471 = vmatprep.subr.mxu0 0.0
    %1472 = vmatpush1.msra.mxu0 0.0
    %1473 = vmatprep.subr.mxu0 0.0
    %1474 = vmatpush1.msra.mxu0 0.0
    %1475 = vmatprep.subr.mxu0 0.0
    %1476 = vmatpush1.msra.mxu0 0.0
    %1477 = vmatprep.subr.mxu0 0.0
    %1478 = vmatpush1.msra.mxu0 0.0
    %1479 = vmatprep.subr.mxu0 0.0
    %1480 = vmatpush1.msra.mxu0 0.0
    %1481 = vmatprep.subr.mxu0 0.0
    %1482 = vmatpush1.msra.mxu0 0.0
    %1483 = vmatprep.subr.mxu0 0.0
    %1484 = vmatpush1.msra.mxu0 0.0
    %1485 = vmatprep.subr.mxu0 0.0
    %1486 = vmatpush1.msra.mxu0 0.0
    %1487 = vmatprep.subr.mxu0 0.0
    %1488 = vmatpush1.msra.mxu0 0.0
    %1489 = vmatprep.mubr.f32.mxu0 0.0
    %1490 = vmatmul.mubr.f32.gmra.mrb[0].mxu0 %v1279
    %v1491 = vpop.f32.mrb[0].mxu0
    %v1492 = vadd.f32 %v1422, %v1491
    %v1493 = vpop.f32.mrb[0].mxu0
    %1494 = vdwg.mxu0
    %v1495 = vld [vmem:[%s8] sm:$0x1]
    %v1497 = vlaneseq
    %v1498 = vshrl.u32 %v1497, 7
    %v1499 = vsub.s32 0, %v1498
    %v1500 = vrot.slane %v1495, %v1499
    %v1502 = vadd.f32 %v1492, %v1500
    %v1503 = vld [vmem:[%s9] sm:$0x1f]
    %vm1504 = vcmp.eq.s32.totalorder %v369, %v45
    %vm1505 = vcmp.eq.s32.totalorder %v45, 3
    %v1506 = vsel %vm1505, 0.0, -10000.0
    %v1507 = vadd.f32 %v1503, %v1506
    %vm1508 = vcmask 36864
    %v1509 = vsel %vm1508, %v1507, -inf
    %1510 = vmax.xlane.f32.xlu0 %v1509
    %v1511 = vpop.xlane.xlu0 %1510
    %v1512 = vsel %vm1504, %v1511, 0.0
    %vm1513 = vcmask 39936
    %v1515 = vsel %vm1513, 1.0, 0
    %vm1517 = vcmask 1044480
    %v1519 = vsel %vm1517, %v1512, 0
    %1521 = vmatprep.subr.mxu0 0.0
    %1522 = vmatpush1.msra.mxu0 %v1519
    %1523 = vmatprep.subr.mxu0 0.0
    %1524 = vmatpush1.msra.mxu0 0.0
    %1525 = vmatprep.subr.mxu0 0.0
    %1526 = vmatpush1.msra.mxu0 0.0
    %1527 = vmatprep.subr.mxu0 0.0
    %1528 = vmatpush1.msra.mxu0 0.0
    %1529 = vmatprep.subr.mxu0 0.0
    %1530 = vmatpush1.msra.mxu0 0.0
    %1531 = vmatprep.subr.mxu0 0.0
    %1532 = vmatpush1.msra.mxu0 0.0
    %1533 = vmatprep.subr.mxu0 0.0
    %1534 = vmatpush1.msra.mxu0 0.0
    %1535 = vmatprep.subr.mxu0 0.0
    %1536 = vmatpush1.msra.mxu0 0.0
    %1537 = vmatprep.subr.mxu0 0.0
    %1538 = vmatpush1.msra.mxu0 0.0
    %1539 = vmatprep.subr.mxu0 0.0
    %1540 = vmatpush1.msra.mxu0 0.0
    %1541 = vmatprep.subr.mxu0 0.0
    %1542 = vmatpush1.msra.mxu0 0.0
    %1543 = vmatprep.subr.mxu0 0.0
    %1544 = vmatpush1.msra.mxu0 0.0
    %1545 = vmatprep.subr.mxu0 0.0
    %1546 = vmatpush1.msra.mxu0 0.0
    %1547 = vmatprep.subr.mxu0 0.0
    %1548 = vmatpush1.msra.mxu0 0.0
    %1549 = vmatprep.subr.mxu0 0.0
    %1550 = vmatpush1.msra.mxu0 0.0
    %1551 = vmatprep.subr.mxu0 0.0
    %1552 = vmatpush1.msra.mxu0 0.0
    %1553 = vmatprep.subr.mxu0 0.0
    %1554 = vmatpush1.msra.mxu0 0.0
    %1555 = vmatprep.subr.mxu0 0.0
    %1556 = vmatpush1.msra.mxu0 0.0
    %1557 = vmatprep.subr.mxu0 0.0
    %1558 = vmatpush1.msra.mxu0 0.0
    %1559 = vmatprep.subr.mxu0 0.0
    %1560 = vmatpush1.msra.mxu0 0.0
    %1561 = vmatprep.subr.mxu0 0.0
    %1562 = vmatpush1.msra.mxu0 0.0
    %1563 = vmatprep.subr.mxu0 0.0
    %1564 = vmatpush1.msra.mxu0 0.0
    %1565 = vmatprep.subr.mxu0 0.0
    %1566 = vmatpush1.msra.mxu0 0.0
    %1567 = vmatprep.subr.mxu0 0.0
    %1568 = vmatpush1.msra.mxu0 0.0
    %1569 = vmatprep.subr.mxu0 0.0
    %1570 = vmatpush1.msra.mxu0 0.0
    %1571 = vmatprep.subr.mxu0 0.0
    %1572 = vmatpush1.msra.mxu0 0.0
    %1573 = vmatprep.subr.mxu0 0.0
    %1574 = vmatpush1.msra.mxu0 0.0
    %1575 = vmatprep.subr.mxu0 0.0
    %1576 = vmatpush1.msra.mxu0 0.0
    %1577 = vmatprep.subr.mxu0 0.0
    %1578 = vmatpush1.msra.mxu0 0.0
    %1579 = vmatprep.subr.mxu0 0.0
    %1580 = vmatpush1.msra.mxu0 0.0
    %1581 = vmatprep.subr.mxu0 0.0
    %1582 = vmatpush1.msra.mxu0 0.0
    %1583 = vmatprep.subr.mxu0 0.0
    %1584 = vmatpush1.msra.mxu0 0.0
    %1585 = vmatprep.mubr.f32.mxu0 0.0
    %1586 = vmatmul.mubr.f32.gmra.mrb[0].mxu0 %v1515
    %v1587 = vpop.f32.mrb[0].mxu0
    %v1588 = vadd.f32 %v1502, %v1587
    %v1589 = vpop.f32.mrb[0].mxu0
    %1590 = vdwg.mxu0
    %v1591 = vlaneseq
    %v1592 = vshrl.u32 %v1591, 7
    %v1593 = vsub.s32 0, %v1592
    %v1594 = vrot.slane %v1588, %v1593
    %v1595 = vadd.f32 %v1503, %v1594
    %v1596 = vsel %vm1508, %v1595, -inf
    %1597 = vmax.xlane.f32.xlu0 %v1596
    %v1598 = vpop.xlane.xlu0 %1597
    %vm1599 = vcmp.eq.f32.partialorder %v1595, %v1598
    %v1600 = vsel %vm1599, %v45, 5
    %v1601 = vsel %vm1508, %v1600, 2147483647
    %v1602 = vand.u32 %v1601, 65535
    %v1603 = vshra.s32 %v1601, 16
    %v1604 = vcvt.s32.f32 %v1602
    %v1605 = vcvt.s32.f32 %v1603
    %1606 = vmin.xlane.f32.xlu0 %v1605
    %v1607 = vpop.xlane.xlu0 %1606
    %vm1608 = vcmp.eq.f32.partialorder %v1605, %v1607
    %v1609 = vsel %vm1608, %v1604, inf
    %1610 = vmin.xlane.f32.xlu0 %v1609
    %v1611 = vpop.xlane.xlu0 %1610
    %v1612 = vcvt.f32.s32 %v1611
    %v1613 = vcvt.f32.s32 %v1607
    %v1614 = vshll.u32 %v1613, 16
    %v1615 = vadd.s32 %v1614, %v1612
    %v1616 = vcvt.s32.f32 %v1615
    %v1617 = vsel %vm1504, %v1598, 0.0
    %v1619 = vrot.slane %v1502, 1
    %v1622 = vsel %vm1517, %v1617, 0
    %1624 = vmatprep.subr.mxu0 0.0
    %1625 = vmatpush1.msra.mxu0 %v1622
    %1626 = vmatprep.subr.mxu0 0.0
    %1627 = vmatpush1.msra.mxu0 0.0
    %1628 = vmatprep.subr.mxu0 0.0
    %1629 = vmatpush1.msra.mxu0 0.0
    %1630 = vmatprep.subr.mxu0 0.0
    %1631 = vmatpush1.msra.mxu0 0.0
    %1632 = vmatprep.subr.mxu0 0.0
    %1633 = vmatpush1.msra.mxu0 0.0
    %1634 = vmatprep.subr.mxu0 0.0
    %1635 = vmatpush1.msra.mxu0 0.0
    %1636 = vmatprep.subr.mxu0 0.0
    %1637 = vmatpush1.msra.mxu0 0.0
    %1638 = vmatprep.subr.mxu0 0.0
    %1639 = vmatpush1.msra.mxu0 0.0
    %1640 = vmatprep.subr.mxu0 0.0
    %1641 = vmatpush1.msra.mxu0 0.0
    %1642 = vmatprep.subr.mxu0 0.0
    %1643 = vmatpush1.msra.mxu0 0.0
    %1644 = vmatprep.subr.mxu0 0.0
    %1645 = vmatpush1.msra.mxu0 0.0
    %1646 = vmatprep.subr.mxu0 0.0
    %1647 = vmatpush1.msra.mxu0 0.0
    %1648 = vmatprep.subr.mxu0 0.0
    %1649 = vmatpush1.msra.mxu0 0.0
    %1650 = vmatprep.subr.mxu0 0.0
    %1651 = vmatpush1.msra.mxu0 0.0
    %1652 = vmatprep.subr.mxu0 0.0
    %1653 = vmatpush1.msra.mxu0 0.0
    %1654 = vmatprep.subr.mxu0 0.0
    %1655 = vmatpush1.msra.mxu0 0.0
    %1656 = vmatprep.subr.mxu0 0.0
    %1657 = vmatpush1.msra.mxu0 0.0
    %1658 = vmatprep.subr.mxu0 0.0
    %1659 = vmatpush1.msra.mxu0 0.0
    %1660 = vmatprep.subr.mxu0 0.0
    %1661 = vmatpush1.msra.mxu0 0.0
    %1662 = vmatprep.subr.mxu0 0.0
    %1663 = vmatpush1.msra.mxu0 0.0
    %1664 = vmatprep.subr.mxu0 0.0
    %1665 = vmatpush1.msra.mxu0 0.0
    %1666 = vmatprep.subr.mxu0 0.0
    %1667 = vmatpush1.msra.mxu0 0.0
    %1668 = vmatprep.subr.mxu0 0.0
    %1669 = vmatpush1.msra.mxu0 0.0
    %1670 = vmatprep.subr.mxu0 0.0
    %1671 = vmatpush1.msra.mxu0 0.0
    %1672 = vmatprep.subr.mxu0 0.0
    %1673 = vmatpush1.msra.mxu0 0.0
    %1674 = vmatprep.subr.mxu0 0.0
    %1675 = vmatpush1.msra.mxu0 0.0
    %1676 = vmatprep.subr.mxu0 0.0
    %1677 = vmatpush1.msra.mxu0 0.0
    %1678 = vmatprep.subr.mxu0 0.0
    %1679 = vmatpush1.msra.mxu0 0.0
    %1680 = vmatprep.subr.mxu0 0.0
    %1681 = vmatpush1.msra.mxu0 0.0
    %1682 = vmatprep.subr.mxu0 0.0
    %1683 = vmatpush1.msra.mxu0 0.0
    %1684 = vmatprep.subr.mxu0 0.0
    %1685 = vmatpush1.msra.mxu0 0.0
    %1686 = vmatprep.subr.mxu0 0.0
    %1687 = vmatpush1.msra.mxu0 0.0
    %1688 = vmatprep.mubr.f32.mxu0 0.0
    %1689 = vmatmul.mubr.f32.gmra.mrb[0].mxu0 %v1515
    %v1690 = vpop.f32.mrb[0].mxu0
    %v1691 = vadd.f32 %v1619, %v1690
    %v1692 = vpop.f32.mrb[0].mxu0
    %1693 = vdwg.mxu0
    %v1694 = vlaneseq
    %v1695 = vshrl.u32 %v1694, 7
    %v1696 = vsub.s32 0, %v1695
    %v1697 = vrot.slane %v1691, %v1696
    %v1698 = vadd.f32 %v1503, %v1697
    %v1699 = vsel %vm1508, %v1698, -inf
    %1700 = vmax.xlane.f32.xlu0 %v1699
    %v1701 = vpop.xlane.xlu0 %1700
    %vm1702 = vcmp.eq.f32.partialorder %v1698, %v1701
    %v1703 = vsel %vm1702, %v45, 5
    %v1704 = vsel %vm1508, %v1703, 2147483647
    %v1705 = vand.u32 %v1704, 65535
    %v1706 = vshra.s32 %v1704, 16
    %v1707 = vcvt.s32.f32 %v1705
    %v1708 = vcvt.s32.f32 %v1706
    %1709 = vmin.xlane.f32.xlu0 %v1708
    %v1710 = vpop.xlane.xlu0 %1709
    %vm1711 = vcmp.eq.f32.partialorder %v1708, %v1710
    %v1712 = vsel %vm1711, %v1707, inf
    %1713 = vmin.xlane.f32.xlu0 %v1712
    %v1714 = vpop.xlane.xlu0 %1713
    %v1715 = vcvt.f32.s32 %v1714
    %v1716 = vcvt.f32.s32 %v1710
    %v1717 = vshll.u32 %v1716, 16
    %v1718 = vadd.s32 %v1717, %v1715
    %v1719 = vcvt.s32.f32 %v1718
    %v1720 = vsel %vm1504, %v1701, 0.0
    %v1721 = vrot.slane %v1502, 2
    %v1724 = vsel %vm1517, %v1720, 0
    %1726 = vmatprep.subr.mxu0 0.0
    %1727 = vmatpush1.msra.mxu0 %v1724
    %1728 = vmatprep.subr.mxu0 0.0
    %1729 = vmatpush1.msra.mxu0 0.0
    %1730 = vmatprep.subr.mxu0 0.0
    %1731 = vmatpush1.msra.mxu0 0.0
    %1732 = vmatprep.subr.mxu0 0.0
    %1733 = vmatpush1.msra.mxu0 0.0
    %1734 = vmatprep.subr.mxu0 0.0
    %1735 = vmatpush1.msra.mxu0 0.0
    %1736 = vmatprep.subr.mxu0 0.0
    %1737 = vmatpush1.msra.mxu0 0.0
    %1738 = vmatprep.subr.mxu0 0.0
    %1739 = vmatpush1.msra.mxu0 0.0
    %1740 = vmatprep.subr.mxu0 0.0
    %1741 = vmatpush1.msra.mxu0 0.0
    %1742 = vmatprep.subr.mxu0 0.0
    %1743 = vmatpush1.msra.mxu0 0.0
    %1744 = vmatprep.subr.mxu0 0.0
    %1745 = vmatpush1.msra.mxu0 0.0
    %1746 = vmatprep.subr.mxu0 0.0
    %1747 = vmatpush1.msra.mxu0 0.0
    %1748 = vmatprep.subr.mxu0 0.0
    %1749 = vmatpush1.msra.mxu0 0.0
    %1750 = vmatprep.subr.mxu0 0.0
    %1751 = vmatpush1.msra.mxu0 0.0
    %1752 = vmatprep.subr.mxu0 0.0
    %1753 = vmatpush1.msra.mxu0 0.0
    %1754 = vmatprep.subr.mxu0 0.0
    %1755 = vmatpush1.msra.mxu0 0.0
    %1756 = vmatprep.subr.mxu0 0.0
    %1757 = vmatpush1.msra.mxu0 0.0
    %1758 = vmatprep.subr.mxu0 0.0
    %1759 = vmatpush1.msra.mxu0 0.0
    %1760 = vmatprep.subr.mxu0 0.0
    %1761 = vmatpush1.msra.mxu0 0.0
    %1762 = vmatprep.subr.mxu0 0.0
    %1763 = vmatpush1.msra.mxu0 0.0
    %1764 = vmatprep.subr.mxu0 0.0
    %1765 = vmatpush1.msra.mxu0 0.0
    %1766 = vmatprep.subr.mxu0 0.0
    %1767 = vmatpush1.msra.mxu0 0.0
    %1768 = vmatprep.subr.mxu0 0.0
    %1769 = vmatpush1.msra.mxu0 0.0
    %1770 = vmatprep.subr.mxu0 0.0
    %1771 = vmatpush1.msra.mxu0 0.0
    %1772 = vmatprep.subr.mxu0 0.0
    %1773 = vmatpush1.msra.mxu0 0.0
    %1774 = vmatprep.subr.mxu0 0.0
    %1775 = vmatpush1.msra.mxu0 0.0
    %1776 = vmatprep.subr.mxu0 0.0
    %1777 = vmatpush1.msra.mxu0 0.0
    %1778 = vmatprep.subr.mxu0 0.0
    %1779 = vmatpush1.msra.mxu0 0.0
    %1780 = vmatprep.subr.mxu0 0.0
    %1781 = vmatpush1.msra.mxu0 0.0
    %1782 = vmatprep.subr.mxu0 0.0
    %1783 = vmatpush1.msra.mxu0 0.0
    %1784 = vmatprep.subr.mxu0 0.0
    %1785 = vmatpush1.msra.mxu0 0.0
    %1786 = vmatprep.subr.mxu0 0.0
    %1787 = vmatpush1.msra.mxu0 0.0
    %1788 = vmatprep.subr.mxu0 0.0
    %1789 = vmatpush1.msra.mxu0 0.0
    %1790 = vmatprep.mubr.f32.mxu0 0.0
    %1791 = vmatmul.mubr.f32.gmra.mrb[0].mxu0 %v1515
    %v1792 = vpop.f32.mrb[0].mxu0
    %v1793 = vadd.f32 %v1721, %v1792
    %v1794 = vpop.f32.mrb[0].mxu0
    %1795 = vdwg.mxu0
    %v1796 = vlaneseq
    %v1797 = vshrl.u32 %v1796, 7
    %v1798 = vsub.s32 0, %v1797
    %v1799 = vrot.slane %v1793, %v1798
    %v1800 = vadd.f32 %v1503, %v1799
    %v1801 = vsel %vm1508, %v1800, -inf
    %1802 = vmax.xlane.f32.xlu0 %v1801
    %v1803 = vpop.xlane.xlu0 %1802
    %vm1804 = vcmp.eq.f32.partialorder %v1800, %v1803
    %v1805 = vsel %vm1804, %v45, 5
    %v1806 = vsel %vm1508, %v1805, 2147483647
    %v1807 = vand.u32 %v1806, 65535
    %v1808 = vshra.s32 %v1806, 16
    %v1809 = vcvt.s32.f32 %v1807
    %v1810 = vcvt.s32.f32 %v1808
    %1811 = vmin.xlane.f32.xlu0 %v1810
    %v1812 = vpop.xlane.xlu0 %1811
    %vm1813 = vcmp.eq.f32.partialorder %v1810, %v1812
    %v1814 = vsel %vm1813, %v1809, inf
    %1815 = vmin.xlane.f32.xlu0 %v1814
    %v1816 = vpop.xlane.xlu0 %1815
    %v1817 = vcvt.f32.s32 %v1816
    %v1818 = vcvt.f32.s32 %v1812
    %v1819 = vshll.u32 %v1818, 16
    %v1820 = vadd.s32 %v1819, %v1817
    %v1821 = vcvt.s32.f32 %v1820
    %v1822 = vsel %vm1504, %v1803, 0.0
    %v1823 = vrot.slane %v1502, 3
    %v1826 = vsel %vm1517, %v1822, 0
    %1828 = vmatprep.subr.mxu0 0.0
    %1829 = vmatpush1.msra.mxu0 %v1826
    %1830 = vmatprep.subr.mxu0 0.0
    %1831 = vmatpush1.msra.mxu0 0.0
    %1832 = vmatprep.subr.mxu0 0.0
    %1833 = vmatpush1.msra.mxu0 0.0
    %1834 = vmatprep.subr.mxu0 0.0
    %1835 = vmatpush1.msra.mxu0 0.0
    %1836 = vmatprep.subr.mxu0 0.0
    %1837 = vmatpush1.msra.mxu0 0.0
    %1838 = vmatprep.subr.mxu0 0.0
    %1839 = vmatpush1.msra.mxu0 0.0
    %1840 = vmatprep.subr.mxu0 0.0
    %1841 = vmatpush1.msra.mxu0 0.0
    %1842 = vmatprep.subr.mxu0 0.0
    %1843 = vmatpush1.msra.mxu0 0.0
    %1844 = vmatprep.subr.mxu0 0.0
    %1845 = vmatpush1.msra.mxu0 0.0
    %1846 = vmatprep.subr.mxu0 0.0
    %1847 = vmatpush1.msra.mxu0 0.0
    %1848 = vmatprep.subr.mxu0 0.0
    %1849 = vmatpush1.msra.mxu0 0.0
    %1850 = vmatprep.subr.mxu0 0.0
    %1851 = vmatpush1.msra.mxu0 0.0
    %1852 = vmatprep.subr.mxu0 0.0
    %1853 = vmatpush1.msra.mxu0 0.0
    %1854 = vmatprep.subr.mxu0 0.0
    %1855 = vmatpush1.msra.mxu0 0.0
    %1856 = vmatprep.subr.mxu0 0.0
    %1857 = vmatpush1.msra.mxu0 0.0
    %1858 = vmatprep.subr.mxu0 0.0
    %1859 = vmatpush1.msra.mxu0 0.0
    %1860 = vmatprep.subr.mxu0 0.0
    %1861 = vmatpush1.msra.mxu0 0.0
    %1862 = vmatprep.subr.mxu0 0.0
    %1863 = vmatpush1.msra.mxu0 0.0
    %1864 = vmatprep.subr.mxu0 0.0
    %1865 = vmatpush1.msra.mxu0 0.0
    %1866 = vmatprep.subr.mxu0 0.0
    %1867 = vmatpush1.msra.mxu0 0.0
    %1868 = vmatprep.subr.mxu0 0.0
    %1869 = vmatpush1.msra.mxu0 0.0
    %1870 = vmatprep.subr.mxu0 0.0
    %1871 = vmatpush1.msra.mxu0 0.0
    %1872 = vmatprep.subr.mxu0 0.0
    %1873 = vmatpush1.msra.mxu0 0.0
    %1874 = vmatprep.subr.mxu0 0.0
    %1875 = vmatpush1.msra.mxu0 0.0
    %1876 = vmatprep.subr.mxu0 0.0
    %1877 = vmatpush1.msra.mxu0 0.0
    %1878 = vmatprep.subr.mxu0 0.0
    %1879 = vmatpush1.msra.mxu0 0.0
    %1880 = vmatprep.subr.mxu0 0.0
    %1881 = vmatpush1.msra.mxu0 0.0
    %1882 = vmatprep.subr.mxu0 0.0
    %1883 = vmatpush1.msra.mxu0 0.0
    %1884 = vmatprep.subr.mxu0 0.0
    %1885 = vmatpush1.msra.mxu0 0.0
    %1886 = vmatprep.subr.mxu0 0.0
    %1887 = vmatpush1.msra.mxu0 0.0
    %1888 = vmatprep.subr.mxu0 0.0
    %1889 = vmatpush1.msra.mxu0 0.0
    %1890 = vmatprep.subr.mxu0 0.0
    %1891 = vmatpush1.msra.mxu0 0.0
    %1892 = vmatprep.mubr.f32.mxu0 0.0
    %1893 = vmatmul.mubr.f32.gmra.mrb[0].mxu0 %v1515
    %v1894 = vpop.f32.mrb[0].mxu0
    %v1895 = vadd.f32 %v1823, %v1894
    %v1896 = vpop.f32.mrb[0].mxu0
    %1897 = vdwg.mxu0
    %v1898 = vlaneseq
    %v1899 = vshrl.u32 %v1898, 7
    %v1900 = vsub.s32 0, %v1899
    %v1901 = vrot.slane %v1895, %v1900
    %v1902 = vadd.f32 %v1503, %v1901
    %v1903 = vsel %vm1508, %v1902, -inf
    %1904 = vmax.xlane.f32.xlu0 %v1903
    %v1905 = vpop.xlane.xlu0 %1904
    %vm1906 = vcmp.eq.f32.partialorder %v1902, %v1905
    %v1907 = vsel %vm1906, %v45, 5
    %v1908 = vsel %vm1508, %v1907, 2147483647
    %v1909 = vand.u32 %v1908, 65535
    %v1910 = vshra.s32 %v1908, 16
    %v1911 = vcvt.s32.f32 %v1909
    %v1912 = vcvt.s32.f32 %v1910
    %1913 = vmin.xlane.f32.xlu0 %v1912
    %v1914 = vpop.xlane.xlu0 %1913
    %vm1915 = vcmp.eq.f32.partialorder %v1912, %v1914
    %v1916 = vsel %vm1915, %v1911, inf
    %1917 = vmin.xlane.f32.xlu0 %v1916
    %v1918 = vpop.xlane.xlu0 %1917
    %v1919 = vcvt.f32.s32 %v1918
    %v1920 = vcvt.f32.s32 %v1914
    %v1921 = vshll.u32 %v1920, 16
    %v1922 = vadd.s32 %v1921, %v1919
    %v1923 = vcvt.s32.f32 %v1922
    %v1924 = vsel %vm1504, %v1905, 0.0
    %v1925 = vrot.slane %v1502, 4
    %v1928 = vsel %vm1517, %v1924, 0
    %1930 = vmatprep.subr.mxu0 0.0
    %1931 = vmatpush1.msra.mxu0 %v1928
    %1932 = vmatprep.subr.mxu0 0.0
    %1933 = vmatpush1.msra.mxu0 0.0
    %1934 = vmatprep.subr.mxu0 0.0
    %1935 = vmatpush1.msra.mxu0 0.0
    %1936 = vmatprep.subr.mxu0 0.0
    %1937 = vmatpush1.msra.mxu0 0.0
    %1938 = vmatprep.subr.mxu0 0.0
    %1939 = vmatpush1.msra.mxu0 0.0
    %1940 = vmatprep.subr.mxu0 0.0
    %1941 = vmatpush1.msra.mxu0 0.0
    %1942 = vmatprep.subr.mxu0 0.0
    %1943 = vmatpush1.msra.mxu0 0.0
    %1944 = vmatprep.subr.mxu0 0.0
    %1945 = vmatpush1.msra.mxu0 0.0
    %1946 = vmatprep.subr.mxu0 0.0
    %1947 = vmatpush1.msra.mxu0 0.0
    %1948 = vmatprep.subr.mxu0 0.0
    %1949 = vmatpush1.msra.mxu0 0.0
    %1950 = vmatprep.subr.mxu0 0.0
    %1951 = vmatpush1.msra.mxu0 0.0
    %1952 = vmatprep.subr.mxu0 0.0
    %1953 = vmatpush1.msra.mxu0 0.0
    %1954 = vmatprep.subr.mxu0 0.0
    %1955 = vmatpush1.msra.mxu0 0.0
    %1956 = vmatprep.subr.mxu0 0.0
    %1957 = vmatpush1.msra.mxu0 0.0
    %1958 = vmatprep.subr.mxu0 0.0
    %1959 = vmatpush1.msra.mxu0 0.0
    %1960 = vmatprep.subr.mxu0 0.0
    %1961 = vmatpush1.msra.mxu0 0.0
    %1962 = vmatprep.subr.mxu0 0.0
    %1963 = vmatpush1.msra.mxu0 0.0
    %1964 = vmatprep.subr.mxu0 0.0
    %1965 = vmatpush1.msra.mxu0 0.0
    %1966 = vmatprep.subr.mxu0 0.0
    %1967 = vmatpush1.msra.mxu0 0.0
    %1968 = vmatprep.subr.mxu0 0.0
    %1969 = vmatpush1.msra.mxu0 0.0
    %1970 = vmatprep.subr.mxu0 0.0
    %1971 = vmatpush1.msra.mxu0 0.0
    %1972 = vmatprep.subr.mxu0 0.0
    %1973 = vmatpush1.msra.mxu0 0.0
    %1974 = vmatprep.subr.mxu0 0.0
    %1975 = vmatpush1.msra.mxu0 0.0
    %1976 = vmatprep.subr.mxu0 0.0
    %1977 = vmatpush1.msra.mxu0 0.0
    %1978 = vmatprep.subr.mxu0 0.0
    %1979 = vmatpush1.msra.mxu0 0.0
    %1980 = vmatprep.subr.mxu0 0.0
    %1981 = vmatpush1.msra.mxu0 0.0
    %1982 = vmatprep.subr.mxu0 0.0
    %1983 = vmatpush1.msra.mxu0 0.0
    %1984 = vmatprep.subr.mxu0 0.0
    %1985 = vmatpush1.msra.mxu0 0.0
    %1986 = vmatprep.subr.mxu0 0.0
    %1987 = vmatpush1.msra.mxu0 0.0
    %1988 = vmatprep.subr.mxu0 0.0
    %1989 = vmatpush1.msra.mxu0 0.0
    %1990 = vmatprep.subr.mxu0 0.0
    %1991 = vmatpush1.msra.mxu0 0.0
    %1992 = vmatprep.subr.mxu0 0.0
    %1993 = vmatpush1.msra.mxu0 0.0
    %1994 = vmatprep.mubr.f32.mxu0 0.0
    %1995 = vmatmul.mubr.f32.gmra.mrb[0].mxu0 %v1515
    %v1996 = vpop.f32.mrb[0].mxu0
    %v1997 = vadd.f32 %v1925, %v1996
    %v1998 = vpop.f32.mrb[0].mxu0
    %1999 = vdwg.mxu0
    %v2000 = vlaneseq
    %v2001 = vshrl.u32 %v2000, 7
    %v2002 = vsub.s32 0, %v2001
    %v2003 = vrot.slane %v1997, %v2002
    %v2004 = vadd.f32 %v1503, %v2003
    %v2005 = vsel %vm1508, %v2004, -inf
    %2006 = vmax.xlane.f32.xlu0 %v2005
    %v2007 = vpop.xlane.xlu0 %2006
    %vm2008 = vcmp.eq.f32.partialorder %v2004, %v2007
    %v2009 = vsel %vm2008, %v45, 5
    %v2010 = vsel %vm1508, %v2009, 2147483647
    %v2011 = vand.u32 %v2010, 65535
    %v2012 = vshra.s32 %v2010, 16
    %v2013 = vcvt.s32.f32 %v2011
    %v2014 = vcvt.s32.f32 %v2012
    %2015 = vmin.xlane.f32.xlu0 %v2014
    %v2016 = vpop.xlane.xlu0 %2015
    %vm2017 = vcmp.eq.f32.partialorder %v2014, %v2016
    %v2018 = vsel %vm2017, %v2013, inf
    %2019 = vmin.xlane.f32.xlu0 %v2018
    %v2020 = vpop.xlane.xlu0 %2019
    %v2021 = vcvt.f32.s32 %v2020
    %v2022 = vcvt.f32.s32 %v2016
    %v2023 = vshll.u32 %v2022, 16
    %v2024 = vadd.s32 %v2023, %v2021
    %v2025 = vcvt.s32.f32 %v2024
    %v2026 = vsel %vm1504, %v2007, 0.0
    %v2027 = vrot.slane %v1502, 5
    %v2030 = vsel %vm1517, %v2026, 0
    %2032 = vmatprep.subr.mxu0 0.0
    %2033 = vmatpush1.msra.mxu0 %v2030
    %2034 = vmatprep.subr.mxu0 0.0
    %2035 = vmatpush1.msra.mxu0 0.0
    %2036 = vmatprep.subr.mxu0 0.0
    %2037 = vmatpush1.msra.mxu0 0.0
    %2038 = vmatprep.subr.mxu0 0.0
    %2039 = vmatpush1.msra.mxu0 0.0
    %2040 = vmatprep.subr.mxu0 0.0
    %2041 = vmatpush1.msra.mxu0 0.0
    %2042 = vmatprep.subr.mxu0 0.0
    %2043 = vmatpush1.msra.mxu0 0.0
    %2044 = vmatprep.subr.mxu0 0.0
    %2045 = vmatpush1.msra.mxu0 0.0
    %2046 = vmatprep.subr.mxu0 0.0
    %2047 = vmatpush1.msra.mxu0 0.0
    %2048 = vmatprep.subr.mxu0 0.0
    %2049 = vmatpush1.msra.mxu0 0.0
    %2050 = vmatprep.subr.mxu0 0.0
    %2051 = vmatpush1.msra.mxu0 0.0
    %2052 = vmatprep.subr.mxu0 0.0
    %2053 = vmatpush1.msra.mxu0 0.0
    %2054 = vmatprep.subr.mxu0 0.0
    %2055 = vmatpush1.msra.mxu0 0.0
    %2056 = vmatprep.subr.mxu0 0.0
    %2057 = vmatpush1.msra.mxu0 0.0
    %2058 = vmatprep.subr.mxu0 0.0
    %2059 = vmatpush1.msra.mxu0 0.0
    %2060 = vmatprep.subr.mxu0 0.0
    %2061 = vmatpush1.msra.mxu0 0.0
    %2062 = vmatprep.subr.mxu0 0.0
    %2063 = vmatpush1.msra.mxu0 0.0
    %2064 = vmatprep.subr.mxu0 0.0
    %2065 = vmatpush1.msra.mxu0 0.0
    %2066 = vmatprep.subr.mxu0 0.0
    %2067 = vmatpush1.msra.mxu0 0.0
    %2068 = vmatprep.subr.mxu0 0.0
    %2069 = vmatpush1.msra.mxu0 0.0
    %2070 = vmatprep.subr.mxu0 0.0
    %2071 = vmatpush1.msra.mxu0 0.0
    %2072 = vmatprep.subr.mxu0 0.0
    %2073 = vmatpush1.msra.mxu0 0.0
    %2074 = vmatprep.subr.mxu0 0.0
    %2075 = vmatpush1.msra.mxu0 0.0
    %2076 = vmatprep.subr.mxu0 0.0
    %2077 = vmatpush1.msra.mxu0 0.0
    %2078 = vmatprep.subr.mxu0 0.0
    %2079 = vmatpush1.msra.mxu0 0.0
    %2080 = vmatprep.subr.mxu0 0.0
    %2081 = vmatpush1.msra.mxu0 0.0
    %2082 = vmatprep.subr.mxu0 0.0
    %2083 = vmatpush1.msra.mxu0 0.0
    %2084 = vmatprep.subr.mxu0 0.0
    %2085 = vmatpush1.msra.mxu0 0.0
    %2086 = vmatprep.subr.mxu0 0.0
    %2087 = vmatpush1.msra.mxu0 0.0
    %2088 = vmatprep.subr.mxu0 0.0
    %2089 = vmatpush1.msra.mxu0 0.0
    %2090 = vmatprep.subr.mxu0 0.0
    %2091 = vmatpush1.msra.mxu0 0.0
    %2092 = vmatprep.subr.mxu0 0.0
    %2093 = vmatpush1.msra.mxu0 0.0
    %2094 = vmatprep.subr.mxu0 0.0
    %2095 = vmatpush1.msra.mxu0 0.0
    %2096 = vmatprep.mubr.f32.mxu0 0.0
    %2097 = vmatmul.mubr.f32.gmra.mrb[0].mxu0 %v1515
    %v2098 = vpop.f32.mrb[0].mxu0
    %v2099 = vadd.f32 %v2027, %v2098
    %v2100 = vpop.f32.mrb[0].mxu0
    %2101 = vdwg.mxu0
    %v2102 = vlaneseq
    %v2103 = vshrl.u32 %v2102, 7
    %v2104 = vsub.s32 0, %v2103
    %v2105 = vrot.slane %v2099, %v2104
    %v2106 = vadd.f32 %v1503, %v2105
    %v2107 = vsel %vm1508, %v2106, -inf
    %2108 = vmax.xlane.f32.xlu0 %v2107
    %v2109 = vpop.xlane.xlu0 %2108
    %vm2110 = vcmp.eq.f32.partialorder %v2106, %v2109
    %v2111 = vsel %vm2110, %v45, 5
    %v2112 = vsel %vm1508, %v2111, 2147483647
    %v2113 = vand.u32 %v2112, 65535
    %v2114 = vshra.s32 %v2112, 16
    %v2115 = vcvt.s32.f32 %v2113
    %v2116 = vcvt.s32.f32 %v2114
    %2117 = vmin.xlane.f32.xlu0 %v2116
    %v2118 = vpop.xlane.xlu0 %2117
    %vm2119 = vcmp.eq.f32.partialorder %v2116, %v2118
    %v2120 = vsel %vm2119, %v2115, inf
    %2121 = vmin.xlane.f32.xlu0 %v2120
    %v2122 = vpop.xlane.xlu0 %2121
    %v2123 = vcvt.f32.s32 %v2122
    %v2124 = vcvt.f32.s32 %v2118
    %v2125 = vshll.u32 %v2124, 16
    %v2126 = vadd.s32 %v2125, %v2123
    %v2127 = vcvt.s32.f32 %v2126
    %v2128 = vsel %vm1504, %v2109, 0.0
    %v2129 = vrot.slane %v1502, 6
    %v2132 = vsel %vm1517, %v2128, 0
    %2134 = vmatprep.subr.mxu0 0.0
    %2135 = vmatpush1.msra.mxu0 %v2132
    %2136 = vmatprep.subr.mxu0 0.0
    %2137 = vmatpush1.msra.mxu0 0.0
    %2138 = vmatprep.subr.mxu0 0.0
    %2139 = vmatpush1.msra.mxu0 0.0
    %2140 = vmatprep.subr.mxu0 0.0
    %2141 = vmatpush1.msra.mxu0 0.0
    %2142 = vmatprep.subr.mxu0 0.0
    %2143 = vmatpush1.msra.mxu0 0.0
    %2144 = vmatprep.subr.mxu0 0.0
    %2145 = vmatpush1.msra.mxu0 0.0
    %2146 = vmatprep.subr.mxu0 0.0
    %2147 = vmatpush1.msra.mxu0 0.0
    %2148 = vmatprep.subr.mxu0 0.0
    %2149 = vmatpush1.msra.mxu0 0.0
    %2150 = vmatprep.subr.mxu0 0.0
    %2151 = vmatpush1.msra.mxu0 0.0
    %2152 = vmatprep.subr.mxu0 0.0
    %2153 = vmatpush1.msra.mxu0 0.0
    %2154 = vmatprep.subr.mxu0 0.0
    %2155 = vmatpush1.msra.mxu0 0.0
    %2156 = vmatprep.subr.mxu0 0.0
    %2157 = vmatpush1.msra.mxu0 0.0
    %2158 = vmatprep.subr.mxu0 0.0
    %2159 = vmatpush1.msra.mxu0 0.0
    %2160 = vmatprep.subr.mxu0 0.0
    %2161 = vmatpush1.msra.mxu0 0.0
    %2162 = vmatprep.subr.mxu0 0.0
    %2163 = vmatpush1.msra.mxu0 0.0
    %2164 = vmatprep.subr.mxu0 0.0
    %2165 = vmatpush1.msra.mxu0 0.0
    %2166 = vmatprep.subr.mxu0 0.0
    %2167 = vmatpush1.msra.mxu0 0.0
    %2168 = vmatprep.subr.mxu0 0.0
    %2169 = vmatpush1.msra.mxu0 0.0
    %2170 = vmatprep.subr.mxu0 0.0
    %2171 = vmatpush1.msra.mxu0 0.0
    %2172 = vmatprep.subr.mxu0 0.0
    %2173 = vmatpush1.msra.mxu0 0.0
    %2174 = vmatprep.subr.mxu0 0.0
    %2175 = vmatpush1.msra.mxu0 0.0
    %2176 = vmatprep.subr.mxu0 0.0
    %2177 = vmatpush1.msra.mxu0 0.0
    %2178 = vmatprep.subr.mxu0 0.0
    %2179 = vmatpush1.msra.mxu0 0.0
    %2180 = vmatprep.subr.mxu0 0.0
    %2181 = vmatpush1.msra.mxu0 0.0
    %2182 = vmatprep.subr.mxu0 0.0
    %2183 = vmatpush1.msra.mxu0 0.0
    %2184 = vmatprep.subr.mxu0 0.0
    %2185 = vmatpush1.msra.mxu0 0.0
    %2186 = vmatprep.subr.mxu0 0.0
    %2187 = vmatpush1.msra.mxu0 0.0
    %2188 = vmatprep.subr.mxu0 0.0
    %2189 = vmatpush1.msra.mxu0 0.0
    %2190 = vmatprep.subr.mxu0 0.0
    %2191 = vmatpush1.msra.mxu0 0.0
    %2192 = vmatprep.subr.mxu0 0.0
    %2193 = vmatpush1.msra.mxu0 0.0
    %2194 = vmatprep.subr.mxu0 0.0
    %2195 = vmatpush1.msra.mxu0 0.0
    %2196 = vmatprep.subr.mxu0 0.0
    %2197 = vmatpush1.msra.mxu0 0.0
    %2198 = vmatprep.mubr.f32.mxu0 0.0
    %2199 = vmatmul.mubr.f32.gmra.mrb[0].mxu0 %v1515
    %v2200 = vpop.f32.mrb[0].mxu0
    %v2201 = vadd.f32 %v2129, %v2200
    %v2202 = vpop.f32.mrb[0].mxu0
    %2203 = vdwg.mxu0
    %v2204 = vlaneseq
    %v2205 = vshrl.u32 %v2204, 7
    %v2206 = vsub.s32 0, %v2205
    %v2207 = vrot.slane %v2201, %v2206
    %v2208 = vadd.f32 %v1503, %v2207
    %v2209 = vsel %vm1508, %v2208, -inf
    %2210 = vmax.xlane.f32.xlu0 %v2209
    %v2211 = vpop.xlane.xlu0 %2210
    %vm2212 = vcmp.eq.f32.partialorder %v2208, %v2211
    %v2213 = vsel %vm2212, %v45, 5
    %v2214 = vsel %vm1508, %v2213, 2147483647
    %v2215 = vand.u32 %v2214, 65535
    %v2216 = vshra.s32 %v2214, 16
    %v2217 = vcvt.s32.f32 %v2215
    %v2218 = vcvt.s32.f32 %v2216
    %2219 = vmin.xlane.f32.xlu0 %v2218
    %v2220 = vpop.xlane.xlu0 %2219
    %vm2221 = vcmp.eq.f32.partialorder %v2218, %v2220
    %v2222 = vsel %vm2221, %v2217, inf
    %2223 = vmin.xlane.f32.xlu0 %v2222
    %v2224 = vpop.xlane.xlu0 %2223
    %v2225 = vcvt.f32.s32 %v2224
    %v2226 = vcvt.f32.s32 %v2220
    %v2227 = vshll.u32 %v2226, 16
    %v2228 = vadd.s32 %v2227, %v2225
    %v2229 = vcvt.s32.f32 %v2228
    %v2230 = vsel %vm1504, %v2211, 0.0
    %v2231 = vrot.slane %v1502, 7
    %v2234 = vsel %vm1517, %v2230, 0
    %2236 = vmatprep.subr.mxu0 0.0
    %2237 = vmatpush1.msra.mxu0 %v2234
    %2238 = vmatprep.subr.mxu0 0.0
    %2239 = vmatpush1.msra.mxu0 0.0
    %2240 = vmatprep.subr.mxu0 0.0
    %2241 = vmatpush1.msra.mxu0 0.0
    %2242 = vmatprep.subr.mxu0 0.0
    %2243 = vmatpush1.msra.mxu0 0.0
    %2244 = vmatprep.subr.mxu0 0.0
    %2245 = vmatpush1.msra.mxu0 0.0
    %2246 = vmatprep.subr.mxu0 0.0
    %2247 = vmatpush1.msra.mxu0 0.0
    %2248 = vmatprep.subr.mxu0 0.0
    %2249 = vmatpush1.msra.mxu0 0.0
    %2250 = vmatprep.subr.mxu0 0.0
    %2251 = vmatpush1.msra.mxu0 0.0
    %2252 = vmatprep.subr.mxu0 0.0
    %2253 = vmatpush1.msra.mxu0 0.0
    %2254 = vmatprep.subr.mxu0 0.0
    %2255 = vmatpush1.msra.mxu0 0.0
    %2256 = vmatprep.subr.mxu0 0.0
    %2257 = vmatpush1.msra.mxu0 0.0
    %2258 = vmatprep.subr.mxu0 0.0
    %2259 = vmatpush1.msra.mxu0 0.0
    %2260 = vmatprep.subr.mxu0 0.0
    %2261 = vmatpush1.msra.mxu0 0.0
    %2262 = vmatprep.subr.mxu0 0.0
    %2263 = vmatpush1.msra.mxu0 0.0
    %2264 = vmatprep.subr.mxu0 0.0
    %2265 = vmatpush1.msra.mxu0 0.0
    %2266 = vmatprep.subr.mxu0 0.0
    %2267 = vmatpush1.msra.mxu0 0.0
    %2268 = vmatprep.subr.mxu0 0.0
    %2269 = vmatpush1.msra.mxu0 0.0
    %2270 = vmatprep.subr.mxu0 0.0
    %2271 = vmatpush1.msra.mxu0 0.0
    %2272 = vmatprep.subr.mxu0 0.0
    %2273 = vmatpush1.msra.mxu0 0.0
    %2274 = vmatprep.subr.mxu0 0.0
    %2275 = vmatpush1.msra.mxu0 0.0
    %2276 = vmatprep.subr.mxu0 0.0
    %2277 = vmatpush1.msra.mxu0 0.0
    %2278 = vmatprep.subr.mxu0 0.0
    %2279 = vmatpush1.msra.mxu0 0.0
    %2280 = vmatprep.subr.mxu0 0.0
    %2281 = vmatpush1.msra.mxu0 0.0
    %2282 = vmatprep.subr.mxu0 0.0
    %2283 = vmatpush1.msra.mxu0 0.0
    %2284 = vmatprep.subr.mxu0 0.0
    %2285 = vmatpush1.msra.mxu0 0.0
    %2286 = vmatprep.subr.mxu0 0.0
    %2287 = vmatpush1.msra.mxu0 0.0
    %2288 = vmatprep.subr.mxu0 0.0
    %2289 = vmatpush1.msra.mxu0 0.0
    %2290 = vmatprep.subr.mxu0 0.0
    %2291 = vmatpush1.msra.mxu0 0.0
    %2292 = vmatprep.subr.mxu0 0.0
    %2293 = vmatpush1.msra.mxu0 0.0
    %2294 = vmatprep.subr.mxu0 0.0
    %2295 = vmatpush1.msra.mxu0 0.0
    %2296 = vmatprep.subr.mxu0 0.0
    %2297 = vmatpush1.msra.mxu0 0.0
    %2298 = vmatprep.subr.mxu0 0.0
    %2299 = vmatpush1.msra.mxu0 0.0
    %2300 = vmatprep.mubr.f32.mxu0 0.0
    %2301 = vmatmul.mubr.f32.gmra.mrb[0].mxu0 %v1515
    %v2302 = vpop.f32.mrb[0].mxu0
    %v2303 = vadd.f32 %v2231, %v2302
    %v2304 = vpop.f32.mrb[0].mxu0
    %2305 = vdwg.mxu0
    %v2307 = vrot.slane %v1503, 4
    %v2309 = vadd.f32 %v2303, %v2307
    %vm2310 = vcmask 32768
    %v2311 = vsel %vm2310, %v2309, -inf
    %2312 = vmax.xlane.f32.xlu0 %v2311
    %v2313 = vpop.xlane.xlu0 %2312
    %vm2314 = vcmp.eq.f32.partialorder %v2309, %v2313
    %v2315 = vsel %vm2314, %v45, 5
    %v2316 = vsel %vm2310, %v2315, 2147483647
    %v2317 = vand.u32 %v2316, 65535
    %v2318 = vshra.s32 %v2316, 16
    %v2319 = vcvt.s32.f32 %v2317
    %v2320 = vcvt.s32.f32 %v2318
    %2321 = vmin.xlane.f32.xlu0 %v2320
    %v2322 = vpop.xlane.xlu0 %2321
    %vm2323 = vcmp.eq.f32.partialorder %v2320, %v2322
    %v2324 = vsel %vm2323, %v2319, inf
    %2325 = vmin.xlane.f32.xlu0 %v2324
    %v2326 = vpop.xlane.xlu0 %2325
    %v2327 = vcvt.f32.s32 %v2326
    %v2328 = vcvt.f32.s32 %v2322
    %v2329 = vshll.u32 %v2328, 16
    %v2330 = vadd.s32 %v2329, %v2327
    %vm2331 = vcmp.eq.s32.totalorder %v45, 7
    %v2332 = vsel %vm2331, %v2330, 0
    %v2333 = vlaneseq
    %v2334 = vshrl.u32 %v2333, 7
    %v2335 = vsub.s32 0, %v2334
    %v2336 = vrot.slane %v2330, %v2335
    %vm2337 = vcmp.eq.s32.totalorder %v369, %v2336
    %v2338 = vsel %vm2337, %v2229, 0.0
    %v2340 = vsel %vm1517, %v2338, 0
    %2342 = vmatprep.subr.mxu0 0.0
    %2343 = vmatpush1.msra.mxu0 %v2340
    %2344 = vmatprep.subr.mxu0 0.0
    %2345 = vmatpush1.msra.mxu0 0.0
    %2346 = vmatprep.subr.mxu0 0.0
    %2347 = vmatpush1.msra.mxu0 0.0
    %2348 = vmatprep.subr.mxu0 0.0
    %2349 = vmatpush1.msra.mxu0 0.0
    %2350 = vmatprep.subr.mxu0 0.0
    %2351 = vmatpush1.msra.mxu0 0.0
    %2352 = vmatprep.subr.mxu0 0.0
    %2353 = vmatpush1.msra.mxu0 0.0
    %2354 = vmatprep.subr.mxu0 0.0
    %2355 = vmatpush1.msra.mxu0 0.0
    %2356 = vmatprep.subr.mxu0 0.0
    %2357 = vmatpush1.msra.mxu0 0.0
    %2358 = vmatprep.subr.mxu0 0.0
    %2359 = vmatpush1.msra.mxu0 0.0
    %2360 = vmatprep.subr.mxu0 0.0
    %2361 = vmatpush1.msra.mxu0 0.0
    %2362 = vmatprep.subr.mxu0 0.0
    %2363 = vmatpush1.msra.mxu0 0.0
    %2364 = vmatprep.subr.mxu0 0.0
    %2365 = vmatpush1.msra.mxu0 0.0
    %2366 = vmatprep.subr.mxu0 0.0
    %2367 = vmatpush1.msra.mxu0 0.0
    %2368 = vmatprep.subr.mxu0 0.0
    %2369 = vmatpush1.msra.mxu0 0.0
    %2370 = vmatprep.subr.mxu0 0.0
    %2371 = vmatpush1.msra.mxu0 0.0
    %2372 = vmatprep.subr.mxu0 0.0
    %2373 = vmatpush1.msra.mxu0 0.0
    %2374 = vmatprep.subr.mxu0 0.0
    %2375 = vmatpush1.msra.mxu0 0.0
    %2376 = vmatprep.subr.mxu0 0.0
    %2377 = vmatpush1.msra.mxu0 0.0
    %2378 = vmatprep.subr.mxu0 0.0
    %2379 = vmatpush1.msra.mxu0 0.0
    %2380 = vmatprep.subr.mxu0 0.0
    %2381 = vmatpush1.msra.mxu0 0.0
    %2382 = vmatprep.subr.mxu0 0.0
    %2383 = vmatpush1.msra.mxu0 0.0
    %2384 = vmatprep.subr.mxu0 0.0
    %2385 = vmatpush1.msra.mxu0 0.0
    %2386 = vmatprep.subr.mxu0 0.0
    %2387 = vmatpush1.msra.mxu0 0.0
    %2388 = vmatprep.subr.mxu0 0.0
    %2389 = vmatpush1.msra.mxu0 0.0
    %2390 = vmatprep.subr.mxu0 0.0
    %2391 = vmatpush1.msra.mxu0 0.0
    %2392 = vmatprep.subr.mxu0 0.0
    %2393 = vmatpush1.msra.mxu0 0.0
    %2394 = vmatprep.subr.mxu0 0.0
    %2395 = vmatpush1.msra.mxu0 0.0
    %2396 = vmatprep.subr.mxu0 0.0
    %2397 = vmatpush1.msra.mxu0 0.0
    %2398 = vmatprep.subr.mxu0 0.0
    %2399 = vmatpush1.msra.mxu0 0.0
    %2400 = vmatprep.subr.mxu0 0.0
    %2401 = vmatpush1.msra.mxu0 0.0
    %2402 = vmatprep.subr.mxu0 0.0
    %2403 = vmatpush1.msra.mxu0 0.0
    %2404 = vmatprep.subr.mxu0 0.0
    %2405 = vmatpush1.msra.mxu0 0.0
    %2406 = vmatprep.mubr.f32.mxu0 0.0
    %2407 = vmatmul.mubr.f32.gmra.mrb[0].mxu0 %v1515
    %v2408 = vpop.f32.mrb[0].mxu0
    %v2409 = vadd.f32 0.5, %v2408
    %v2410 = vpop.f32.mrb[0].mxu0
    %2411 = vdwg.mxu0
    %v2412 = vcvt.f32.s32.to.zero.pseudo %v2409
    %vm2413 = vcmp.eq.s32.totalorder %v45, 6
    %2414 = vset.pattern.permute.xlu0 0
    %2415 = vperm.xlu0 %2414, %v2412
    %v2416 = vpop.permute.xlu0 %2415
    %v2417 = vsel %vm2413, %v2416, %v2332
    %v2418 = vlaneseq
    %v2419 = vshrl.u32 %v2418, 7
    %v2420 = vsub.s32 0, %v2419
    %v2421 = vrot.slane %v2412, %v2420
    %vm2422 = vcmp.eq.s32.totalorder %v369, %v2421
    %v2423 = vsel %vm2422, %v2127, 0.0
    %v2425 = vsel %vm1517, %v2423, 0
    %2427 = vmatprep.subr.mxu0 0.0
    %2428 = vmatpush1.msra.mxu0 %v2425
    %2429 = vmatprep.subr.mxu0 0.0
    %2430 = vmatpush1.msra.mxu0 0.0
    %2431 = vmatprep.subr.mxu0 0.0
    %2432 = vmatpush1.msra.mxu0 0.0
    %2433 = vmatprep.subr.mxu0 0.0
    %2434 = vmatpush1.msra.mxu0 0.0
    %2435 = vmatprep.subr.mxu0 0.0
    %2436 = vmatpush1.msra.mxu0 0.0
    %2437 = vmatprep.subr.mxu0 0.0
    %2438 = vmatpush1.msra.mxu0 0.0
    %2439 = vmatprep.subr.mxu0 0.0
    %2440 = vmatpush1.msra.mxu0 0.0
    %2441 = vmatprep.subr.mxu0 0.0
    %2442 = vmatpush1.msra.mxu0 0.0
    %2443 = vmatprep.subr.mxu0 0.0
    %2444 = vmatpush1.msra.mxu0 0.0
    %2445 = vmatprep.subr.mxu0 0.0
    %2446 = vmatpush1.msra.mxu0 0.0
    %2447 = vmatprep.subr.mxu0 0.0
    %2448 = vmatpush1.msra.mxu0 0.0
    %2449 = vmatprep.subr.mxu0 0.0
    %2450 = vmatpush1.msra.mxu0 0.0
    %2451 = vmatprep.subr.mxu0 0.0
    %2452 = vmatpush1.msra.mxu0 0.0
    %2453 = vmatprep.subr.mxu0 0.0
    %2454 = vmatpush1.msra.mxu0 0.0
    %2455 = vmatprep.subr.mxu0 0.0
    %2456 = vmatpush1.msra.mxu0 0.0
    %2457 = vmatprep.subr.mxu0 0.0
    %2458 = vmatpush1.msra.mxu0 0.0
    %2459 = vmatprep.subr.mxu0 0.0
    %2460 = vmatpush1.msra.mxu0 0.0
    %2461 = vmatprep.subr.mxu0 0.0
    %2462 = vmatpush1.msra.mxu0 0.0
    %2463 = vmatprep.subr.mxu0 0.0
    %2464 = vmatpush1.msra.mxu0 0.0
    %2465 = vmatprep.subr.mxu0 0.0
    %2466 = vmatpush1.msra.mxu0 0.0
    %2467 = vmatprep.subr.mxu0 0.0
    %2468 = vmatpush1.msra.mxu0 0.0
    %2469 = vmatprep.subr.mxu0 0.0
    %2470 = vmatpush1.msra.mxu0 0.0
    %2471 = vmatprep.subr.mxu0 0.0
    %2472 = vmatpush1.msra.mxu0 0.0
    %2473 = vmatprep.subr.mxu0 0.0
    %2474 = vmatpush1.msra.mxu0 0.0
    %2475 = vmatprep.subr.mxu0 0.0
    %2476 = vmatpush1.msra.mxu0 0.0
    %2477 = vmatprep.subr.mxu0 0.0
    %2478 = vmatpush1.msra.mxu0 0.0
    %2479 = vmatprep.subr.mxu0 0.0
    %2480 = vmatpush1.msra.mxu0 0.0
    %2481 = vmatprep.subr.mxu0 0.0
    %2482 = vmatpush1.msra.mxu0 0.0
    %2483 = vmatprep.subr.mxu0 0.0
    %2484 = vmatpush1.msra.mxu0 0.0
    %2485 = vmatprep.subr.mxu0 0.0
    %2486 = vmatpush1.msra.mxu0 0.0
    %2487 = vmatprep.subr.mxu0 0.0
    %2488 = vmatpush1.msra.mxu0 0.0
    %2489 = vmatprep.subr.mxu0 0.0
    %2490 = vmatpush1.msra.mxu0 0.0
    %2491 = vmatprep.mubr.f32.mxu0 0.0
    %2492 = vmatmul.mubr.f32.gmra.mrb[0].mxu0 %v1515
    %v2493 = vpop.f32.mrb[0].mxu0
    %v2494 = vadd.f32 0.5, %v2493
    %v2495 = vpop.f32.mrb[0].mxu0
    %2496 = vdwg.mxu0
    %v2497 = vcvt.f32.s32.to.zero.pseudo %v2494
    %vm2498 = vcmp.eq.s32.totalorder %v45, 5
    %2499 = vset.pattern.permute.xlu0 0
    %2500 = vperm.xlu0 %2499, %v2497
    %v2501 = vpop.permute.xlu0 %2500
    %v2502 = vsel %vm2498, %v2501, %v2417
    %v2503 = vlaneseq
    %v2504 = vshrl.u32 %v2503, 7
    %v2505 = vsub.s32 0, %v2504
    %v2506 = vrot.slane %v2497, %v2505
    %vm2507 = vcmp.eq.s32.totalorder %v369, %v2506
    %v2508 = vsel %vm2507, %v2025, 0.0
    %v2510 = vsel %vm1517, %v2508, 0
    %2512 = vmatprep.subr.mxu0 0.0
    %2513 = vmatpush1.msra.mxu0 %v2510
    %2514 = vmatprep.subr.mxu0 0.0
    %2515 = vmatpush1.msra.mxu0 0.0
    %2516 = vmatprep.subr.mxu0 0.0
    %2517 = vmatpush1.msra.mxu0 0.0
    %2518 = vmatprep.subr.mxu0 0.0
    %2519 = vmatpush1.msra.mxu0 0.0
    %2520 = vmatprep.subr.mxu0 0.0
    %2521 = vmatpush1.msra.mxu0 0.0
    %2522 = vmatprep.subr.mxu0 0.0
    %2523 = vmatpush1.msra.mxu0 0.0
    %2524 = vmatprep.subr.mxu0 0.0
    %2525 = vmatpush1.msra.mxu0 0.0
    %2526 = vmatprep.subr.mxu0 0.0
    %2527 = vmatpush1.msra.mxu0 0.0
    %2528 = vmatprep.subr.mxu0 0.0
    %2529 = vmatpush1.msra.mxu0 0.0
    %2530 = vmatprep.subr.mxu0 0.0
    %2531 = vmatpush1.msra.mxu0 0.0
    %2532 = vmatprep.subr.mxu0 0.0
    %2533 = vmatpush1.msra.mxu0 0.0
    %2534 = vmatprep.subr.mxu0 0.0
    %2535 = vmatpush1.msra.mxu0 0.0
    %2536 = vmatprep.subr.mxu0 0.0
    %2537 = vmatpush1.msra.mxu0 0.0
    %2538 = vmatprep.subr.mxu0 0.0
    %2539 = vmatpush1.msra.mxu0 0.0
    %2540 = vmatprep.subr.mxu0 0.0
    %2541 = vmatpush1.msra.mxu0 0.0
    %2542 = vmatprep.subr.mxu0 0.0
    %2543 = vmatpush1.msra.mxu0 0.0
    %2544 = vmatprep.subr.mxu0 0.0
    %2545 = vmatpush1.msra.mxu0 0.0
    %2546 = vmatprep.subr.mxu0 0.0
    %2547 = vmatpush1.msra.mxu0 0.0
    %2548 = vmatprep.subr.mxu0 0.0
    %2549 = vmatpush1.msra.mxu0 0.0
    %2550 = vmatprep.subr.mxu0 0.0
    %2551 = vmatpush1.msra.mxu0 0.0
    %2552 = vmatprep.subr.mxu0 0.0
    %2553 = vmatpush1.msra.mxu0 0.0
    %2554 = vmatprep.subr.mxu0 0.0
    %2555 = vmatpush1.msra.mxu0 0.0
    %2556 = vmatprep.subr.mxu0 0.0
    %2557 = vmatpush1.msra.mxu0 0.0
    %2558 = vmatprep.subr.mxu0 0.0
    %2559 = vmatpush1.msra.mxu0 0.0
    %2560 = vmatprep.subr.mxu0 0.0
    %2561 = vmatpush1.msra.mxu0 0.0
    %2562 = vmatprep.subr.mxu0 0.0
    %2563 = vmatpush1.msra.mxu0 0.0
    %2564 = vmatprep.subr.mxu0 0.0
    %2565 = vmatpush1.msra.mxu0 0.0
    %2566 = vmatprep.subr.mxu0 0.0
    %2567 = vmatpush1.msra.mxu0 0.0
    %2568 = vmatprep.subr.mxu0 0.0
    %2569 = vmatpush1.msra.mxu0 0.0
    %2570 = vmatprep.subr.mxu0 0.0
    %2571 = vmatpush1.msra.mxu0 0.0
    %2572 = vmatprep.subr.mxu0 0.0
    %2573 = vmatpush1.msra.mxu0 0.0
    %2574 = vmatprep.subr.mxu0 0.0
    %2575 = vmatpush1.msra.mxu0 0.0
    %2576 = vmatprep.mubr.f32.mxu0 0.0
    %2577 = vmatmul.mubr.f32.gmra.mrb[0].mxu0 %v1515
    %v2578 = vpop.f32.mrb[0].mxu0
    %v2579 = vadd.f32 0.5, %v2578
    %v2580 = vpop.f32.mrb[0].mxu0
    %2581 = vdwg.mxu0
    %v2582 = vcvt.f32.s32.to.zero.pseudo %v2579
    %vm2583 = vcmp.eq.s32.totalorder %v45, 4
    %2584 = vset.pattern.permute.xlu0 0
    %2585 = vperm.xlu0 %2584, %v2582
    %v2586 = vpop.permute.xlu0 %2585
    %v2587 = vsel %vm2583, %v2586, %v2502
    %v2588 = vlaneseq
    %v2589 = vshrl.u32 %v2588, 7
    %v2590 = vsub.s32 0, %v2589
    %v2591 = vrot.slane %v2582, %v2590
    %vm2592 = vcmp.eq.s32.totalorder %v369, %v2591
    %v2593 = vsel %vm2592, %v1923, 0.0
    %v2595 = vsel %vm1517, %v2593, 0
    %2597 = vmatprep.subr.mxu0 0.0
    %2598 = vmatpush1.msra.mxu0 %v2595
    %2599 = vmatprep.subr.mxu0 0.0
    %2600 = vmatpush1.msra.mxu0 0.0
    %2601 = vmatprep.subr.mxu0 0.0
    %2602 = vmatpush1.msra.mxu0 0.0
    %2603 = vmatprep.subr.mxu0 0.0
    %2604 = vmatpush1.msra.mxu0 0.0
    %2605 = vmatprep.subr.mxu0 0.0
    %2606 = vmatpush1.msra.mxu0 0.0
    %2607 = vmatprep.subr.mxu0 0.0
    %2608 = vmatpush1.msra.mxu0 0.0
    %2609 = vmatprep.subr.mxu0 0.0
    %2610 = vmatpush1.msra.mxu0 0.0
    %2611 = vmatprep.subr.mxu0 0.0
    %2612 = vmatpush1.msra.mxu0 0.0
    %2613 = vmatprep.subr.mxu0 0.0
    %2614 = vmatpush1.msra.mxu0 0.0
    %2615 = vmatprep.subr.mxu0 0.0
    %2616 = vmatpush1.msra.mxu0 0.0
    %2617 = vmatprep.subr.mxu0 0.0
    %2618 = vmatpush1.msra.mxu0 0.0
    %2619 = vmatprep.subr.mxu0 0.0
    %2620 = vmatpush1.msra.mxu0 0.0
    %2621 = vmatprep.subr.mxu0 0.0
    %2622 = vmatpush1.msra.mxu0 0.0
    %2623 = vmatprep.subr.mxu0 0.0
    %2624 = vmatpush1.msra.mxu0 0.0
    %2625 = vmatprep.subr.mxu0 0.0
    %2626 = vmatpush1.msra.mxu0 0.0
    %2627 = vmatprep.subr.mxu0 0.0
    %2628 = vmatpush1.msra.mxu0 0.0
    %2629 = vmatprep.subr.mxu0 0.0
    %2630 = vmatpush1.msra.mxu0 0.0
    %2631 = vmatprep.subr.mxu0 0.0
    %2632 = vmatpush1.msra.mxu0 0.0
    %2633 = vmatprep.subr.mxu0 0.0
    %2634 = vmatpush1.msra.mxu0 0.0
    %2635 = vmatprep.subr.mxu0 0.0
    %2636 = vmatpush1.msra.mxu0 0.0
    %2637 = vmatprep.subr.mxu0 0.0
    %2638 = vmatpush1.msra.mxu0 0.0
    %2639 = vmatprep.subr.mxu0 0.0
    %2640 = vmatpush1.msra.mxu0 0.0
    %2641 = vmatprep.subr.mxu0 0.0
    %2642 = vmatpush1.msra.mxu0 0.0
    %2643 = vmatprep.subr.mxu0 0.0
    %2644 = vmatpush1.msra.mxu0 0.0
    %2645 = vmatprep.subr.mxu0 0.0
    %2646 = vmatpush1.msra.mxu0 0.0
    %2647 = vmatprep.subr.mxu0 0.0
    %2648 = vmatpush1.msra.mxu0 0.0
    %2649 = vmatprep.subr.mxu0 0.0
    %2650 = vmatpush1.msra.mxu0 0.0
    %2651 = vmatprep.subr.mxu0 0.0
    %2652 = vmatpush1.msra.mxu0 0.0
    %2653 = vmatprep.subr.mxu0 0.0
    %2654 = vmatpush1.msra.mxu0 0.0
    %2655 = vmatprep.subr.mxu0 0.0
    %2656 = vmatpush1.msra.mxu0 0.0
    %2657 = vmatprep.subr.mxu0 0.0
    %2658 = vmatpush1.msra.mxu0 0.0
    %2659 = vmatprep.subr.mxu0 0.0
    %2660 = vmatpush1.msra.mxu0 0.0
    %2661 = vmatprep.mubr.f32.mxu0 0.0
    %2662 = vmatmul.mubr.f32.gmra.mrb[0].mxu0 %v1515
    %v2663 = vpop.f32.mrb[0].mxu0
    %v2664 = vadd.f32 0.5, %v2663
    %v2665 = vpop.f32.mrb[0].mxu0
    %2666 = vdwg.mxu0
    %v2667 = vcvt.f32.s32.to.zero.pseudo %v2664
    %2668 = vset.pattern.permute.xlu0 0
    %2669 = vperm.xlu0 %2668, %v2667
    %v2670 = vpop.permute.xlu0 %2669
    %v2671 = vsel %vm1505, %v2670, %v2587
    %v2672 = vlaneseq
    %v2673 = vshrl.u32 %v2672, 7
    %v2674 = vsub.s32 0, %v2673
    %v2675 = vrot.slane %v2667, %v2674
    %vm2676 = vcmp.eq.s32.totalorder %v369, %v2675
    %v2677 = vsel %vm2676, %v1821, 0.0
    %v2679 = vsel %vm1517, %v2677, 0
    %2681 = vmatprep.subr.mxu0 0.0
    %2682 = vmatpush1.msra.mxu0 %v2679
    %2683 = vmatprep.subr.mxu0 0.0
    %2684 = vmatpush1.msra.mxu0 0.0
    %2685 = vmatprep.subr.mxu0 0.0
    %2686 = vmatpush1.msra.mxu0 0.0
    %2687 = vmatprep.subr.mxu0 0.0
    %2688 = vmatpush1.msra.mxu0 0.0
    %2689 = vmatprep.subr.mxu0 0.0
    %2690 = vmatpush1.msra.mxu0 0.0
    %2691 = vmatprep.subr.mxu0 0.0
    %2692 = vmatpush1.msra.mxu0 0.0
    %2693 = vmatprep.subr.mxu0 0.0
    %2694 = vmatpush1.msra.mxu0 0.0
    %2695 = vmatprep.subr.mxu0 0.0
    %2696 = vmatpush1.msra.mxu0 0.0
    %2697 = vmatprep.subr.mxu0 0.0
    %2698 = vmatpush1.msra.mxu0 0.0
    %2699 = vmatprep.subr.mxu0 0.0
    %2700 = vmatpush1.msra.mxu0 0.0
    %2701 = vmatprep.subr.mxu0 0.0
    %2702 = vmatpush1.msra.mxu0 0.0
    %2703 = vmatprep.subr.mxu0 0.0
    %2704 = vmatpush1.msra.mxu0 0.0
    %2705 = vmatprep.subr.mxu0 0.0
    %2706 = vmatpush1.msra.mxu0 0.0
    %2707 = vmatprep.subr.mxu0 0.0
    %2708 = vmatpush1.msra.mxu0 0.0
    %2709 = vmatprep.subr.mxu0 0.0
    %2710 = vmatpush1.msra.mxu0 0.0
    %2711 = vmatprep.subr.mxu0 0.0
    %2712 = vmatpush1.msra.mxu0 0.0
    %2713 = vmatprep.subr.mxu0 0.0
    %2714 = vmatpush1.msra.mxu0 0.0
    %2715 = vmatprep.subr.mxu0 0.0
    %2716 = vmatpush1.msra.mxu0 0.0
    %2717 = vmatprep.subr.mxu0 0.0
    %2718 = vmatpush1.msra.mxu0 0.0
    %2719 = vmatprep.subr.mxu0 0.0
    %2720 = vmatpush1.msra.mxu0 0.0
    %2721 = vmatprep.subr.mxu0 0.0
    %2722 = vmatpush1.msra.mxu0 0.0
    %2723 = vmatprep.subr.mxu0 0.0
    %2724 = vmatpush1.msra.mxu0 0.0
    %2725 = vmatprep.subr.mxu0 0.0
    %2726 = vmatpush1.msra.mxu0 0.0
    %2727 = vmatprep.subr.mxu0 0.0
    %2728 = vmatpush1.msra.mxu0 0.0
    %2729 = vmatprep.subr.mxu0 0.0
    %2730 = vmatpush1.msra.mxu0 0.0
    %2731 = vmatprep.subr.mxu0 0.0
    %2732 = vmatpush1.msra.mxu0 0.0
    %2733 = vmatprep.subr.mxu0 0.0
    %2734 = vmatpush1.msra.mxu0 0.0
    %2735 = vmatprep.subr.mxu0 0.0
    %2736 = vmatpush1.msra.mxu0 0.0
    %2737 = vmatprep.subr.mxu0 0.0
    %2738 = vmatpush1.msra.mxu0 0.0
    %2739 = vmatprep.subr.mxu0 0.0
    %2740 = vmatpush1.msra.mxu0 0.0
    %2741 = vmatprep.subr.mxu0 0.0
    %2742 = vmatpush1.msra.mxu0 0.0
    %2743 = vmatprep.subr.mxu0 0.0
    %2744 = vmatpush1.msra.mxu0 0.0
    %2745 = vmatprep.mubr.f32.mxu0 0.0
    %2746 = vmatmul.mubr.f32.gmra.mrb[0].mxu0 %v1515
    %v2747 = vpop.f32.mrb[0].mxu0
    %v2748 = vadd.f32 0.5, %v2747
    %v2749 = vpop.f32.mrb[0].mxu0
    %2750 = vdwg.mxu0
    %v2751 = vcvt.f32.s32.to.zero.pseudo %v2748
    %vm2752 = vcmp.eq.s32.totalorder %v45, 2
    %2753 = vset.pattern.permute.xlu0 0
    %2754 = vperm.xlu0 %2753, %v2751
    %v2755 = vpop.permute.xlu0 %2754
    %v2756 = vsel %vm2752, %v2755, %v2671
    %v2757 = vlaneseq
    %v2758 = vshrl.u32 %v2757, 7
    %v2759 = vsub.s32 0, %v2758
    %v2760 = vrot.slane %v2751, %v2759
    %vm2761 = vcmp.eq.s32.totalorder %v369, %v2760
    %v2762 = vsel %vm2761, %v1719, 0.0
    %v2764 = vsel %vm1517, %v2762, 0
    %2766 = vmatprep.subr.mxu0 0.0
    %2767 = vmatpush1.msra.mxu0 %v2764
    %2768 = vmatprep.subr.mxu0 0.0
    %2769 = vmatpush1.msra.mxu0 0.0
    %2770 = vmatprep.subr.mxu0 0.0
    %2771 = vmatpush1.msra.mxu0 0.0
    %2772 = vmatprep.subr.mxu0 0.0
    %2773 = vmatpush1.msra.mxu0 0.0
    %2774 = vmatprep.subr.mxu0 0.0
    %2775 = vmatpush1.msra.mxu0 0.0
    %2776 = vmatprep.subr.mxu0 0.0
    %2777 = vmatpush1.msra.mxu0 0.0
    %2778 = vmatprep.subr.mxu0 0.0
    %2779 = vmatpush1.msra.mxu0 0.0
    %2780 = vmatprep.subr.mxu0 0.0
    %2781 = vmatpush1.msra.mxu0 0.0
    %2782 = vmatprep.subr.mxu0 0.0
    %2783 = vmatpush1.msra.mxu0 0.0
    %2784 = vmatprep.subr.mxu0 0.0
    %2785 = vmatpush1.msra.mxu0 0.0
    %2786 = vmatprep.subr.mxu0 0.0
    %2787 = vmatpush1.msra.mxu0 0.0
    %2788 = vmatprep.subr.mxu0 0.0
    %2789 = vmatpush1.msra.mxu0 0.0
    %2790 = vmatprep.subr.mxu0 0.0
    %2791 = vmatpush1.msra.mxu0 0.0
    %2792 = vmatprep.subr.mxu0 0.0
    %2793 = vmatpush1.msra.mxu0 0.0
    %2794 = vmatprep.subr.mxu0 0.0
    %2795 = vmatpush1.msra.mxu0 0.0
    %2796 = vmatprep.subr.mxu0 0.0
    %2797 = vmatpush1.msra.mxu0 0.0
    %2798 = vmatprep.subr.mxu0 0.0
    %2799 = vmatpush1.msra.mxu0 0.0
    %2800 = vmatprep.subr.mxu0 0.0
    %2801 = vmatpush1.msra.mxu0 0.0
    %2802 = vmatprep.subr.mxu0 0.0
    %2803 = vmatpush1.msra.mxu0 0.0
    %2804 = vmatprep.subr.mxu0 0.0
    %2805 = vmatpush1.msra.mxu0 0.0
    %2806 = vmatprep.subr.mxu0 0.0
    %2807 = vmatpush1.msra.mxu0 0.0
    %2808 = vmatprep.subr.mxu0 0.0
    %2809 = vmatpush1.msra.mxu0 0.0
    %2810 = vmatprep.subr.mxu0 0.0
    %2811 = vmatpush1.msra.mxu0 0.0
    %2812 = vmatprep.subr.mxu0 0.0
    %2813 = vmatpush1.msra.mxu0 0.0
    %2814 = vmatprep.subr.mxu0 0.0
    %2815 = vmatpush1.msra.mxu0 0.0
    %2816 = vmatprep.subr.mxu0 0.0
    %2817 = vmatpush1.msra.mxu0 0.0
    %2818 = vmatprep.subr.mxu0 0.0
    %2819 = vmatpush1.msra.mxu0 0.0
    %2820 = vmatprep.subr.mxu0 0.0
    %2821 = vmatpush1.msra.mxu0 0.0
    %2822 = vmatprep.subr.mxu0 0.0
    %2823 = vmatpush1.msra.mxu0 0.0
    %2824 = vmatprep.subr.mxu0 0.0
    %2825 = vmatpush1.msra.mxu0 0.0
    %2826 = vmatprep.subr.mxu0 0.0
    %2827 = vmatpush1.msra.mxu0 0.0
    %2828 = vmatprep.subr.mxu0 0.0
    %2829 = vmatpush1.msra.mxu0 0.0
    %2830 = vmatprep.mubr.f32.mxu0 0.0
    %2831 = vmatmul.mubr.f32.gmra.mrb[0].mxu0 %v1515
    %v2832 = vpop.f32.mrb[0].mxu0
    %v2833 = vadd.f32 0.5, %v2832
    %v2834 = vpop.f32.mrb[0].mxu0
    %2835 = vdwg.mxu0
    %v2836 = vcvt.f32.s32.to.zero.pseudo %v2833
    %vm2837 = vcmp.eq.s32.totalorder %v45, 1
    %2838 = vset.pattern.permute.xlu0 0
    %2839 = vperm.xlu0 %2838, %v2836
    %v2840 = vpop.permute.xlu0 %2839
    %v2841 = vsel %vm2837, %v2840, %v2756
    %v2842 = vlaneseq
    %v2843 = vshrl.u32 %v2842, 7
    %v2844 = vsub.s32 0, %v2843
    %v2845 = vrot.slane %v2836, %v2844
    %vm2846 = vcmp.eq.s32.totalorder %v369, %v2845
    %v2847 = vsel %vm2846, %v1616, 0.0
    %v2849 = vsel %vm1517, %v2847, 0
    %2851 = vmatprep.subr.mxu0 0.0
    %2852 = vmatpush1.msra.mxu0 %v2849
    %2853 = vmatprep.subr.mxu0 0.0
    %2854 = vmatpush1.msra.mxu0 0.0
    %2855 = vmatprep.subr.mxu0 0.0
    %2856 = vmatpush1.msra.mxu0 0.0
    %2857 = vmatprep.subr.mxu0 0.0
    %2858 = vmatpush1.msra.mxu0 0.0
    %2859 = vmatprep.subr.mxu0 0.0
    %2860 = vmatpush1.msra.mxu0 0.0
    %2861 = vmatprep.subr.mxu0 0.0
    %2862 = vmatpush1.msra.mxu0 0.0
    %2863 = vmatprep.subr.mxu0 0.0
    %2864 = vmatpush1.msra.mxu0 0.0
    %2865 = vmatprep.subr.mxu0 0.0
    %2866 = vmatpush1.msra.mxu0 0.0
    %2867 = vmatprep.subr.mxu0 0.0
    %2868 = vmatpush1.msra.mxu0 0.0
    %2869 = vmatprep.subr.mxu0 0.0
    %2870 = vmatpush1.msra.mxu0 0.0
    %2871 = vmatprep.subr.mxu0 0.0
    %2872 = vmatpush1.msra.mxu0 0.0
    %2873 = vmatprep.subr.mxu0 0.0
    %2874 = vmatpush1.msra.mxu0 0.0
    %2875 = vmatprep.subr.mxu0 0.0
    %2876 = vmatpush1.msra.mxu0 0.0
    %2877 = vmatprep.subr.mxu0 0.0
    %2878 = vmatpush1.msra.mxu0 0.0
    %2879 = vmatprep.subr.mxu0 0.0
    %2880 = vmatpush1.msra.mxu0 0.0
    %2881 = vmatprep.subr.mxu0 0.0
    %2882 = vmatpush1.msra.mxu0 0.0
    %2883 = vmatprep.subr.mxu0 0.0
    %2884 = vmatpush1.msra.mxu0 0.0
    %2885 = vmatprep.subr.mxu0 0.0
    %2886 = vmatpush1.msra.mxu0 0.0
    %2887 = vmatprep.subr.mxu0 0.0
    %2888 = vmatpush1.msra.mxu0 0.0
    %2889 = vmatprep.subr.mxu0 0.0
    %2890 = vmatpush1.msra.mxu0 0.0
    %2891 = vmatprep.subr.mxu0 0.0
    %2892 = vmatpush1.msra.mxu0 0.0
    %2893 = vmatprep.subr.mxu0 0.0
    %2894 = vmatpush1.msra.mxu0 0.0
    %2895 = vmatprep.subr.mxu0 0.0
    %2896 = vmatpush1.msra.mxu0 0.0
    %2897 = vmatprep.subr.mxu0 0.0
    %2898 = vmatpush1.msra.mxu0 0.0
    %2899 = vmatprep.subr.mxu0 0.0
    %2900 = vmatpush1.msra.mxu0 0.0
    %2901 = vmatprep.subr.mxu0 0.0
    %2902 = vmatpush1.msra.mxu0 0.0
    %2903 = vmatprep.subr.mxu0 0.0
    %2904 = vmatpush1.msra.mxu0 0.0
    %2905 = vmatprep.subr.mxu0 0.0
    %2906 = vmatpush1.msra.mxu0 0.0
    %2907 = vmatprep.subr.mxu0 0.0
    %2908 = vmatpush1.msra.mxu0 0.0
    %2909 = vmatprep.subr.mxu0 0.0
    %2910 = vmatpush1.msra.mxu0 0.0
    %2911 = vmatprep.subr.mxu0 0.0
    %2912 = vmatpush1.msra.mxu0 0.0
    %2913 = vmatprep.subr.mxu0 0.0
    %2914 = vmatpush1.msra.mxu0 0.0
    %2915 = vmatprep.mubr.f32.mxu0 0.0
    %2916 = vmatmul.mubr.f32.gmra.mrb[0].mxu0 %v1515
    %v2917 = vpop.f32.mrb[0].mxu0
    %v2918 = vadd.f32 0.5, %v2917
    %v2919 = vpop.f32.mrb[0].mxu0
    %2920 = vdwg.mxu0
    %v2921 = vcvt.f32.s32.to.zero.pseudo %v2918
    %vm2922 = vcmp.eq.s32.totalorder %v45, 0
    %2923 = vset.pattern.permute.xlu0 0
    %2924 = vperm.xlu0 %2923, %v2921
    %v2925 = vpop.permute.xlu0 %2924
    %v2926 = vsel %vm2922, %v2925, %v2841
    %vm2927 = vcmask 0
    %2928 = vst.msk [vmem:[#allocation2] sm:$0x1] %vm2927, %v2313
    %vm2929 = vcmask 57344
    %2930 = vst.msk [vmem:[#allocation4] sm:$0x1] %vm2929, %v2926
    // Predicated region
    $region42: #{tpu_custom_call.1} parent=1 // pred_check
      _
    $region43: #{tpu_custom_call.1} parent=1 // pred_check_branch
      %2932 = sbr.rel (0) target = $region45
    $region44: #{tpu_custom_call.1} parent=1 // pred_region
      %s2934 = ssub.s32 16, 16
      %2935 = vsyncadd [#allocation3], %s2934
      %s2937 = sshll.u32 [#allocation2], 4
      %s2938 = int_to_ptr.vmem [resolvable:$true] %s2937
      %2940 = dma.vmem_to_hbm [thread:$0]  %s2938, 16, %s10, [#allocation3]
    $region45: #{tpu_custom_call.1} parent=1 // pred_fallthru
      _
    // Predicated region
    $region46: #{tpu_custom_call.1} parent=1 // pred_check
      _
    $region47: #{tpu_custom_call.1} parent=1 // pred_check_branch
      %2942 = sbr.rel (0) target = $region49
    $region48: #{tpu_custom_call.1} parent=1 // pred_region
      %s2944 = ssub.s32 16, 16
      %2945 = vsyncadd [#allocation5], %s2944
      %s2947 = sshll.u32 [#allocation4], 4
      %s2948 = int_to_ptr.vmem [resolvable:$true] %s2947
      %2950 = dma.vmem_to_hbm [thread:$0]  %s2948, 16, %s11, [#allocation5]
    $region49: #{tpu_custom_call.1} parent=1 // pred_fallthru
      _
    // Predicated region
    $region50: #{tpu_custom_call.1} parent=1 // pred_check
      _
    $region51: #{tpu_custom_call.1} parent=1 // pred_check_branch
      %2952 = sbr.rel (0) target = $region53
    $region52: #{tpu_custom_call.1} parent=1 // pred_region
      %2953 = dma.done [#allocation3], 16
    $region53: #{tpu_custom_call.1} parent=1 // pred_fallthru
      _
    // Predicated region
    $region54: #{tpu_custom_call.1} parent=1 // pred_check
      _
    $region55: #{tpu_custom_call.1} parent=1 // pred_check_branch
      %2955 = sbr.rel (0) target = $region57
    $region56: #{tpu_custom_call.1} parent=1 // pred_region
      %2956 = dma.done [#allocation5], 16
    $region57: #{tpu_custom_call.1} parent=1 // pred_fallthru
      _
    %2957 = vsyncpa [#allocation3], 1
    %2958 = vsyncpa [#allocation5], 1

</llo_original>
